<compile_context>
chip_gen: v5e
topology: v5e:2x2
jax: 0.10.0
libtpu: 0.0.40
codegen_flags: <defaults>
</compile_context>

<pallas_src>
import functools

import jax
import jax.numpy as jnp
from jax.experimental import pallas as pl
from jax.experimental.pallas import tpu as pltpu

# ---------------------------------------------------------------------------
# Synthetic config (stands in for the os.getenv(...) values in the PyTorch file)
# ---------------------------------------------------------------------------
IMAGE_WIDTH = 16
IMAGE_CHANNELS = 4
PATCH_SIZE = 4
EMBEDDING_DIMS = 32
MLP_SIZE = 64
NUM_HEADS = 4
NUMBER_OF_TRANSFORMER_LAYERS = 2
DEFAULT_NO_OF_CLASSES = 10     # unused by forward() (no classifier head is applied)
ATTENTION_DROPOUT = 0
MLP_DROPOUT = 0.0
BATCH = 2

LN_EPS = 1e-5
_INV_SQRT2 = 0.7071067811865476
_NEG_BIG = -1e30               # additive mask value for cross-batch attention entries


# ---------------------------------------------------------------------------
# In-kernel helpers
# ---------------------------------------------------------------------------
def _layernorm(x, g, b):
    mu = jnp.mean(x, axis=-1, keepdims=True)
    var = jnp.mean((x - mu) ** 2, axis=-1, keepdims=True)
    return (x - mu) * jax.lax.rsqrt(var + LN_EPS) * g + b


def _gelu_exact(x):
    # matches torch.nn.GELU() default (erf-based)
    return 0.5 * x * (1.0 + jax.lax.erf(x * _INV_SQRT2))


# ---------------------------------------------------------------------------
# The single fused kernel: patch embedding + all encoder layers + class-token pick
# ---------------------------------------------------------------------------
def _vit_kernel(patches_ref, wp_ref, bp_ref, cls_ref, pos_ref,
                wqkv_ref, wo_ref, w1_ref, w2_ref, vec_ref,
                o_ref, x_ref, *, batch, seq, num_heads, num_layers):
    B, S = batch, seq
    BS, E = x_ref.shape                       # BS = B * S
    N = S - 1
    M = w1_ref.shape[2]
    d = E // num_heads
    scale = 1.0 / (float(d) ** 0.5)
    f32 = jnp.float32

    # ---- patch embedding (Conv2d-as-matmul) on the flattened (B*N, K) slab ----
    emb = jnp.dot(patches_ref[...], wp_ref[...],
                  preferred_element_type=f32) + bp_ref[...]            # (B*N, E)
    pos = pos_ref[...]                                                 # (S, E)
    # direct stores into the resident VMEM slab instead of any concatenate
    for b in range(B):                                                 # static unroll
        x_ref[b * S:b * S + 1, :] = cls_ref[b:b + 1, :] + pos[0:1, :]  # class token row
        x_ref[b * S + 1:(b + 1) * S, :] = emb[b * N:(b + 1) * N, :] + pos[1:, :]
    x = x_ref[...]                                                     # (B*S, E)

    # ---- block-diagonal additive mask (hoisted; built once for all layers/heads) ----
    r = jax.lax.broadcasted_iota(jnp.int32, (BS, BS), 0)
    c = jax.lax.broadcasted_iota(jnp.int32, (BS, BS), 1)
    neg_mask = jnp.full((BS, BS), _NEG_BIG, dtype=f32)
    for b in range(B):
        rb = (r >= b * S) & (r < (b + 1) * S)
        cb = (c >= b * S) & (c < (b + 1) * S)
        neg_mask = jnp.where(rb & cb, 0.0, neg_mask)

    # ---- transformer encoder layers (unrolled; activation stays resident) ----
    for l in range(num_layers):
        vec = vec_ref[l]                               # (8, V) packed LN/bias slab
        ln1_g, ln1_b = vec[0:1, :E], vec[1:2, :E]
        b_qkv = vec[2:3, :3 * E]
        b_o = vec[3:4, :E]
        ln2_g, ln2_b = vec[4:5, :E], vec[5:6, :E]
        b1 = vec[6:7, :M]
        b2 = vec[7:8, :E]

        # -- pre-LN multi-head self-attention: plain 2-D matmuls, no weight broadcast --
        xn = _layernorm(x, ln1_g, ln1_b)                               # (BS, E)
        qkv = jnp.dot(xn, wqkv_ref[l], preferred_element_type=f32) + b_qkv   # (BS, 3E)
        q = qkv[:, 0:E] * scale                        # fold 1/sqrt(d) into q
        k = qkv[:, E:2 * E]
        v = qkv[:, 2 * E:3 * E]

        wo = wo_ref[l]                                                 # (E, E)
        attn = jnp.zeros((BS, E), f32)
        for h in range(num_heads):
            lo = h * d
            qh = q[:, lo:lo + d]
            kh = k[:, lo:lo + d]
            vh = v[:, lo:lo + d]
            s = jnp.einsum('qd,kd->qk', qh, kh,
                           preferred_element_type=f32) + neg_mask      # (BS, BS)
            s = s - jnp.max(s, axis=-1, keepdims=True)
            p = jnp.exp(s)
            # exact reciprocal (approx=True deviates ~1e-3 from torch softmax)
            p = p * pl.reciprocal(jnp.sum(p, axis=-1, keepdims=True))
            ctx = jnp.dot(p, vh, preferred_element_type=f32)           # (BS, d)
            # fold the per-head output projection in (== concat(ctx) @ Wo), no concat
            attn = attn + jnp.dot(ctx, wo[lo:lo + d, :],
                                  preferred_element_type=f32)
        x2 = x + attn + b_o                                            # residual 1

        # -- pre-LN MLP --
        xn2 = _layernorm(x2, ln2_g, ln2_b)
        h1 = _gelu_exact(jnp.dot(xn2, w1_ref[l],
                                 preferred_element_type=f32) + b1)     # (BS, M)
        mlp = jnp.dot(h1, w2_ref[l], preferred_element_type=f32) + b2  # (BS, E)
        x = x2 + mlp                                                   # residual 2

    # ---- class-token pick: row b*S of each batch ----
    for b in range(B):
        o_ref[b:b + 1, :] = x[b * S:b * S + 1, :]


def _full_spec(shape):
    zeros = (0,) * len(shape)
    return pl.BlockSpec(shape, lambda i, _z=zeros: _z)


def _pack_layers(layers, E, M):
    """Stack per-layer weights along L; pack the 8 small LN/bias vectors into one slab."""
    V = max(3 * E, M, E)

    def row(v):
        v = v.reshape(1, -1)
        return jnp.pad(v, ((0, 0), (0, V - v.shape[1])))

    w_qkv = jnp.stack([p["w_qkv"] for p in layers])          # (L, E, 3E)
    w_o = jnp.stack([p["w_o"] for p in layers])              # (L, E, E)
    w1 = jnp.stack([p["w1"] for p in layers])                # (L, E, M)
    w2 = jnp.stack([p["w2"] for p in layers])                # (L, M, E)
    vecs = jnp.stack([
        jnp.concatenate([row(p[k]) for k in ("ln1_g", "ln1_b", "b_qkv", "b_o",
                                             "ln2_g", "ln2_b", "b1", "b2")], axis=0)
        for p in layers])                                    # (L, 8, V)
    return w_qkv, w_o, w1, w2, vecs


# ---------------------------------------------------------------------------
# Model wrapper: one fused pallas_call for the whole forward pass
# ---------------------------------------------------------------------------
@jax.jit
def vit_forward(x_nchw, params):
    B, C, H, W = x_nchw.shape
    P = PATCH_SIZE
    Hp, Wp = H // P, W // P
    N = Hp * Wp
    K = C * P * P
    E = params["conv_w"].shape[0]
    S = N + 1
    M = params["layers"][0]["w1"].shape[1]
    L = len(params["layers"])

    # extract non-overlapping patches in (c, ph, pw) order to match Conv2d weights,
    # flattened to the (B*N, K) slab the kernel consumes directly
    patches = (x_nchw.reshape(B, C, Hp, P, Wp, P)
               .transpose(0, 2, 4, 1, 3, 5)
               .reshape(B * N, K))
    wp = params["conv_w"].reshape(E, K).T                    # (K, E)
    bp = params["conv_b"].reshape(1, E)
    pos = params["pos"].reshape(S, E)
    cls_tok = params["cls"].reshape(B, E)                    # per-batch class token

    w_qkv, w_o, w1, w2, vecs = _pack_layers(params["layers"], E, M)

    kernel = functools.partial(_vit_kernel, batch=B, seq=S,
                               num_heads=NUM_HEADS, num_layers=L)

    # everything (~0.1 MB of weights + ~4 KB activations) fits trivially in VMEM on
    # v5e/v6e/v7x; single block, grid=(1,).  (For realistic ViT sizes, stream per-layer
    # weights with pipelined BlockSpecs instead of keeping them all resident.)
    out = pl.pallas_call(
        kernel,
        out_shape=jax.ShapeDtypeStruct((B, E), jnp.float32),
        grid=(1,),
        in_specs=[
            _full_spec(patches.shape),       # (B*N, K)
            _full_spec(wp.shape),            # (K, E)
            _full_spec(bp.shape),            # (1, E)
            _full_spec(cls_tok.shape),       # (B, E)
            _full_spec(pos.shape),           # (S, E)
            _full_spec(w_qkv.shape),         # (L, E, 3E)
            _full_spec(w_o.shape),           # (L, E, E)
            _full_spec(w1.shape),            # (L, E, M)
            _full_spec(w2.shape),            # (L, M, E)
            _full_spec(vecs.shape),          # (L, 8, V)
        ],
        out_specs=_full_spec((B, E)),
        scratch_shapes=[pltpu.VMEM((B * S, E), jnp.float32)],
        compiler_params=pltpu.CompilerParams(dimension_semantics=("arbitrary",)),
    )(patches, wp, bp, cls_tok, pos, w_qkv, w_o, w1, w2, vecs)

    return out                               # class-token embedding, (B, E)


def init_params(key):
    C, P, E, M = IMAGE_CHANNELS, PATCH_SIZE, EMBEDDING_DIMS, MLP_SIZE
    N = (IMAGE_WIDTH // P) ** 2
    S = N + 1
    keys = jax.random.split(key, 4 + NUMBER_OF_TRANSFORMER_LAYERS)

    def rnd(k, shape, scale=0.02):
        return (scale * jax.random.normal(k, shape)).astype(jnp.float32)

    params = {
        "conv_w": rnd(keys[0], (E, C, P, P), 0.1),
        "conv_b": rnd(keys[1], (E,), 0.1),
        "cls": rnd(keys[2], (BATCH, 1, E)),       # per-batch class token (as in the module)
        "pos": rnd(keys[3], (1, S, E)),
        "layers": [],
    }
    for li in range(NUMBER_OF_TRANSFORMER_LAYERS):
        lk = jax.random.split(keys[4 + li], 8)
        params["layers"].append({
            "ln1_g": jnp.ones((1, E), jnp.float32),
            "ln1_b": jnp.zeros((1, E), jnp.float32),
            "w_qkv": rnd(lk[0], (E, 3 * E)),      # == in_proj_weight.T
            "b_qkv": rnd(lk[1], (1, 3 * E)),
            "w_o": rnd(lk[2], (E, E)),            # == out_proj.weight.T
            "b_o": rnd(lk[3], (1, E)),
            "ln2_g": jnp.ones((1, E), jnp.float32),
            "ln2_b": jnp.zeros((1, E), jnp.float32),
            "w1": rnd(lk[4], (E, M)),             # == mlp linear1.weight.T
            "b1": rnd(lk[5], (1, M)),
            "w2": rnd(lk[6], (M, E)),             # == mlp linear2.weight.T
            "b2": rnd(lk[7], (1, E)),
        })
    return params


if __name__ == "__main__":
    key = jax.random.PRNGKey(0)
    k_x, k_p = jax.random.split(key)
    x = jax.random.normal(k_x, (BATCH, IMAGE_CHANNELS, IMAGE_WIDTH, IMAGE_WIDTH),
                          dtype=jnp.float32)
    params = init_params(k_p)

    out = vit_forward(x, params)
    out = jax.block_until_ready(out)
    assert out.shape == (BATCH, EMBEDDING_DIMS), out.shape
    assert bool(jnp.all(jnp.isfinite(out)))
    print("KERNEL_OK")
</pallas_src>

<mosaic_0001>
module attributes {stable_mosaic.version = 11 : i64} {
  func.func @_vit_kernel(%arg0: i32, %arg1: memref<32x64xf32, #tpu.memory_space<vmem>>, %arg2: memref<64x32xf32, #tpu.memory_space<vmem>>, %arg3: memref<1x32xf32, #tpu.memory_space<vmem>>, %arg4: memref<2x32xf32, #tpu.memory_space<vmem>>, %arg5: memref<17x32xf32, #tpu.memory_space<vmem>>, %arg6: memref<2x32x96xf32, #tpu.memory_space<vmem>>, %arg7: memref<2x32x32xf32, #tpu.memory_space<vmem>>, %arg8: memref<2x32x64xf32, #tpu.memory_space<vmem>>, %arg9: memref<2x64x32xf32, #tpu.memory_space<vmem>>, %arg10: memref<2x8x96xf32, #tpu.memory_space<vmem>>, %arg11: memref<2x32xf32, #tpu.memory_space<vmem>>, %arg12: memref<34x32xf32, #tpu.memory_space<vmem>>) attributes {dimension_semantics = [#tpu.dimension_semantics<arbitrary>], iteration_bounds = array<i64: 1>, scalar_prefetch = 0 : i64, scratch_operands = 1 : i64, tpu.core_type = #tpu.core_type<tc>, window_params = [{pipeline_mode = #tpu.pipeline_mode<synchronous>, transform_indices = @transform_0, window_bounds = array<i64: 32, 64>}, {pipeline_mode = #tpu.pipeline_mode<synchronous>, transform_indices = @transform_1, window_bounds = array<i64: 64, 32>}, {pipeline_mode = #tpu.pipeline_mode<synchronous>, transform_indices = @transform_2, window_bounds = array<i64: 1, 32>}, {pipeline_mode = #tpu.pipeline_mode<synchronous>, transform_indices = @transform_3, window_bounds = array<i64: 2, 32>}, {pipeline_mode = #tpu.pipeline_mode<synchronous>, transform_indices = @transform_4, window_bounds = array<i64: 17, 32>}, {pipeline_mode = #tpu.pipeline_mode<synchronous>, transform_indices = @transform_5, window_bounds = array<i64: 2, 32, 96>}, {pipeline_mode = #tpu.pipeline_mode<synchronous>, transform_indices = @transform_6, window_bounds = array<i64: 2, 32, 32>}, {pipeline_mode = #tpu.pipeline_mode<synchronous>, transform_indices = @transform_7, window_bounds = array<i64: 2, 32, 64>}, {pipeline_mode = #tpu.pipeline_mode<synchronous>, transform_indices = @transform_8, window_bounds = array<i64: 2, 64, 32>}, {pipeline_mode = #tpu.pipeline_mode<synchronous>, transform_indices = @transform_9, window_bounds = array<i64: 2, 8, 96>}, {pipeline_mode = #tpu.pipeline_mode<synchronous>, transform_indices = @transform_10, window_bounds = array<i64: 2, 32>}]} {
    %c0 = arith.constant 0 : index
    %c0_0 = arith.constant 0 : index
    %0 = vector.load %arg1[%c0, %c0_0] : memref<32x64xf32, #tpu.memory_space<vmem>>, vector<32x64xf32>
    %c0_1 = arith.constant 0 : index
    %c0_2 = arith.constant 0 : index
    %1 = vector.load %arg2[%c0_1, %c0_2] : memref<64x32xf32, #tpu.memory_space<vmem>>, vector<64x32xf32>
    %cst = arith.constant dense<0.000000e+00> : vector<32x32xf32>
    %2 = tpu.matmul %0, %1, %cst {dimension_numbers = #tpu.dot_dimension_numbers<[1], [0], [0], [1], [0, 0, 1, 1], [], []>} : vector<32x64xf32>, vector<64x32xf32>, vector<32x32xf32> -> vector<32x32xf32>
    %c0_3 = arith.constant 0 : index
    %c0_4 = arith.constant 0 : index
    %3 = vector.load %arg3[%c0_3, %c0_4] : memref<1x32xf32, #tpu.memory_space<vmem>>, vector<1x32xf32>
    %4 = vector.broadcast %3 : vector<1x32xf32> to vector<32x32xf32>
    %5 = arith.addf %2, %4 : vector<32x32xf32>
    %c0_5 = arith.constant 0 : index
    %c0_6 = arith.constant 0 : index
    %6 = vector.load %arg5[%c0_5, %c0_6] : memref<17x32xf32, #tpu.memory_space<vmem>>, vector<17x32xf32>
    %c0_7 = arith.constant 0 : index
    %c0_8 = arith.constant 0 : index
    %7 = vector.load %arg4[%c0_7, %c0_8] : memref<2x32xf32, #tpu.memory_space<vmem>>, vector<1x32xf32>
    %8 = vector.extract_strided_slice %6 {offsets = [0, 0], sizes = [1, 32], strides = [1, 1]} : vector<17x32xf32> to vector<1x32xf32>
    %9 = arith.addf %7, %8 : vector<1x32xf32>
    %c0_9 = arith.constant 0 : index
    %c0_10 = arith.constant 0 : index
    %10 = vector.load %arg12[%c0_9, %c0_10] : memref<34x32xf32, #tpu.memory_space<vmem>>, vector<1x32xf32>
    tpu.vector_store %arg12[%c0_9, %c0_10], %9 {strides = array<i32>} : memref<34x32xf32, #tpu.memory_space<vmem>>, vector<1x32xf32>,
    %11 = vector.extract_strided_slice %5 {offsets = [0, 0], sizes = [16, 32], strides = [1, 1]} : vector<32x32xf32> to vector<16x32xf32>
    %12 = vector.extract_strided_slice %6 {offsets = [1, 0], sizes = [16, 32], strides = [1, 1]} : vector<17x32xf32> to vector<16x32xf32>
    %13 = arith.addf %11, %12 : vector<16x32xf32>
    %c1 = arith.constant 1 : index
    %c0_11 = arith.constant 0 : index
    %14 = vector.load %arg12[%c1, %c0_11] : memref<34x32xf32, #tpu.memory_space<vmem>>, vector<16x32xf32>
    tpu.vector_store %arg12[%c1, %c0_11], %13 {strides = array<i32>} : memref<34x32xf32, #tpu.memory_space<vmem>>, vector<16x32xf32>,
    %c1_12 = arith.constant 1 : index
    %c0_13 = arith.constant 0 : index
    %15 = vector.load %arg4[%c1_12, %c0_13] : memref<2x32xf32, #tpu.memory_space<vmem>>, vector<1x32xf32>
    %16 = vector.extract_strided_slice %6 {offsets = [0, 0], sizes = [1, 32], strides = [1, 1]} : vector<17x32xf32> to vector<1x32xf32>
    %17 = arith.addf %15, %16 : vector<1x32xf32>
    %c17 = arith.constant 17 : index
    %c0_14 = arith.constant 0 : index
    %18 = vector.load %arg12[%c17, %c0_14] : memref<34x32xf32, #tpu.memory_space<vmem>>, vector<1x32xf32>
    tpu.vector_store %arg12[%c17, %c0_14], %17 {strides = array<i32>} : memref<34x32xf32, #tpu.memory_space<vmem>>, vector<1x32xf32>,
    %19 = vector.extract_strided_slice %5 {offsets = [16, 0], sizes = [16, 32], strides = [1, 1]} : vector<32x32xf32> to vector<16x32xf32>
    %20 = vector.extract_strided_slice %6 {offsets = [1, 0], sizes = [16, 32], strides = [1, 1]} : vector<17x32xf32> to vector<16x32xf32>
    %21 = arith.addf %19, %20 : vector<16x32xf32>
    %c18 = arith.constant 18 : index
    %c0_15 = arith.constant 0 : index
    %22 = vector.load %arg12[%c18, %c0_15] : memref<34x32xf32, #tpu.memory_space<vmem>>, vector<16x32xf32>
    tpu.vector_store %arg12[%c18, %c0_15], %21 {strides = array<i32>} : memref<34x32xf32, #tpu.memory_space<vmem>>, vector<16x32xf32>,
    %c0_16 = arith.constant 0 : index
    %c0_17 = arith.constant 0 : index
    %23 = vector.load %arg12[%c0_16, %c0_17] : memref<34x32xf32, #tpu.memory_space<vmem>>, vector<34x32xf32>
    %24 = tpu.iota {dimensions = array<i32: 0>} : vector<34x34xi32>
    %25 = tpu.iota {dimensions = array<i32: 1>} : vector<34x34xi32>
    %cst_18 = arith.constant -1.000000e+30 : f32
    %26 = vector.broadcast %cst_18 : f32 to vector<34x34xf32>
    %c0_i32 = arith.constant 0 : i32
    %27 = vector.broadcast %c0_i32 : i32 to vector<34x34xi32>
    %28 = arith.cmpi sge, %24, %27 : vector<34x34xi32>
    %c17_i32 = arith.constant 17 : i32
    %29 = vector.broadcast %c17_i32 : i32 to vector<34x34xi32>
    %30 = arith.cmpi slt, %24, %29 : vector<34x34xi32>
    %31 = arith.andi %28, %30 : vector<34x34xi1>
    %c0_i32_19 = arith.constant 0 : i32
    %32 = vector.broadcast %c0_i32_19 : i32 to vector<34x34xi32>
    %33 = arith.cmpi sge, %25, %32 : vector<34x34xi32>
    %c17_i32_20 = arith.constant 17 : i32
    %34 = vector.broadcast %c17_i32_20 : i32 to vector<34x34xi32>
    %35 = arith.cmpi slt, %25, %34 : vector<34x34xi32>
    %36 = arith.andi %33, %35 : vector<34x34xi1>
    %37 = arith.andi %31, %36 : vector<34x34xi1>
    %cst_21 = arith.constant 0.000000e+00 : f32
    %38 = vector.broadcast %cst_21 : f32 to vector<34x34xf32>
    %39 = arith.select %37, %38, %26 : vector<34x34xi1>, vector<34x34xf32>
    %c17_i32_22 = arith.constant 17 : i32
    %40 = vector.broadcast %c17_i32_22 : i32 to vector<34x34xi32>
    %41 = arith.cmpi sge, %24, %40 : vector<34x34xi32>
    %c34_i32 = arith.constant 34 : i32
    %42 = vector.broadcast %c34_i32 : i32 to vector<34x34xi32>
    %43 = arith.cmpi slt, %24, %42 : vector<34x34xi32>
    %44 = arith.andi %41, %43 : vector<34x34xi1>
    %c17_i32_23 = arith.constant 17 : i32
    %45 = vector.broadcast %c17_i32_23 : i32 to vector<34x34xi32>
    %46 = arith.cmpi sge, %25, %45 : vector<34x34xi32>
    %c34_i32_24 = arith.constant 34 : i32
    %47 = vector.broadcast %c34_i32_24 : i32 to vector<34x34xi32>
    %48 = arith.cmpi slt, %25, %47 : vector<34x34xi32>
    %49 = arith.andi %46, %48 : vector<34x34xi1>
    %50 = arith.andi %44, %49 : vector<34x34xi1>
    %cst_25 = arith.constant 0.000000e+00 : f32
    %51 = vector.broadcast %cst_25 : f32 to vector<34x34xf32>
    %52 = arith.select %50, %51, %39 : vector<34x34xi1>, vector<34x34xf32>
    %c0_26 = arith.constant 0 : index
    %c0_27 = arith.constant 0 : index
    %c0_28 = arith.constant 0 : index
    %53 = vector.load %arg10[%c0_26, %c0_27, %c0_28] : memref<2x8x96xf32, #tpu.memory_space<vmem>>, vector<1x8x96xf32>
    %54 = vector.shape_cast %53 : vector<1x8x96xf32> to vector<8x96xf32>
    %55 = vector.extract_strided_slice %54 {offsets = [0, 0], sizes = [1, 32], strides = [1, 1]} : vector<8x96xf32> to vector<1x32xf32>
    %56 = vector.extract_strided_slice %54 {offsets = [1, 0], sizes = [1, 32], strides = [1, 1]} : vector<8x96xf32> to vector<1x32xf32>
    %57 = vector.extract_strided_slice %54 {offsets = [2, 0], sizes = [1, 96], strides = [1, 1]} : vector<8x96xf32> to vector<1x96xf32>
    %58 = vector.extract_strided_slice %54 {offsets = [3, 0], sizes = [1, 32], strides = [1, 1]} : vector<8x96xf32> to vector<1x32xf32>
    %59 = vector.extract_strided_slice %54 {offsets = [4, 0], sizes = [1, 32], strides = [1, 1]} : vector<8x96xf32> to vector<1x32xf32>
    %60 = vector.extract_strided_slice %54 {offsets = [5, 0], sizes = [1, 32], strides = [1, 1]} : vector<8x96xf32> to vector<1x32xf32>
    %61 = vector.extract_strided_slice %54 {offsets = [6, 0], sizes = [1, 64], strides = [1, 1]} : vector<8x96xf32> to vector<1x64xf32>
    %62 = vector.extract_strided_slice %54 {offsets = [7, 0], sizes = [1, 32], strides = [1, 1]} : vector<8x96xf32> to vector<1x32xf32>
    %cst_29 = arith.constant dense<0.000000e+00> : vector<34xf32>
    %63 = vector.multi_reduction <add>, %23, %cst_29 [1] : vector<34x32xf32> to vector<34xf32>
    %64 = vector.shape_cast %63 : vector<34xf32> to vector<34x1xf32>
    %cst_30 = arith.constant 3.200000e+01 : f32
    %65 = vector.broadcast %cst_30 : f32 to vector<34x1xf32>
    %66 = arith.divf %64, %65 : vector<34x1xf32>
    %67 = vector.broadcast %66 : vector<34x1xf32> to vector<34x32xf32>
    %68 = arith.subf %23, %67 : vector<34x32xf32>
    %69 = arith.mulf %68, %68 : vector<34x32xf32>
    %cst_31 = arith.constant dense<0.000000e+00> : vector<34xf32>
    %70 = vector.multi_reduction <add>, %69, %cst_31 [1] : vector<34x32xf32> to vector<34xf32>
    %71 = vector.shape_cast %70 : vector<34xf32> to vector<34x1xf32>
    %cst_32 = arith.constant 3.200000e+01 : f32
    %72 = vector.broadcast %cst_32 : f32 to vector<34x1xf32>
    %73 = arith.divf %71, %72 : vector<34x1xf32>
    %74 = vector.broadcast %66 : vector<34x1xf32> to vector<34x32xf32>
    %75 = arith.subf %23, %74 : vector<34x32xf32>
    %cst_33 = arith.constant 9.99999974E-6 : f32
    %76 = vector.broadcast %cst_33 : f32 to vector<34x1xf32>
    %77 = arith.addf %73, %76 : vector<34x1xf32>
    %78 = math.rsqrt %77 : vector<34x1xf32>
    %79 = vector.broadcast %78 : vector<34x1xf32> to vector<34x32xf32>
    %80 = arith.mulf %75, %79 : vector<34x32xf32>
    %81 = vector.broadcast %55 : vector<1x32xf32> to vector<34x32xf32>
    %82 = arith.mulf %80, %81 : vector<34x32xf32>
    %83 = vector.broadcast %56 : vector<1x32xf32> to vector<34x32xf32>
    %84 = arith.addf %82, %83 : vector<34x32xf32>
    %c0_34 = arith.constant 0 : index
    %c0_35 = arith.constant 0 : index
    %c0_36 = arith.constant 0 : index
    %85 = vector.load %arg6[%c0_34, %c0_35, %c0_36] : memref<2x32x96xf32, #tpu.memory_space<vmem>>, vector<1x32x96xf32>
    %86 = vector.shape_cast %85 : vector<1x32x96xf32> to vector<32x96xf32>
    %cst_37 = arith.constant dense<0.000000e+00> : vector<34x96xf32>
    %87 = tpu.matmul %84, %86, %cst_37 {dimension_numbers = #tpu.dot_dimension_numbers<[1], [0], [0], [1], [0, 0, 1, 1], [], []>} : vector<34x32xf32>, vector<32x96xf32>, vector<34x96xf32> -> vector<34x96xf32>
    %88 = vector.broadcast %57 : vector<1x96xf32> to vector<34x96xf32>
    %89 = arith.addf %87, %88 : vector<34x96xf32>
    %90 = vector.extract_strided_slice %89 {offsets = [0, 0], sizes = [34, 32], strides = [1, 1]} : vector<34x96xf32> to vector<34x32xf32>
    %cst_38 = arith.constant 0.353553385 : f32
    %91 = vector.broadcast %cst_38 : f32 to vector<34x32xf32>
    %92 = arith.mulf %90, %91 : vector<34x32xf32>
    %93 = vector.extract_strided_slice %89 {offsets = [0, 32], sizes = [34, 32], strides = [1, 1]} : vector<34x96xf32> to vector<34x32xf32>
    %94 = vector.extract_strided_slice %89 {offsets = [0, 64], sizes = [34, 32], strides = [1, 1]} : vector<34x96xf32> to vector<34x32xf32>
    %c0_39 = arith.constant 0 : index
    %c0_40 = arith.constant 0 : index
    %c0_41 = arith.constant 0 : index
    %95 = vector.load %arg7[%c0_39, %c0_40, %c0_41] : memref<2x32x32xf32, #tpu.memory_space<vmem>>, vector<1x32x32xf32>
    %96 = vector.shape_cast %95 : vector<1x32x32xf32> to vector<32x32xf32>
    %cst_42 = arith.constant 0.000000e+00 : f32
    %97 = vector.broadcast %cst_42 : f32 to vector<34x32xf32>
    %98 = vector.extract_strided_slice %92 {offsets = [0, 0], sizes = [34, 8], strides = [1, 1]} : vector<34x32xf32> to vector<34x8xf32>
    %99 = vector.extract_strided_slice %93 {offsets = [0, 0], sizes = [34, 8], strides = [1, 1]} : vector<34x32xf32> to vector<34x8xf32>
    %100 = vector.extract_strided_slice %94 {offsets = [0, 0], sizes = [34, 8], strides = [1, 1]} : vector<34x32xf32> to vector<34x8xf32>
    "tpu.trace_start"() <{level = 10 : i32, message = "qd,kd->qk"}> : () -> ()
    %cst_43 = arith.constant dense<0.000000e+00> : vector<34x34xf32>
    %101 = tpu.matmul %98, %99, %cst_43 {dimension_numbers = #tpu.dot_dimension_numbers<[1], [1], [0], [0], [0, 0, 1, 0], [], []>} : vector<34x8xf32>, vector<34x8xf32>, vector<34x34xf32> -> vector<34x34xf32>
    "tpu.trace_stop"() : () -> ()
    %102 = arith.addf %101, %52 : vector<34x34xf32>
    %cst_44 = arith.constant dense<0xFF800000> : vector<34xf32>
    %103 = vector.multi_reduction <maximumf>, %102, %cst_44 [1] : vector<34x34xf32> to vector<34xf32>
    %104 = vector.shape_cast %103 : vector<34xf32> to vector<34x1xf32>
    %105 = vector.broadcast %104 : vector<34x1xf32> to vector<34x34xf32>
    %106 = arith.subf %102, %105 : vector<34x34xf32>
    %107 = math.exp %106 : vector<34x34xf32>
    %cst_45 = arith.constant dense<0.000000e+00> : vector<34xf32>
    %108 = vector.multi_reduction <add>, %107, %cst_45 [1] : vector<34x34xf32> to vector<34xf32>
    %109 = vector.shape_cast %108 : vector<34xf32> to vector<34x1xf32>
    %110 = tpu.reciprocal %109 : vector<34x1xf32> -> vector<34x1xf32>
    %111 = vector.broadcast %110 : vector<34x1xf32> to vector<34x34xf32>
    %112 = arith.mulf %107, %111 : vector<34x34xf32>
    %cst_46 = arith.constant dense<0.000000e+00> : vector<34x8xf32>
    %113 = tpu.matmul %112, %100, %cst_46 {dimension_numbers = #tpu.dot_dimension_numbers<[1], [0], [0], [1], [0, 0, 1, 1], [], []>} : vector<34x34xf32>, vector<34x8xf32>, vector<34x8xf32> -> vector<34x8xf32>
    %114 = vector.extract_strided_slice %96 {offsets = [0, 0], sizes = [8, 32], strides = [1, 1]} : vector<32x32xf32> to vector<8x32xf32>
    %cst_47 = arith.constant dense<0.000000e+00> : vector<34x32xf32>
    %115 = tpu.matmul %113, %114, %cst_47 {dimension_numbers = #tpu.dot_dimension_numbers<[1], [0], [0], [1], [0, 0, 1, 1], [], []>} : vector<34x8xf32>, vector<8x32xf32>, vector<34x32xf32> -> vector<34x32xf32>
    %116 = arith.addf %97, %115 : vector<34x32xf32>
    %117 = vector.extract_strided_slice %92 {offsets = [0, 8], sizes = [34, 8], strides = [1, 1]} : vector<34x32xf32> to vector<34x8xf32>
    %118 = vector.extract_strided_slice %93 {offsets = [0, 8], sizes = [34, 8], strides = [1, 1]} : vector<34x32xf32> to vector<34x8xf32>
    %119 = vector.extract_strided_slice %94 {offsets = [0, 8], sizes = [34, 8], strides = [1, 1]} : vector<34x32xf32> to vector<34x8xf32>
    "tpu.trace_start"() <{level = 10 : i32, message = "qd,kd->qk"}> : () -> ()
    %cst_48 = arith.constant dense<0.000000e+00> : vector<34x34xf32>
    %120 = tpu.matmul %117, %118, %cst_48 {dimension_numbers = #tpu.dot_dimension_numbers<[1], [1], [0], [0], [0, 0, 1, 0], [], []>} : vector<34x8xf32>, vector<34x8xf32>, vector<34x34xf32> -> vector<34x34xf32>
    "tpu.trace_stop"() : () -> ()
    %121 = arith.addf %120, %52 : vector<34x34xf32>
    %cst_49 = arith.constant dense<0xFF800000> : vector<34xf32>
    %122 = vector.multi_reduction <maximumf>, %121, %cst_49 [1] : vector<34x34xf32> to vector<34xf32>
    %123 = vector.shape_cast %122 : vector<34xf32> to vector<34x1xf32>
    %124 = vector.broadcast %123 : vector<34x1xf32> to vector<34x34xf32>
    %125 = arith.subf %121, %124 : vector<34x34xf32>
    %126 = math.exp %125 : vector<34x34xf32>
    %cst_50 = arith.constant dense<0.000000e+00> : vector<34xf32>
    %127 = vector.multi_reduction <add>, %126, %cst_50 [1] : vector<34x34xf32> to vector<34xf32>
    %128 = vector.shape_cast %127 : vector<34xf32> to vector<34x1xf32>
    %129 = tpu.reciprocal %128 : vector<34x1xf32> -> vector<34x1xf32>
    %130 = vector.broadcast %129 : vector<34x1xf32> to vector<34x34xf32>
    %131 = arith.mulf %126, %130 : vector<34x34xf32>
    %cst_51 = arith.constant dense<0.000000e+00> : vector<34x8xf32>
    %132 = tpu.matmul %131, %119, %cst_51 {dimension_numbers = #tpu.dot_dimension_numbers<[1], [0], [0], [1], [0, 0, 1, 1], [], []>} : vector<34x34xf32>, vector<34x8xf32>, vector<34x8xf32> -> vector<34x8xf32>
    %133 = vector.extract_strided_slice %96 {offsets = [8, 0], sizes = [8, 32], strides = [1, 1]} : vector<32x32xf32> to vector<8x32xf32>
    %cst_52 = arith.constant dense<0.000000e+00> : vector<34x32xf32>
    %134 = tpu.matmul %132, %133, %cst_52 {dimension_numbers = #tpu.dot_dimension_numbers<[1], [0], [0], [1], [0, 0, 1, 1], [], []>} : vector<34x8xf32>, vector<8x32xf32>, vector<34x32xf32> -> vector<34x32xf32>
    %135 = arith.addf %116, %134 : vector<34x32xf32>
    %136 = vector.extract_strided_slice %92 {offsets = [0, 16], sizes = [34, 8], strides = [1, 1]} : vector<34x32xf32> to vector<34x8xf32>
    %137 = vector.extract_strided_slice %93 {offsets = [0, 16], sizes = [34, 8], strides = [1, 1]} : vector<34x32xf32> to vector<34x8xf32>
    %138 = vector.extract_strided_slice %94 {offsets = [0, 16], sizes = [34, 8], strides = [1, 1]} : vector<34x32xf32> to vector<34x8xf32>
    "tpu.trace_start"() <{level = 10 : i32, message = "qd,kd->qk"}> : () -> ()
    %cst_53 = arith.constant dense<0.000000e+00> : vector<34x34xf32>
    %139 = tpu.matmul %136, %137, %cst_53 {dimension_numbers = #tpu.dot_dimension_numbers<[1], [1], [0], [0], [0, 0, 1, 0], [], []>} : vector<34x8xf32>, vector<34x8xf32>, vector<34x34xf32> -> vector<34x34xf32>
    "tpu.trace_stop"() : () -> ()
    %140 = arith.addf %139, %52 : vector<34x34xf32>
    %cst_54 = arith.constant dense<0xFF800000> : vector<34xf32>
    %141 = vector.multi_reduction <maximumf>, %140, %cst_54 [1] : vector<34x34xf32> to vector<34xf32>
    %142 = vector.shape_cast %141 : vector<34xf32> to vector<34x1xf32>
    %143 = vector.broadcast %142 : vector<34x1xf32> to vector<34x34xf32>
    %144 = arith.subf %140, %143 : vector<34x34xf32>
    %145 = math.exp %144 : vector<34x34xf32>
    %cst_55 = arith.constant dense<0.000000e+00> : vector<34xf32>
    %146 = vector.multi_reduction <add>, %145, %cst_55 [1] : vector<34x34xf32> to vector<34xf32>
    %147 = vector.shape_cast %146 : vector<34xf32> to vector<34x1xf32>
    %148 = tpu.reciprocal %147 : vector<34x1xf32> -> vector<34x1xf32>
    %149 = vector.broadcast %148 : vector<34x1xf32> to vector<34x34xf32>
    %150 = arith.mulf %145, %149 : vector<34x34xf32>
    %cst_56 = arith.constant dense<0.000000e+00> : vector<34x8xf32>
    %151 = tpu.matmul %150, %138, %cst_56 {dimension_numbers = #tpu.dot_dimension_numbers<[1], [0], [0], [1], [0, 0, 1, 1], [], []>} : vector<34x34xf32>, vector<34x8xf32>, vector<34x8xf32> -> vector<34x8xf32>
    %152 = vector.extract_strided_slice %96 {offsets = [16, 0], sizes = [8, 32], strides = [1, 1]} : vector<32x32xf32> to vector<8x32xf32>
    %cst_57 = arith.constant dense<0.000000e+00> : vector<34x32xf32>
    %153 = tpu.matmul %151, %152, %cst_57 {dimension_numbers = #tpu.dot_dimension_numbers<[1], [0], [0], [1], [0, 0, 1, 1], [], []>} : vector<34x8xf32>, vector<8x32xf32>, vector<34x32xf32> -> vector<34x32xf32>
    %154 = arith.addf %135, %153 : vector<34x32xf32>
    %155 = vector.extract_strided_slice %92 {offsets = [0, 24], sizes = [34, 8], strides = [1, 1]} : vector<34x32xf32> to vector<34x8xf32>
    %156 = vector.extract_strided_slice %93 {offsets = [0, 24], sizes = [34, 8], strides = [1, 1]} : vector<34x32xf32> to vector<34x8xf32>
    %157 = vector.extract_strided_slice %94 {offsets = [0, 24], sizes = [34, 8], strides = [1, 1]} : vector<34x32xf32> to vector<34x8xf32>
    "tpu.trace_start"() <{level = 10 : i32, message = "qd,kd->qk"}> : () -> ()
    %cst_58 = arith.constant dense<0.000000e+00> : vector<34x34xf32>
    %158 = tpu.matmul %155, %156, %cst_58 {dimension_numbers = #tpu.dot_dimension_numbers<[1], [1], [0], [0], [0, 0, 1, 0], [], []>} : vector<34x8xf32>, vector<34x8xf32>, vector<34x34xf32> -> vector<34x34xf32>
    "tpu.trace_stop"() : () -> ()
    %159 = arith.addf %158, %52 : vector<34x34xf32>
    %cst_59 = arith.constant dense<0xFF800000> : vector<34xf32>
    %160 = vector.multi_reduction <maximumf>, %159, %cst_59 [1] : vector<34x34xf32> to vector<34xf32>
    %161 = vector.shape_cast %160 : vector<34xf32> to vector<34x1xf32>
    %162 = vector.broadcast %161 : vector<34x1xf32> to vector<34x34xf32>
    %163 = arith.subf %159, %162 : vector<34x34xf32>
    %164 = math.exp %163 : vector<34x34xf32>
    %cst_60 = arith.constant dense<0.000000e+00> : vector<34xf32>
    %165 = vector.multi_reduction <add>, %164, %cst_60 [1] : vector<34x34xf32> to vector<34xf32>
    %166 = vector.shape_cast %165 : vector<34xf32> to vector<34x1xf32>
    %167 = tpu.reciprocal %166 : vector<34x1xf32> -> vector<34x1xf32>
    %168 = vector.broadcast %167 : vector<34x1xf32> to vector<34x34xf32>
    %169 = arith.mulf %164, %168 : vector<34x34xf32>
    %cst_61 = arith.constant dense<0.000000e+00> : vector<34x8xf32>
    %170 = tpu.matmul %169, %157, %cst_61 {dimension_numbers = #tpu.dot_dimension_numbers<[1], [0], [0], [1], [0, 0, 1, 1], [], []>} : vector<34x34xf32>, vector<34x8xf32>, vector<34x8xf32> -> vector<34x8xf32>
    %171 = vector.extract_strided_slice %96 {offsets = [24, 0], sizes = [8, 32], strides = [1, 1]} : vector<32x32xf32> to vector<8x32xf32>
    %cst_62 = arith.constant dense<0.000000e+00> : vector<34x32xf32>
    %172 = tpu.matmul %170, %171, %cst_62 {dimension_numbers = #tpu.dot_dimension_numbers<[1], [0], [0], [1], [0, 0, 1, 1], [], []>} : vector<34x8xf32>, vector<8x32xf32>, vector<34x32xf32> -> vector<34x32xf32>
    %173 = arith.addf %154, %172 : vector<34x32xf32>
    %174 = arith.addf %23, %173 : vector<34x32xf32>
    %175 = vector.broadcast %58 : vector<1x32xf32> to vector<34x32xf32>
    %176 = arith.addf %174, %175 : vector<34x32xf32>
    %cst_63 = arith.constant dense<0.000000e+00> : vector<34xf32>
    %177 = vector.multi_reduction <add>, %176, %cst_63 [1] : vector<34x32xf32> to vector<34xf32>
    %178 = vector.shape_cast %177 : vector<34xf32> to vector<34x1xf32>
    %cst_64 = arith.constant 3.200000e+01 : f32
    %179 = vector.broadcast %cst_64 : f32 to vector<34x1xf32>
    %180 = arith.divf %178, %179 : vector<34x1xf32>
    %181 = vector.broadcast %180 : vector<34x1xf32> to vector<34x32xf32>
    %182 = arith.subf %176, %181 : vector<34x32xf32>
    %183 = arith.mulf %182, %182 : vector<34x32xf32>
    %cst_65 = arith.constant dense<0.000000e+00> : vector<34xf32>
    %184 = vector.multi_reduction <add>, %183, %cst_65 [1] : vector<34x32xf32> to vector<34xf32>
    %185 = vector.shape_cast %184 : vector<34xf32> to vector<34x1xf32>
    %cst_66 = arith.constant 3.200000e+01 : f32
    %186 = vector.broadcast %cst_66 : f32 to vector<34x1xf32>
    %187 = arith.divf %185, %186 : vector<34x1xf32>
    %188 = vector.broadcast %180 : vector<34x1xf32> to vector<34x32xf32>
    %189 = arith.subf %176, %188 : vector<34x32xf32>
    %cst_67 = arith.constant 9.99999974E-6 : f32
    %190 = vector.broadcast %cst_67 : f32 to vector<34x1xf32>
    %191 = arith.addf %187, %190 : vector<34x1xf32>
    %192 = math.rsqrt %191 : vector<34x1xf32>
    %193 = vector.broadcast %192 : vector<34x1xf32> to vector<34x32xf32>
    %194 = arith.mulf %189, %193 : vector<34x32xf32>
    %195 = vector.broadcast %59 : vector<1x32xf32> to vector<34x32xf32>
    %196 = arith.mulf %194, %195 : vector<34x32xf32>
    %197 = vector.broadcast %60 : vector<1x32xf32> to vector<34x32xf32>
    %198 = arith.addf %196, %197 : vector<34x32xf32>
    %c0_68 = arith.constant 0 : index
    %c0_69 = arith.constant 0 : index
    %c0_70 = arith.constant 0 : index
    %199 = vector.load %arg8[%c0_68, %c0_69, %c0_70] : memref<2x32x64xf32, #tpu.memory_space<vmem>>, vector<1x32x64xf32>
    %200 = vector.shape_cast %199 : vector<1x32x64xf32> to vector<32x64xf32>
    %cst_71 = arith.constant dense<0.000000e+00> : vector<34x64xf32>
    %201 = tpu.matmul %198, %200, %cst_71 {dimension_numbers = #tpu.dot_dimension_numbers<[1], [0], [0], [1], [0, 0, 1, 1], [], []>} : vector<34x32xf32>, vector<32x64xf32>, vector<34x64xf32> -> vector<34x64xf32>
    %202 = vector.broadcast %61 : vector<1x64xf32> to vector<34x64xf32>
    %203 = arith.addf %201, %202 : vector<34x64xf32>
    %cst_72 = arith.constant 5.000000e-01 : f32
    %204 = vector.broadcast %cst_72 : f32 to vector<34x64xf32>
    %205 = arith.mulf %204, %203 : vector<34x64xf32>
    %cst_73 = arith.constant 0.707106769 : f32
    %206 = vector.broadcast %cst_73 : f32 to vector<34x64xf32>
    %207 = arith.mulf %203, %206 : vector<34x64xf32>
    %208 = math.erf %207 : vector<34x64xf32>
    %cst_74 = arith.constant 1.000000e+00 : f32
    %209 = vector.broadcast %cst_74 : f32 to vector<34x64xf32>
    %210 = arith.addf %209, %208 : vector<34x64xf32>
    %211 = arith.mulf %205, %210 : vector<34x64xf32>
    %c0_75 = arith.constant 0 : index
    %c0_76 = arith.constant 0 : index
    %c0_77 = arith.constant 0 : index
    %212 = vector.load %arg9[%c0_75, %c0_76, %c0_77] : memref<2x64x32xf32, #tpu.memory_space<vmem>>, vector<1x64x32xf32>
    %213 = vector.shape_cast %212 : vector<1x64x32xf32> to vector<64x32xf32>
    %cst_78 = arith.constant dense<0.000000e+00> : vector<34x32xf32>
    %214 = tpu.matmul %211, %213, %cst_78 {dimension_numbers = #tpu.dot_dimension_numbers<[1], [0], [0], [1], [0, 0, 1, 1], [], []>} : vector<34x64xf32>, vector<64x32xf32>, vector<34x32xf32> -> vector<34x32xf32>
    %215 = vector.broadcast %62 : vector<1x32xf32> to vector<34x32xf32>
    %216 = arith.addf %214, %215 : vector<34x32xf32>
    %217 = arith.addf %176, %216 : vector<34x32xf32>
    %c1_79 = arith.constant 1 : index
    %c0_80 = arith.constant 0 : index
    %c0_81 = arith.constant 0 : index
    %218 = vector.load %arg10[%c1_79, %c0_80, %c0_81] : memref<2x8x96xf32, #tpu.memory_space<vmem>>, vector<1x8x96xf32>
    %219 = vector.shape_cast %218 : vector<1x8x96xf32> to vector<8x96xf32>
    %220 = vector.extract_strided_slice %219 {offsets = [0, 0], sizes = [1, 32], strides = [1, 1]} : vector<8x96xf32> to vector<1x32xf32>
    %221 = vector.extract_strided_slice %219 {offsets = [1, 0], sizes = [1, 32], strides = [1, 1]} : vector<8x96xf32> to vector<1x32xf32>
    %222 = vector.extract_strided_slice %219 {offsets = [2, 0], sizes = [1, 96], strides = [1, 1]} : vector<8x96xf32> to vector<1x96xf32>
    %223 = vector.extract_strided_slice %219 {offsets = [3, 0], sizes = [1, 32], strides = [1, 1]} : vector<8x96xf32> to vector<1x32xf32>
    %224 = vector.extract_strided_slice %219 {offsets = [4, 0], sizes = [1, 32], strides = [1, 1]} : vector<8x96xf32> to vector<1x32xf32>
    %225 = vector.extract_strided_slice %219 {offsets = [5, 0], sizes = [1, 32], strides = [1, 1]} : vector<8x96xf32> to vector<1x32xf32>
    %226 = vector.extract_strided_slice %219 {offsets = [6, 0], sizes = [1, 64], strides = [1, 1]} : vector<8x96xf32> to vector<1x64xf32>
    %227 = vector.extract_strided_slice %219 {offsets = [7, 0], sizes = [1, 32], strides = [1, 1]} : vector<8x96xf32> to vector<1x32xf32>
    %cst_82 = arith.constant dense<0.000000e+00> : vector<34xf32>
    %228 = vector.multi_reduction <add>, %217, %cst_82 [1] : vector<34x32xf32> to vector<34xf32>
    %229 = vector.shape_cast %228 : vector<34xf32> to vector<34x1xf32>
    %cst_83 = arith.constant 3.200000e+01 : f32
    %230 = vector.broadcast %cst_83 : f32 to vector<34x1xf32>
    %231 = arith.divf %229, %230 : vector<34x1xf32>
    %232 = vector.broadcast %231 : vector<34x1xf32> to vector<34x32xf32>
    %233 = arith.subf %217, %232 : vector<34x32xf32>
    %234 = arith.mulf %233, %233 : vector<34x32xf32>
    %cst_84 = arith.constant dense<0.000000e+00> : vector<34xf32>
    %235 = vector.multi_reduction <add>, %234, %cst_84 [1] : vector<34x32xf32> to vector<34xf32>
    %236 = vector.shape_cast %235 : vector<34xf32> to vector<34x1xf32>
    %cst_85 = arith.constant 3.200000e+01 : f32
    %237 = vector.broadcast %cst_85 : f32 to vector<34x1xf32>
    %238 = arith.divf %236, %237 : vector<34x1xf32>
    %239 = vector.broadcast %231 : vector<34x1xf32> to vector<34x32xf32>
    %240 = arith.subf %217, %239 : vector<34x32xf32>
    %cst_86 = arith.constant 9.99999974E-6 : f32
    %241 = vector.broadcast %cst_86 : f32 to vector<34x1xf32>
    %242 = arith.addf %238, %241 : vector<34x1xf32>
    %243 = math.rsqrt %242 : vector<34x1xf32>
    %244 = vector.broadcast %243 : vector<34x1xf32> to vector<34x32xf32>
    %245 = arith.mulf %240, %244 : vector<34x32xf32>
    %246 = vector.broadcast %220 : vector<1x32xf32> to vector<34x32xf32>
    %247 = arith.mulf %245, %246 : vector<34x32xf32>
    %248 = vector.broadcast %221 : vector<1x32xf32> to vector<34x32xf32>
    %249 = arith.addf %247, %248 : vector<34x32xf32>
    %c1_87 = arith.constant 1 : index
    %c0_88 = arith.constant 0 : index
    %c0_89 = arith.constant 0 : index
    %250 = vector.load %arg6[%c1_87, %c0_88, %c0_89] : memref<2x32x96xf32, #tpu.memory_space<vmem>>, vector<1x32x96xf32>
    %251 = vector.shape_cast %250 : vector<1x32x96xf32> to vector<32x96xf32>
    %cst_90 = arith.constant dense<0.000000e+00> : vector<34x96xf32>
    %252 = tpu.matmul %249, %251, %cst_90 {dimension_numbers = #tpu.dot_dimension_numbers<[1], [0], [0], [1], [0, 0, 1, 1], [], []>} : vector<34x32xf32>, vector<32x96xf32>, vector<34x96xf32> -> vector<34x96xf32>
    %253 = vector.broadcast %222 : vector<1x96xf32> to vector<34x96xf32>
    %254 = arith.addf %252, %253 : vector<34x96xf32>
    %255 = vector.extract_strided_slice %254 {offsets = [0, 0], sizes = [34, 32], strides = [1, 1]} : vector<34x96xf32> to vector<34x32xf32>
    %cst_91 = arith.constant 0.353553385 : f32
    %256 = vector.broadcast %cst_91 : f32 to vector<34x32xf32>
    %257 = arith.mulf %255, %256 : vector<34x32xf32>
    %258 = vector.extract_strided_slice %254 {offsets = [0, 32], sizes = [34, 32], strides = [1, 1]} : vector<34x96xf32> to vector<34x32xf32>
    %259 = vector.extract_strided_slice %254 {offsets = [0, 64], sizes = [34, 32], strides = [1, 1]} : vector<34x96xf32> to vector<34x32xf32>
    %c1_92 = arith.constant 1 : index
    %c0_93 = arith.constant 0 : index
    %c0_94 = arith.constant 0 : index
    %260 = vector.load %arg7[%c1_92, %c0_93, %c0_94] : memref<2x32x32xf32, #tpu.memory_space<vmem>>, vector<1x32x32xf32>
    %261 = vector.shape_cast %260 : vector<1x32x32xf32> to vector<32x32xf32>
    %cst_95 = arith.constant 0.000000e+00 : f32
    %262 = vector.broadcast %cst_95 : f32 to vector<34x32xf32>
    %263 = vector.extract_strided_slice %257 {offsets = [0, 0], sizes = [34, 8], strides = [1, 1]} : vector<34x32xf32> to vector<34x8xf32>
    %264 = vector.extract_strided_slice %258 {offsets = [0, 0], sizes = [34, 8], strides = [1, 1]} : vector<34x32xf32> to vector<34x8xf32>
    %265 = vector.extract_strided_slice %259 {offsets = [0, 0], sizes = [34, 8], strides = [1, 1]} : vector<34x32xf32> to vector<34x8xf32>
    "tpu.trace_start"() <{level = 10 : i32, message = "qd,kd->qk"}> : () -> ()
    %cst_96 = arith.constant dense<0.000000e+00> : vector<34x34xf32>
    %266 = tpu.matmul %263, %264, %cst_96 {dimension_numbers = #tpu.dot_dimension_numbers<[1], [1], [0], [0], [0, 0, 1, 0], [], []>} : vector<34x8xf32>, vector<34x8xf32>, vector<34x34xf32> -> vector<34x34xf32>
    "tpu.trace_stop"() : () -> ()
    %267 = arith.addf %266, %52 : vector<34x34xf32>
    %cst_97 = arith.constant dense<0xFF800000> : vector<34xf32>
    %268 = vector.multi_reduction <maximumf>, %267, %cst_97 [1] : vector<34x34xf32> to vector<34xf32>
    %269 = vector.shape_cast %268 : vector<34xf32> to vector<34x1xf32>
    %270 = vector.broadcast %269 : vector<34x1xf32> to vector<34x34xf32>
    %271 = arith.subf %267, %270 : vector<34x34xf32>
    %272 = math.exp %271 : vector<34x34xf32>
    %cst_98 = arith.constant dense<0.000000e+00> : vector<34xf32>
    %273 = vector.multi_reduction <add>, %272, %cst_98 [1] : vector<34x34xf32> to vector<34xf32>
    %274 = vector.shape_cast %273 : vector<34xf32> to vector<34x1xf32>
    %275 = tpu.reciprocal %274 : vector<34x1xf32> -> vector<34x1xf32>
    %276 = vector.broadcast %275 : vector<34x1xf32> to vector<34x34xf32>
    %277 = arith.mulf %272, %276 : vector<34x34xf32>
    %cst_99 = arith.constant dense<0.000000e+00> : vector<34x8xf32>
    %278 = tpu.matmul %277, %265, %cst_99 {dimension_numbers = #tpu.dot_dimension_numbers<[1], [0], [0], [1], [0, 0, 1, 1], [], []>} : vector<34x34xf32>, vector<34x8xf32>, vector<34x8xf32> -> vector<34x8xf32>
    %279 = vector.extract_strided_slice %261 {offsets = [0, 0], sizes = [8, 32], strides = [1, 1]} : vector<32x32xf32> to vector<8x32xf32>
    %cst_100 = arith.constant dense<0.000000e+00> : vector<34x32xf32>
    %280 = tpu.matmul %278, %279, %cst_100 {dimension_numbers = #tpu.dot_dimension_numbers<[1], [0], [0], [1], [0, 0, 1, 1], [], []>} : vector<34x8xf32>, vector<8x32xf32>, vector<34x32xf32> -> vector<34x32xf32>
    %281 = arith.addf %262, %280 : vector<34x32xf32>
    %282 = vector.extract_strided_slice %257 {offsets = [0, 8], sizes = [34, 8], strides = [1, 1]} : vector<34x32xf32> to vector<34x8xf32>
    %283 = vector.extract_strided_slice %258 {offsets = [0, 8], sizes = [34, 8], strides = [1, 1]} : vector<34x32xf32> to vector<34x8xf32>
    %284 = vector.extract_strided_slice %259 {offsets = [0, 8], sizes = [34, 8], strides = [1, 1]} : vector<34x32xf32> to vector<34x8xf32>
    "tpu.trace_start"() <{level = 10 : i32, message = "qd,kd->qk"}> : () -> ()
    %cst_101 = arith.constant dense<0.000000e+00> : vector<34x34xf32>
    %285 = tpu.matmul %282, %283, %cst_101 {dimension_numbers = #tpu.dot_dimension_numbers<[1], [1], [0], [0], [0, 0, 1, 0], [], []>} : vector<34x8xf32>, vector<34x8xf32>, vector<34x34xf32> -> vector<34x34xf32>
    "tpu.trace_stop"() : () -> ()
    %286 = arith.addf %285, %52 : vector<34x34xf32>
    %cst_102 = arith.constant dense<0xFF800000> : vector<34xf32>
    %287 = vector.multi_reduction <maximumf>, %286, %cst_102 [1] : vector<34x34xf32> to vector<34xf32>
    %288 = vector.shape_cast %287 : vector<34xf32> to vector<34x1xf32>
    %289 = vector.broadcast %288 : vector<34x1xf32> to vector<34x34xf32>
    %290 = arith.subf %286, %289 : vector<34x34xf32>
    %291 = math.exp %290 : vector<34x34xf32>
    %cst_103 = arith.constant dense<0.000000e+00> : vector<34xf32>
    %292 = vector.multi_reduction <add>, %291, %cst_103 [1] : vector<34x34xf32> to vector<34xf32>
    %293 = vector.shape_cast %292 : vector<34xf32> to vector<34x1xf32>
    %294 = tpu.reciprocal %293 : vector<34x1xf32> -> vector<34x1xf32>
    %295 = vector.broadcast %294 : vector<34x1xf32> to vector<34x34xf32>
    %296 = arith.mulf %291, %295 : vector<34x34xf32>
    %cst_104 = arith.constant dense<0.000000e+00> : vector<34x8xf32>
    %297 = tpu.matmul %296, %284, %cst_104 {dimension_numbers = #tpu.dot_dimension_numbers<[1], [0], [0], [1], [0, 0, 1, 1], [], []>} : vector<34x34xf32>, vector<34x8xf32>, vector<34x8xf32> -> vector<34x8xf32>
    %298 = vector.extract_strided_slice %261 {offsets = [8, 0], sizes = [8, 32], strides = [1, 1]} : vector<32x32xf32> to vector<8x32xf32>
    %cst_105 = arith.constant dense<0.000000e+00> : vector<34x32xf32>
    %299 = tpu.matmul %297, %298, %cst_105 {dimension_numbers = #tpu.dot_dimension_numbers<[1], [0], [0], [1], [0, 0, 1, 1], [], []>} : vector<34x8xf32>, vector<8x32xf32>, vector<34x32xf32> -> vector<34x32xf32>
    %300 = arith.addf %281, %299 : vector<34x32xf32>
    %301 = vector.extract_strided_slice %257 {offsets = [0, 16], sizes = [34, 8], strides = [1, 1]} : vector<34x32xf32> to vector<34x8xf32>
    %302 = vector.extract_strided_slice %258 {offsets = [0, 16], sizes = [34, 8], strides = [1, 1]} : vector<34x32xf32> to vector<34x8xf32>
    %303 = vector.extract_strided_slice %259 {offsets = [0, 16], sizes = [34, 8], strides = [1, 1]} : vector<34x32xf32> to vector<34x8xf32>
    "tpu.trace_start"() <{level = 10 : i32, message = "qd,kd->qk"}> : () -> ()
    %cst_106 = arith.constant dense<0.000000e+00> : vector<34x34xf32>
    %304 = tpu.matmul %301, %302, %cst_106 {dimension_numbers = #tpu.dot_dimension_numbers<[1], [1], [0], [0], [0, 0, 1, 0], [], []>} : vector<34x8xf32>, vector<34x8xf32>, vector<34x34xf32> -> vector<34x34xf32>
    "tpu.trace_stop"() : () -> ()
    %305 = arith.addf %304, %52 : vector<34x34xf32>
    %cst_107 = arith.constant dense<0xFF800000> : vector<34xf32>
    %306 = vector.multi_reduction <maximumf>, %305, %cst_107 [1] : vector<34x34xf32> to vector<34xf32>
    %307 = vector.shape_cast %306 : vector<34xf32> to vector<34x1xf32>
    %308 = vector.broadcast %307 : vector<34x1xf32> to vector<34x34xf32>
    %309 = arith.subf %305, %308 : vector<34x34xf32>
    %310 = math.exp %309 : vector<34x34xf32>
    %cst_108 = arith.constant dense<0.000000e+00> : vector<34xf32>
    %311 = vector.multi_reduction <add>, %310, %cst_108 [1] : vector<34x34xf32> to vector<34xf32>
    %312 = vector.shape_cast %311 : vector<34xf32> to vector<34x1xf32>
    %313 = tpu.reciprocal %312 : vector<34x1xf32> -> vector<34x1xf32>
    %314 = vector.broadcast %313 : vector<34x1xf32> to vector<34x34xf32>
    %315 = arith.mulf %310, %314 : vector<34x34xf32>
    %cst_109 = arith.constant dense<0.000000e+00> : vector<34x8xf32>
    %316 = tpu.matmul %315, %303, %cst_109 {dimension_numbers = #tpu.dot_dimension_numbers<[1], [0], [0], [1], [0, 0, 1, 1], [], []>} : vector<34x34xf32>, vector<34x8xf32>, vector<34x8xf32> -> vector<34x8xf32>
    %317 = vector.extract_strided_slice %261 {offsets = [16, 0], sizes = [8, 32], strides = [1, 1]} : vector<32x32xf32> to vector<8x32xf32>
    %cst_110 = arith.constant dense<0.000000e+00> : vector<34x32xf32>
    %318 = tpu.matmul %316, %317, %cst_110 {dimension_numbers = #tpu.dot_dimension_numbers<[1], [0], [0], [1], [0, 0, 1, 1], [], []>} : vector<34x8xf32>, vector<8x32xf32>, vector<34x32xf32> -> vector<34x32xf32>
    %319 = arith.addf %300, %318 : vector<34x32xf32>
    %320 = vector.extract_strided_slice %257 {offsets = [0, 24], sizes = [34, 8], strides = [1, 1]} : vector<34x32xf32> to vector<34x8xf32>
    %321 = vector.extract_strided_slice %258 {offsets = [0, 24], sizes = [34, 8], strides = [1, 1]} : vector<34x32xf32> to vector<34x8xf32>
    %322 = vector.extract_strided_slice %259 {offsets = [0, 24], sizes = [34, 8], strides = [1, 1]} : vector<34x32xf32> to vector<34x8xf32>
    "tpu.trace_start"() <{level = 10 : i32, message = "qd,kd->qk"}> : () -> ()
    %cst_111 = arith.constant dense<0.000000e+00> : vector<34x34xf32>
    %323 = tpu.matmul %320, %321, %cst_111 {dimension_numbers = #tpu.dot_dimension_numbers<[1], [1], [0], [0], [0, 0, 1, 0], [], []>} : vector<34x8xf32>, vector<34x8xf32>, vector<34x34xf32> -> vector<34x34xf32>
    "tpu.trace_stop"() : () -> ()
    %324 = arith.addf %323, %52 : vector<34x34xf32>
    %cst_112 = arith.constant dense<0xFF800000> : vector<34xf32>
    %325 = vector.multi_reduction <maximumf>, %324, %cst_112 [1] : vector<34x34xf32> to vector<34xf32>
    %326 = vector.shape_cast %325 : vector<34xf32> to vector<34x1xf32>
    %327 = vector.broadcast %326 : vector<34x1xf32> to vector<34x34xf32>
    %328 = arith.subf %324, %327 : vector<34x34xf32>
    %329 = math.exp %328 : vector<34x34xf32>
    %cst_113 = arith.constant dense<0.000000e+00> : vector<34xf32>
    %330 = vector.multi_reduction <add>, %329, %cst_113 [1] : vector<34x34xf32> to vector<34xf32>
    %331 = vector.shape_cast %330 : vector<34xf32> to vector<34x1xf32>
    %332 = tpu.reciprocal %331 : vector<34x1xf32> -> vector<34x1xf32>
    %333 = vector.broadcast %332 : vector<34x1xf32> to vector<34x34xf32>
    %334 = arith.mulf %329, %333 : vector<34x34xf32>
    %cst_114 = arith.constant dense<0.000000e+00> : vector<34x8xf32>
    %335 = tpu.matmul %334, %322, %cst_114 {dimension_numbers = #tpu.dot_dimension_numbers<[1], [0], [0], [1], [0, 0, 1, 1], [], []>} : vector<34x34xf32>, vector<34x8xf32>, vector<34x8xf32> -> vector<34x8xf32>
    %336 = vector.extract_strided_slice %261 {offsets = [24, 0], sizes = [8, 32], strides = [1, 1]} : vector<32x32xf32> to vector<8x32xf32>
    %cst_115 = arith.constant dense<0.000000e+00> : vector<34x32xf32>
    %337 = tpu.matmul %335, %336, %cst_115 {dimension_numbers = #tpu.dot_dimension_numbers<[1], [0], [0], [1], [0, 0, 1, 1], [], []>} : vector<34x8xf32>, vector<8x32xf32>, vector<34x32xf32> -> vector<34x32xf32>
    %338 = arith.addf %319, %337 : vector<34x32xf32>
    %339 = arith.addf %217, %338 : vector<34x32xf32>
    %340 = vector.broadcast %223 : vector<1x32xf32> to vector<34x32xf32>
    %341 = arith.addf %339, %340 : vector<34x32xf32>
    %cst_116 = arith.constant dense<0.000000e+00> : vector<34xf32>
    %342 = vector.multi_reduction <add>, %341, %cst_116 [1] : vector<34x32xf32> to vector<34xf32>
    %343 = vector.shape_cast %342 : vector<34xf32> to vector<34x1xf32>
    %cst_117 = arith.constant 3.200000e+01 : f32
    %344 = vector.broadcast %cst_117 : f32 to vector<34x1xf32>
    %345 = arith.divf %343, %344 : vector<34x1xf32>
    %346 = vector.broadcast %345 : vector<34x1xf32> to vector<34x32xf32>
    %347 = arith.subf %341, %346 : vector<34x32xf32>
    %348 = arith.mulf %347, %347 : vector<34x32xf32>
    %cst_118 = arith.constant dense<0.000000e+00> : vector<34xf32>
    %349 = vector.multi_reduction <add>, %348, %cst_118 [1] : vector<34x32xf32> to vector<34xf32>
    %350 = vector.shape_cast %349 : vector<34xf32> to vector<34x1xf32>
    %cst_119 = arith.constant 3.200000e+01 : f32
    %351 = vector.broadcast %cst_119 : f32 to vector<34x1xf32>
    %352 = arith.divf %350, %351 : vector<34x1xf32>
    %353 = vector.broadcast %345 : vector<34x1xf32> to vector<34x32xf32>
    %354 = arith.subf %341, %353 : vector<34x32xf32>
    %cst_120 = arith.constant 9.99999974E-6 : f32
    %355 = vector.broadcast %cst_120 : f32 to vector<34x1xf32>
    %356 = arith.addf %352, %355 : vector<34x1xf32>
    %357 = math.rsqrt %356 : vector<34x1xf32>
    %358 = vector.broadcast %357 : vector<34x1xf32> to vector<34x32xf32>
    %359 = arith.mulf %354, %358 : vector<34x32xf32>
    %360 = vector.broadcast %224 : vector<1x32xf32> to vector<34x32xf32>
    %361 = arith.mulf %359, %360 : vector<34x32xf32>
    %362 = vector.broadcast %225 : vector<1x32xf32> to vector<34x32xf32>
    %363 = arith.addf %361, %362 : vector<34x32xf32>
    %c1_121 = arith.constant 1 : index
    %c0_122 = arith.constant 0 : index
    %c0_123 = arith.constant 0 : index
    %364 = vector.load %arg8[%c1_121, %c0_122, %c0_123] : memref<2x32x64xf32, #tpu.memory_space<vmem>>, vector<1x32x64xf32>
    %365 = vector.shape_cast %364 : vector<1x32x64xf32> to vector<32x64xf32>
    %cst_124 = arith.constant dense<0.000000e+00> : vector<34x64xf32>
    %366 = tpu.matmul %363, %365, %cst_124 {dimension_numbers = #tpu.dot_dimension_numbers<[1], [0], [0], [1], [0, 0, 1, 1], [], []>} : vector<34x32xf32>, vector<32x64xf32>, vector<34x64xf32> -> vector<34x64xf32>
    %367 = vector.broadcast %226 : vector<1x64xf32> to vector<34x64xf32>
    %368 = arith.addf %366, %367 : vector<34x64xf32>
    %cst_125 = arith.constant 5.000000e-01 : f32
    %369 = vector.broadcast %cst_125 : f32 to vector<34x64xf32>
    %370 = arith.mulf %369, %368 : vector<34x64xf32>
    %cst_126 = arith.constant 0.707106769 : f32
    %371 = vector.broadcast %cst_126 : f32 to vector<34x64xf32>
    %372 = arith.mulf %368, %371 : vector<34x64xf32>
    %373 = math.erf %372 : vector<34x64xf32>
    %cst_127 = arith.constant 1.000000e+00 : f32
    %374 = vector.broadcast %cst_127 : f32 to vector<34x64xf32>
    %375 = arith.addf %374, %373 : vector<34x64xf32>
    %376 = arith.mulf %370, %375 : vector<34x64xf32>
    %c1_128 = arith.constant 1 : index
    %c0_129 = arith.constant 0 : index
    %c0_130 = arith.constant 0 : index
    %377 = vector.load %arg9[%c1_128, %c0_129, %c0_130] : memref<2x64x32xf32, #tpu.memory_space<vmem>>, vector<1x64x32xf32>
    %378 = vector.shape_cast %377 : vector<1x64x32xf32> to vector<64x32xf32>
    %cst_131 = arith.constant dense<0.000000e+00> : vector<34x32xf32>
    %379 = tpu.matmul %376, %378, %cst_131 {dimension_numbers = #tpu.dot_dimension_numbers<[1], [0], [0], [1], [0, 0, 1, 1], [], []>} : vector<34x64xf32>, vector<64x32xf32>, vector<34x32xf32> -> vector<34x32xf32>
    %380 = vector.broadcast %227 : vector<1x32xf32> to vector<34x32xf32>
    %381 = arith.addf %379, %380 : vector<34x32xf32>
    %382 = arith.addf %341, %381 : vector<34x32xf32>
    %383 = vector.extract_strided_slice %382 {offsets = [0, 0], sizes = [1, 32], strides = [1, 1]} : vector<34x32xf32> to vector<1x32xf32>
    %c0_132 = arith.constant 0 : index
    %c0_133 = arith.constant 0 : index
    %384 = vector.load %arg11[%c0_132, %c0_133] : memref<2x32xf32, #tpu.memory_space<vmem>>, vector<1x32xf32>
    tpu.vector_store %arg11[%c0_132, %c0_133], %383 {strides = array<i32>} : memref<2x32xf32, #tpu.memory_space<vmem>>, vector<1x32xf32>,
    %385 = vector.extract_strided_slice %382 {offsets = [17, 0], sizes = [1, 32], strides = [1, 1]} : vector<34x32xf32> to vector<1x32xf32>
    %c1_134 = arith.constant 1 : index
    %c0_135 = arith.constant 0 : index
    %386 = vector.load %arg11[%c1_134, %c0_135] : memref<2x32xf32, #tpu.memory_space<vmem>>, vector<1x32xf32>
    tpu.vector_store %arg11[%c1_134, %c0_135], %385 {strides = array<i32>} : memref<2x32xf32, #tpu.memory_space<vmem>>, vector<1x32xf32>,
    return
  }
  func.func @transform_0(%arg0: i32) -> (i32, i32) {
    %c0_i32 = arith.constant 0 : i32
    %c0_i32_0 = arith.constant 0 : i32
    %c0_i32_1 = arith.constant 0 : i32
    return %c0_i32, %c0_i32_0 : i32, i32
  }
  func.func @transform_1(%arg0: i32) -> (i32, i32) {
    %c0_i32 = arith.constant 0 : i32
    %c0_i32_0 = arith.constant 0 : i32
    %c0_i32_1 = arith.constant 0 : i32
    return %c0_i32, %c0_i32_0 : i32, i32
  }
  func.func @transform_2(%arg0: i32) -> (i32, i32) {
    %c0_i32 = arith.constant 0 : i32
    %c0_i32_0 = arith.constant 0 : i32
    %c0_i32_1 = arith.constant 0 : i32
    return %c0_i32, %c0_i32_0 : i32, i32
  }
  func.func @transform_3(%arg0: i32) -> (i32, i32) {
    %c0_i32 = arith.constant 0 : i32
    %c0_i32_0 = arith.constant 0 : i32
    %c0_i32_1 = arith.constant 0 : i32
    return %c0_i32, %c0_i32_0 : i32, i32
  }
  func.func @transform_4(%arg0: i32) -> (i32, i32) {
    %c0_i32 = arith.constant 0 : i32
    %c0_i32_0 = arith.constant 0 : i32
    %c0_i32_1 = arith.constant 0 : i32
    return %c0_i32, %c0_i32_0 : i32, i32
  }
  func.func @transform_5(%arg0: i32) -> (i32, i32, i32) {
    %c0_i32 = arith.constant 0 : i32
    %c0_i32_0 = arith.constant 0 : i32
    %c0_i32_1 = arith.constant 0 : i32
    %c0_i32_2 = arith.constant 0 : i32
    return %c0_i32, %c0_i32_0, %c0_i32_1 : i32, i32, i32
  }
  func.func @transform_6(%arg0: i32) -> (i32, i32, i32) {
    %c0_i32 = arith.constant 0 : i32
    %c0_i32_0 = arith.constant 0 : i32
    %c0_i32_1 = arith.constant 0 : i32
    %c0_i32_2 = arith.constant 0 : i32
    return %c0_i32, %c0_i32_0, %c0_i32_1 : i32, i32, i32
  }
  func.func @transform_7(%arg0: i32) -> (i32, i32, i32) {
    %c0_i32 = arith.constant 0 : i32
    %c0_i32_0 = arith.constant 0 : i32
    %c0_i32_1 = arith.constant 0 : i32
    %c0_i32_2 = arith.constant 0 : i32
    return %c0_i32, %c0_i32_0, %c0_i32_1 : i32, i32, i32
  }
  func.func @transform_8(%arg0: i32) -> (i32, i32, i32) {
    %c0_i32 = arith.constant 0 : i32
    %c0_i32_0 = arith.constant 0 : i32
    %c0_i32_1 = arith.constant 0 : i32
    %c0_i32_2 = arith.constant 0 : i32
    return %c0_i32, %c0_i32_0, %c0_i32_1 : i32, i32, i32
  }
  func.func @transform_9(%arg0: i32) -> (i32, i32, i32) {
    %c0_i32 = arith.constant 0 : i32
    %c0_i32_0 = arith.constant 0 : i32
    %c0_i32_1 = arith.constant 0 : i32
    %c0_i32_2 = arith.constant 0 : i32
    return %c0_i32, %c0_i32_0, %c0_i32_1 : i32, i32, i32
  }
  func.func @transform_10(%arg0: i32) -> (i32, i32) {
    %c0_i32 = arith.constant 0 : i32
    %c0_i32_0 = arith.constant 0 : i32
    %c0_i32_1 = arith.constant 0 : i32
    return %c0_i32, %c0_i32_0 : i32, i32
  }
}

</mosaic_0001>

<llo_original>
// kernel: vit_forward.1
$region0: #{vit_forward.1}
  #allocation0 [shape = 'u32[]', space=smem, size = 0x4, offset = 0x4, fixed_abs, tag = 'smem constant byte address 0x4 - core index']
  #allocation1 [shape = 'u32[72,128]{1,0:T(1,128)}', space=vmem, size = 0x9000, scoped, tag = 'internal scratch']
  #allocation2 [shape = 'f32[34,32]{1,0:T(8,128)}', space=vmem, size = 0x5000, scoped, tag = 'scratch operand']
  %s0 = inlined_call_operand.vmem [shape: f32[32,64], index: 0, kind: input, shape index: {}]
  %s1 = inlined_call_operand.vmem [shape: f32[64,32], index: 1, kind: input, shape index: {}]
  %s2 = inlined_call_operand.vmem [shape: f32[1,32], index: 2, kind: input, shape index: {}]
  %s3 = inlined_call_operand.vmem [shape: f32[2,32], index: 3, kind: input, shape index: {}]
  %s4 = inlined_call_operand.vmem [shape: f32[17,32], index: 4, kind: input, shape index: {}]
  %s5 = inlined_call_operand.vmem [shape: f32[2,32,96], index: 5, kind: input, shape index: {}]
  %s6 = inlined_call_operand.vmem [shape: f32[2,32,32], index: 6, kind: input, shape index: {}]
  %s7 = inlined_call_operand.vmem [shape: f32[2,32,64], index: 7, kind: input, shape index: {}]
  %s8 = inlined_call_operand.vmem [shape: f32[2,64,32], index: 8, kind: input, shape index: {}]
  %s9 = inlined_call_operand.vmem [shape: f32[2,8,96], index: 9, kind: input, shape index: {}]
  %s10 = inlined_call_operand.hbm [shape: f32[2,32], index: 10, kind: output, shape index: {}]
  %s11 = sld [smem:[#allocation0]]
  $region50: #{vit_forward.1} parent=0
    _
  %s13 = ssub.s32 1, %s11
  %s14 = scalar_select 0, %s13, %s11
  $region1: #{vit_forward.1} parent=0
    #allocation3 [shape = 'u8[1024]{0}', space=vmem, size = 0x400, scoped, tag = 'output window, operand 0, single buffered']
    #allocation4 [shape = 's32[1]{0}', space=sflag, size = 0x4, scoped, tag = 'scoped memory for vit_forward.1']
    %15 = vsyncpa [#allocation4], 0
    // Predicated region
    $region2: #{vit_forward.1} parent=1 // pred_check
      _
    $region3: #{vit_forward.1} parent=1 // pred_check_branch
      %17 = sbr.rel (0) target = $region5
    $region4: #{vit_forward.1} parent=1 // pred_region
      _
    $region5: #{vit_forward.1} parent=1 // pred_fallthru
      _
    // Predicated region
    $region6: #{vit_forward.1} parent=1 // pred_check
      _
    $region7: #{vit_forward.1} parent=1 // pred_check_branch
      %19 = sbr.rel (0) target = $region9
    $region8: #{vit_forward.1} parent=1 // pred_region
      _
    $region9: #{vit_forward.1} parent=1 // pred_fallthru
      _
    // Predicated region
    $region10: #{vit_forward.1} parent=1 // pred_check
      _
    $region11: #{vit_forward.1} parent=1 // pred_check_branch
      %21 = sbr.rel (0) target = $region13
    $region12: #{vit_forward.1} parent=1 // pred_region
      _
    $region13: #{vit_forward.1} parent=1 // pred_fallthru
      _
    // Predicated region
    $region14: #{vit_forward.1} parent=1 // pred_check
      _
    $region15: #{vit_forward.1} parent=1 // pred_check_branch
      %23 = sbr.rel (0) target = $region17
    $region16: #{vit_forward.1} parent=1 // pred_region
      _
    $region17: #{vit_forward.1} parent=1 // pred_fallthru
      _
    // Predicated region
    $region18: #{vit_forward.1} parent=1 // pred_check
      _
    $region19: #{vit_forward.1} parent=1 // pred_check_branch
      %25 = sbr.rel (0) target = $region21
    $region20: #{vit_forward.1} parent=1 // pred_region
      _
    $region21: #{vit_forward.1} parent=1 // pred_fallthru
      _
    // Predicated region
    $region22: #{vit_forward.1} parent=1 // pred_check
      _
    $region23: #{vit_forward.1} parent=1 // pred_check_branch
      %27 = sbr.rel (0) target = $region25
    $region24: #{vit_forward.1} parent=1 // pred_region
      _
    $region25: #{vit_forward.1} parent=1 // pred_fallthru
      _
    // Predicated region
    $region26: #{vit_forward.1} parent=1 // pred_check
      _
    $region27: #{vit_forward.1} parent=1 // pred_check_branch
      %29 = sbr.rel (0) target = $region29
    $region28: #{vit_forward.1} parent=1 // pred_region
      _
    $region29: #{vit_forward.1} parent=1 // pred_fallthru
      _
    // Predicated region
    $region30: #{vit_forward.1} parent=1 // pred_check
      _
    $region31: #{vit_forward.1} parent=1 // pred_check_branch
      %31 = sbr.rel (0) target = $region33
    $region32: #{vit_forward.1} parent=1 // pred_region
      _
    $region33: #{vit_forward.1} parent=1 // pred_fallthru
      _
    // Predicated region
    $region34: #{vit_forward.1} parent=1 // pred_check
      _
    $region35: #{vit_forward.1} parent=1 // pred_check_branch
      %33 = sbr.rel (0) target = $region37
    $region36: #{vit_forward.1} parent=1 // pred_region
      _
    $region37: #{vit_forward.1} parent=1 // pred_fallthru
      _
    // Predicated region
    $region38: #{vit_forward.1} parent=1 // pred_check
      _
    $region39: #{vit_forward.1} parent=1 // pred_check_branch
      %35 = sbr.rel (0) target = $region41
    $region40: #{vit_forward.1} parent=1 // pred_region
      _
    $region41: #{vit_forward.1} parent=1 // pred_fallthru
      _
    %v36 = vld [vmem:[%s0] sm:$0xff]
    %v37 = vld [vmem:[%s0 + $0x8] sm:$0xff]
    %v38 = vld [vmem:[%s0 + $0x10] sm:$0xff]
    %v39 = vld [vmem:[%s0 + $0x18] sm:$0xff]
    %v40 = vld [vmem:[%s1] sm:$0xff]
    %v41 = vld [vmem:[%s1 + $0x8] sm:$0xff]
    %v42 = vld [vmem:[%s1 + $0x10] sm:$0xff]
    %v43 = vld [vmem:[%s1 + $0x18] sm:$0xff]
    %v44 = vld [vmem:[%s1 + $0x20] sm:$0xff]
    %v45 = vld [vmem:[%s1 + $0x28] sm:$0xff]
    %v46 = vld [vmem:[%s1 + $0x30] sm:$0xff]
    %v47 = vld [vmem:[%s1 + $0x38] sm:$0xff]
    %v48 = vld [vmem:[%s2] sm:$0x1]
    %v50 = vperm.slane %v48, 0
    %vm52 = vcmask 523264
    %v54 = vsel %vm52, %v36, 0
    %v57 = vsel %vm52, %v37, 0
    %v60 = vsel %vm52, %v38, 0
    %v63 = vsel %vm52, %v39, 0
    %65 = vmatpush.msra.mxu0 0.0
    %66 = vmatpush.msra.mxu0 0.0
    %67 = vmatpush.msra.mxu0 0.0
    %68 = vmatpush.msra.mxu0 0.0
    %69 = vmatpush.msra.mxu0 0.0
    %70 = vmatpush.msra.mxu0 0.0
    %71 = vmatpush.msra.mxu0 0.0
    %72 = vmatpush.msra.mxu0 0.0
    %73 = vmatpush.msra.mxu0 %v47
    %74 = vmatpush.msra.mxu0 %v46
    %75 = vmatpush.msra.mxu0 %v45
    %76 = vmatpush.msra.mxu0 %v44
    %77 = vmatpush.msra.mxu0 %v43
    %78 = vmatpush.msra.mxu0 %v42
    %79 = vmatpush.msra.mxu0 %v41
    %80 = vmatpush.msra.mxu0 %v40
    %81 = vmatmul.f32.gmra.mxu0 %v54
    %v82 = vpop.f32.mrf.mxu0
    %v83 = vadd.f32 %v50, %v82
    %84 = vmatmul.f32.gmra.mxu0 %v57
    %v85 = vpop.f32.mrf.mxu0
    %v86 = vadd.f32 %v50, %v85
    %87 = vmatmul.f32.gmra.mxu0 %v60
    %v88 = vpop.f32.mrf.mxu0
    %v89 = vadd.f32 %v50, %v88
    %90 = vmatmul.f32.gmra.mxu0 %v63
    %v91 = vpop.f32.mrf.mxu0
    %v92 = vadd.f32 %v50, %v91
    %93 = vdwg.mxu0
    %v94 = vld [vmem:[%s4] sm:$0xff]
    %v95 = vld [vmem:[%s4 + $0x8] sm:$0xff]
    %v96 = vld [vmem:[%s4 + $0x10] sm:$0x1]
    %v97 = vld [vmem:[%s3] sm:$0x1]
    %v98 = vadd.f32 %v97, %v94
    %vm99 = vcmask 253952
    %100 = vst.msk [vmem:[#allocation2] sm:$0x1] %vm99, %v98
    %vm104 = vcmask 1046528
    %v105 = vrot.slane %v94, 1
    %v106 = vrot.slane %v95, 1
    %v107 = vsel %vm104, %v105, %v106
    %v108 = vrot.slane %v96, 1
    %v109 = vsel %vm104, %v106, %v108
    %v112 = vadd.f32 %v83, %v107
    %v113 = vadd.f32 %v86, %v109
    %vm114 = vcmask 261120
    %115 = vst.msk [vmem:[#allocation2 + $0x1] sm:$0xff] %vm114, %v112
    %116 = vst.msk [vmem:[#allocation2 + $0x9] sm:$0xff] %vm114, %v113
    %v117 = vld [vmem:[%s3 + $0x1] sm:$0x1]
    %v118 = vadd.f32 %v117, %v94
    %119 = vst.msk [vmem:[#allocation2 + $0x11] sm:$0x1] %vm99, %v118
    %v120 = vadd.f32 %v89, %v107
    %v121 = vadd.f32 %v92, %v109
    %122 = vst.msk [vmem:[#allocation2 + $0x12] sm:$0xff] %vm114, %v120
    %123 = vst.msk [vmem:[#allocation2 + $0x1a] sm:$0xff] %vm114, %v121
    %v124 = vld [vmem:[#allocation2] sm:$0xff]
    %v125 = vld [vmem:[#allocation2 + $0x8] sm:$0xff]
    %v126 = vld [vmem:[#allocation2 + $0x10] sm:$0xff]
    %v127 = vld [vmem:[#allocation2 + $0x18] sm:$0xff]
    %v128 = vld [vmem:[#allocation2 + $0x20] sm:$0x3]
    %v129 = vlaneseq
    %v130 = vshrl.u32 %v129, 7
    %v131 = vadd.s32 %v130, 8
    %v132 = vadd.s32 %v130, 16
    %v133 = vadd.s32 %v130, 24
    %v134 = vadd.s32 %v130, 32
    %v135 = vlaneseq
    %v136 = vand.u32 %v135, 127
    %vm137 = vcmp.ge.s32.totalorder %v130, 0
    %vm138 = vcmp.ge.s32.totalorder %v131, 0
    %vm139 = vcmp.ge.s32.totalorder %v132, 0
    %vm140 = vcmp.ge.s32.totalorder %v133, 0
    %vm141 = vcmp.ge.s32.totalorder %v134, 0
    %vm142 = vcmp.lt.s32.totalorder %v130, 17
    %vm143 = vcmp.lt.s32.totalorder %v131, 17
    %vm144 = vcmp.lt.s32.totalorder %v132, 17
    %vm145 = vcmp.lt.s32.totalorder %v133, 17
    %vm146 = vcmp.lt.s32.totalorder %v134, 17
    %vm147 = vmand %vm137, %vm142
    %vm148 = vmand %vm138, %vm143
    %vm149 = vmand %vm139, %vm144
    %vm150 = vmand %vm140, %vm145
    %vm151 = vmand %vm141, %vm146
    %vm152 = vcmp.ge.s32.totalorder %v136, 0
    %vm153 = vcmp.lt.s32.totalorder %v136, 17
    %vm154 = vmand %vm152, %vm153
    %vm155 = vmand %vm147, %vm154
    %vm156 = vmand %vm148, %vm154
    %vm157 = vmand %vm149, %vm154
    %vm158 = vmand %vm150, %vm154
    %vm159 = vmand %vm151, %vm154
    %v160 = vsel %vm155, 0.0, -1e+30
    %v161 = vsel %vm156, 0.0, -1e+30
    %v162 = vsel %vm157, 0.0, -1e+30
    %v163 = vsel %vm158, 0.0, -1e+30
    %v164 = vsel %vm159, 0.0, -1e+30
    %vm165 = vcmp.ge.s32.totalorder %v130, 17
    %vm166 = vcmp.ge.s32.totalorder %v131, 17
    %vm167 = vcmp.ge.s32.totalorder %v132, 17
    %vm168 = vcmp.ge.s32.totalorder %v133, 17
    %vm169 = vcmp.ge.s32.totalorder %v134, 17
    %vm170 = vcmp.lt.s32.totalorder %v130, 34
    %vm171 = vcmp.lt.s32.totalorder %v131, 34
    %vm172 = vcmp.lt.s32.totalorder %v132, 34
    %vm173 = vcmp.lt.s32.totalorder %v133, 34
    %vm174 = vcmp.lt.s32.totalorder %v134, 34
    %vm175 = vmand %vm165, %vm170
    %vm176 = vmand %vm166, %vm171
    %vm177 = vmand %vm167, %vm172
    %vm178 = vmand %vm168, %vm173
    %vm179 = vmand %vm169, %vm174
    %vm180 = vcmp.ge.s32.totalorder %v136, 17
    %vm181 = vcmp.lt.s32.totalorder %v136, 34
    %vm182 = vmand %vm180, %vm181
    %vm183 = vmand %vm175, %vm182
    %vm184 = vmand %vm176, %vm182
    %vm185 = vmand %vm177, %vm182
    %vm186 = vmand %vm178, %vm182
    %vm187 = vmand %vm179, %vm182
    %v188 = vsel %vm183, 0.0, %v160
    %v189 = vsel %vm184, 0.0, %v161
    %v190 = vsel %vm185, 0.0, %v162
    %v191 = vsel %vm186, 0.0, %v163
    %v192 = vsel %vm187, 0.0, %v164
    %v193 = vld [vmem:[%s9] sm:$0xff]
    %v194 = vsel %vm114, %v124, 0.0
    %195 = vadd.xlane.f32.xlu0 %v194
    %v196 = vpop.xlane.xlu0 %195
    %v197 = vsel %vm114, %v125, 0.0
    %198 = vadd.xlane.f32.xlu0 %v197
    %v199 = vpop.xlane.xlu0 %198
    %v200 = vsel %vm114, %v126, 0.0
    %201 = vadd.xlane.f32.xlu0 %v200
    %v202 = vpop.xlane.xlu0 %201
    %v203 = vsel %vm114, %v127, 0.0
    %204 = vadd.xlane.f32.xlu0 %v203
    %v205 = vpop.xlane.xlu0 %204
    %vm206 = vcmask 254976
    %v207 = vsel %vm206, %v128, 0.0
    %208 = vadd.xlane.f32.xlu0 %v207
    %v209 = vpop.xlane.xlu0 %208
    %v210 = vrcp.pop 32.0
    %v211 = vmul.f32 32.0, %v210
    %v212 = vsub.f32 1.0, %v211
    %v213 = vmul.f32 %v210, %v212
    %v214 = vadd.f32 %v210, %v213
    %vm215 = vweird.f32 %v210
    %v216 = vsel %vm215, %v210, %v214
    %v217 = vmul.f32 %v196, %v216
    %v218 = vmul.f32 %v199, %v216
    %v219 = vmul.f32 %v202, %v216
    %v220 = vmul.f32 %v205, %v216
    %v221 = vmul.f32 %v209, %v216
    %v222 = vsub.f32 %v124, %v217
    %v223 = vsub.f32 %v125, %v218
    %v224 = vsub.f32 %v126, %v219
    %v225 = vsub.f32 %v127, %v220
    %v226 = vsub.f32 %v128, %v221
    %v227 = vmul.f32 %v222, %v222
    %v228 = vmul.f32 %v223, %v223
    %v229 = vmul.f32 %v224, %v224
    %v230 = vmul.f32 %v225, %v225
    %v231 = vmul.f32 %v226, %v226
    %v232 = vsel %vm114, %v227, 0.0
    %233 = vadd.xlane.f32.xlu0 %v232
    %v234 = vpop.xlane.xlu0 %233
    %v235 = vsel %vm114, %v228, 0.0
    %236 = vadd.xlane.f32.xlu0 %v235
    %v237 = vpop.xlane.xlu0 %236
    %v238 = vsel %vm114, %v229, 0.0
    %239 = vadd.xlane.f32.xlu0 %v238
    %v240 = vpop.xlane.xlu0 %239
    %v241 = vsel %vm114, %v230, 0.0
    %242 = vadd.xlane.f32.xlu0 %v241
    %v243 = vpop.xlane.xlu0 %242
    %v244 = vsel %vm206, %v231, 0.0
    %245 = vadd.xlane.f32.xlu0 %v244
    %v246 = vpop.xlane.xlu0 %245
    %v247 = vmul.f32 %v234, %v216
    %v248 = vmul.f32 %v237, %v216
    %v249 = vmul.f32 %v240, %v216
    %v250 = vmul.f32 %v243, %v216
    %v251 = vmul.f32 %v246, %v216
    %v252 = vadd.f32 %v247, 1e-05
    %v253 = vadd.f32 %v248, 1e-05
    %v254 = vadd.f32 %v249, 1e-05
    %v255 = vadd.f32 %v250, 1e-05
    %v256 = vadd.f32 %v251, 1e-05
    %v257 = vrsqrt.pop %v252
    %v258 = vmul.f32 %v257, %v252
    %v259 = vmul.f32 %v258, %v257
    %v260 = vmul.f32 0.5, %v259
    %v261 = vsub.f32 1.5, %v260
    %v262 = vmul.f32 %v257, %v261
    %vm263 = vweird.f32 %v252
    %vm264 = vweird.f32 %v257
    %vm265 = vmor %vm263, %vm264
    %v266 = vsel %vm265, %v257, %v262
    %v267 = vrsqrt.pop %v253
    %v268 = vmul.f32 %v267, %v253
    %v269 = vmul.f32 %v268, %v267
    %v270 = vmul.f32 0.5, %v269
    %v271 = vsub.f32 1.5, %v270
    %v272 = vmul.f32 %v267, %v271
    %vm273 = vweird.f32 %v253
    %vm274 = vweird.f32 %v267
    %vm275 = vmor %vm273, %vm274
    %v276 = vsel %vm275, %v267, %v272
    %v277 = vrsqrt.pop %v254
    %v278 = vmul.f32 %v277, %v254
    %v279 = vmul.f32 %v278, %v277
    %v280 = vmul.f32 0.5, %v279
    %v281 = vsub.f32 1.5, %v280
    %v282 = vmul.f32 %v277, %v281
    %vm283 = vweird.f32 %v254
    %vm284 = vweird.f32 %v277
    %vm285 = vmor %vm283, %vm284
    %v286 = vsel %vm285, %v277, %v282
    %v287 = vrsqrt.pop %v255
    %v288 = vmul.f32 %v287, %v255
    %v289 = vmul.f32 %v288, %v287
    %v290 = vmul.f32 0.5, %v289
    %v291 = vsub.f32 1.5, %v290
    %v292 = vmul.f32 %v287, %v291
    %vm293 = vweird.f32 %v255
    %vm294 = vweird.f32 %v287
    %vm295 = vmor %vm293, %vm294
    %v296 = vsel %vm295, %v287, %v292
    %v297 = vrsqrt.pop %v256
    %v298 = vmul.f32 %v297, %v256
    %v299 = vmul.f32 %v298, %v297
    %v300 = vmul.f32 0.5, %v299
    %v301 = vsub.f32 1.5, %v300
    %v302 = vmul.f32 %v297, %v301
    %vm303 = vweird.f32 %v256
    %vm304 = vweird.f32 %v297
    %vm305 = vmor %vm303, %vm304
    %v306 = vsel %vm305, %v297, %v302
    %v307 = vmul.f32 %v222, %v266
    %v308 = vmul.f32 %v223, %v276
    %v309 = vmul.f32 %v224, %v286
    %v310 = vmul.f32 %v225, %v296
    %v311 = vmul.f32 %v226, %v306
    %v312 = vperm.slane %v193, 0
    %v313 = vmul.f32 %v307, %v312
    %v314 = vmul.f32 %v308, %v312
    %v315 = vmul.f32 %v309, %v312
    %v316 = vmul.f32 %v310, %v312
    %v317 = vmul.f32 %v311, %v312
    %v318 = vperm.slane %v193, 1
    %v319 = vadd.f32 %v313, %v318
    %v320 = vadd.f32 %v314, %v318
    %v321 = vadd.f32 %v315, %v318
    %v322 = vadd.f32 %v316, %v318
    %v323 = vadd.f32 %v317, %v318
    %v324 = vld [vmem:[%s5] sm:$0xff]
    %v325 = vld [vmem:[%s5 + $0x8] sm:$0xff]
    %v326 = vld [vmem:[%s5 + $0x10] sm:$0xff]
    %v327 = vld [vmem:[%s5 + $0x18] sm:$0xff]
    %v328 = vperm.slane %v193, 2
    %v330 = vsel %vm114, %v319, 0
    %v333 = vsel %vm114, %v320, 0
    %v336 = vsel %vm114, %v321, 0
    %v339 = vsel %vm114, %v322, 0
    %v342 = vsel %vm114, %v323, 0
    %344 = vmatpush.msra.mxu0 0.0
    %345 = vmatpush.msra.mxu0 0.0
    %346 = vmatpush.msra.mxu0 0.0
    %347 = vmatpush.msra.mxu0 0.0
    %348 = vmatpush.msra.mxu0 0.0
    %349 = vmatpush.msra.mxu0 0.0
    %350 = vmatpush.msra.mxu0 0.0
    %351 = vmatpush.msra.mxu0 0.0
    %352 = vmatpush.msra.mxu0 0.0
    %353 = vmatpush.msra.mxu0 0.0
    %354 = vmatpush.msra.mxu0 0.0
    %355 = vmatpush.msra.mxu0 0.0
    %356 = vmatpush.msra.mxu0 %v327
    %357 = vmatpush.msra.mxu0 %v326
    %358 = vmatpush.msra.mxu0 %v325
    %359 = vmatpush.msra.mxu0 %v324
    %360 = vmatmul.f32.gmra.mxu0 %v330
    %v361 = vpop.f32.mrf.mxu0
    %v362 = vadd.f32 %v328, %v361
    %363 = vmatmul.f32.gmra.mxu0 %v333
    %v364 = vpop.f32.mrf.mxu0
    %v365 = vadd.f32 %v328, %v364
    %366 = vmatmul.f32.gmra.mxu0 %v336
    %v367 = vpop.f32.mrf.mxu0
    %v368 = vadd.f32 %v328, %v367
    %369 = vmatmul.f32.gmra.mxu0 %v339
    %v370 = vpop.f32.mrf.mxu0
    %v371 = vadd.f32 %v328, %v370
    %372 = vmatmul.f32.gmra.mxu0 %v342
    %v373 = vpop.f32.mrf.mxu0
    %v374 = vadd.f32 %v328, %v373
    %375 = vdwg.mxu0
    %v376 = vmul.f32 %v362, 0.35355338
    %v377 = vmul.f32 %v365, 0.35355338
    %v378 = vmul.f32 %v368, 0.35355338
    %v379 = vmul.f32 %v371, 0.35355338
    %v380 = vmul.f32 %v374, 0.35355338
    %v381 = vld [vmem:[%s6] sm:$0xff]
    %v382 = vld [vmem:[%s6 + $0x8] sm:$0xff]
    %v383 = vld [vmem:[%s6 + $0x10] sm:$0xff]
    %v384 = vld [vmem:[%s6 + $0x18] sm:$0xff]
    %390 = vrot.lane.b32.xlu0 %v362, 96
    %v391 = vpop.permute.xlu0 %390
    %392 = vrot.lane.b32.xlu0 %v365, 96
    %v393 = vpop.permute.xlu0 %392
    %394 = vrot.lane.b32.xlu0 %v368, 96
    %v395 = vpop.permute.xlu0 %394
    %396 = vrot.lane.b32.xlu0 %v371, 96
    %v397 = vpop.permute.xlu0 %396
    %398 = vrot.lane.b32.xlu0 %v374, 96
    %v399 = vpop.permute.xlu0 %398
    %vm400 = vcmask 64512
    %v402 = vsel %vm400, %v376, 0
    %v405 = vsel %vm400, %v377, 0
    %v408 = vsel %vm400, %v378, 0
    %v411 = vsel %vm400, %v379, 0
    %v414 = vsel %vm400, %v380, 0
    %v416 = vsel %vm400, %v391, 0
    %v418 = vsel %vm400, %v393, 0
    %v420 = vsel %vm400, %v395, 0
    %v422 = vsel %vm400, %v397, 0
    %v424 = vsel %vm400, %v399, 0
    %426 = vmatpush.xpose.msra.mxu0 0.0
    %427 = vmatpush.xpose.msra.mxu0 0.0
    %428 = vmatpush.xpose.msra.mxu0 0.0
    %429 = vmatpush.xpose.msra.mxu0 0.0
    %430 = vmatpush.xpose.msra.mxu0 0.0
    %431 = vmatpush.xpose.msra.mxu0 0.0
    %432 = vmatpush.xpose.msra.mxu0 0.0
    %433 = vmatpush.xpose.msra.mxu0 0.0
    %434 = vmatpush.xpose.msra.mxu0 0.0
    %435 = vmatpush.xpose.msra.mxu0 0.0
    %436 = vmatpush.xpose.msra.mxu0 0.0
    %437 = vmatpush.xpose.msra.mxu0 %v424
    %438 = vmatpush.xpose.msra.mxu0 %v422
    %439 = vmatpush.xpose.msra.mxu0 %v420
    %440 = vmatpush.xpose.msra.mxu0 %v418
    %441 = vmatpush.xpose.msra.mxu0 %v416
    %442 = vmatmul.f32.gmra.mxu0 %v402
    %v443 = vpop.f32.mrf.mxu0
    %v444 = vadd.f32 %v188, %v443
    %445 = vmatmul.f32.gmra.mxu0 %v405
    %v446 = vpop.f32.mrf.mxu0
    %v447 = vadd.f32 %v189, %v446
    %448 = vmatmul.f32.gmra.mxu0 %v408
    %v449 = vpop.f32.mrf.mxu0
    %v450 = vadd.f32 %v190, %v449
    %451 = vmatmul.f32.gmra.mxu0 %v411
    %v452 = vpop.f32.mrf.mxu0
    %v453 = vadd.f32 %v191, %v452
    %454 = vmatmul.f32.gmra.mxu0 %v414
    %v455 = vpop.f32.mrf.mxu0
    %v456 = vadd.f32 %v192, %v455
    %457 = vdwg.mxu0
    %vm458 = vcmask 277504
    %v459 = vsel %vm458, %v444, -inf
    %460 = vmax.xlane.f32.xlu0 %v459
    %v461 = vpop.xlane.xlu0 %460
    %v462 = vsel %vm458, %v447, -inf
    %463 = vmax.xlane.f32.xlu0 %v462
    %v464 = vpop.xlane.xlu0 %463
    %v465 = vsel %vm458, %v450, -inf
    %466 = vmax.xlane.f32.xlu0 %v465
    %v467 = vpop.xlane.xlu0 %466
    %v468 = vsel %vm458, %v453, -inf
    %469 = vmax.xlane.f32.xlu0 %v468
    %v470 = vpop.xlane.xlu0 %469
    %vm471 = vcmask 271360
    %v472 = vsel %vm471, %v456, -inf
    %473 = vmax.xlane.f32.xlu0 %v472
    %v474 = vpop.xlane.xlu0 %473
    %v475 = vsub.f32 %v444, %v461
    %v476 = vsub.f32 %v447, %v464
    %v477 = vsub.f32 %v450, %v467
    %v478 = vsub.f32 %v453, %v470
    %v479 = vsub.f32 %v456, %v474
    %v480 = vmul.f32 %v475, 1.442695
    %v481 = vpow.pop %v480
    %v482 = vmul.f32 %v476, 1.442695
    %v483 = vpow.pop %v482
    %v484 = vmul.f32 %v477, 1.442695
    %v485 = vpow.pop %v484
    %v486 = vmul.f32 %v478, 1.442695
    %v487 = vpow.pop %v486
    %v488 = vmul.f32 %v479, 1.442695
    %v489 = vpow.pop %v488
    %v490 = vsel %vm458, %v481, 0.0
    %491 = vadd.xlane.f32.xlu0 %v490
    %v492 = vpop.xlane.xlu0 %491
    %v493 = vsel %vm458, %v483, 0.0
    %494 = vadd.xlane.f32.xlu0 %v493
    %v495 = vpop.xlane.xlu0 %494
    %v496 = vsel %vm458, %v485, 0.0
    %497 = vadd.xlane.f32.xlu0 %v496
    %v498 = vpop.xlane.xlu0 %497
    %v499 = vsel %vm458, %v487, 0.0
    %500 = vadd.xlane.f32.xlu0 %v499
    %v501 = vpop.xlane.xlu0 %500
    %v502 = vsel %vm471, %v489, 0.0
    %503 = vadd.xlane.f32.xlu0 %v502
    %v504 = vpop.xlane.xlu0 %503
    %v505 = vrcp.pop %v492
    %v506 = vmul.f32 %v492, %v505
    %v507 = vsub.f32 1.0, %v506
    %v508 = vmul.f32 %v505, %v507
    %v509 = vadd.f32 %v505, %v508
    %vm510 = vweird.f32 %v492
    %vm511 = vweird.f32 %v505
    %vm512 = vmor %vm510, %vm511
    %v513 = vsel %vm512, %v505, %v509
    %v514 = vand.u32 2147483647, %v492
    %vm515 = vcmp.eq.f32.partialorder %v514, 8.507059e+37
    %v516 = vand.u32 %v492, 2147483648
    %v517 = vor.u32 1.1754944e-38, %v516
    %v518 = vsel %vm515, %v517, %v513
    %v519 = vrcp.pop %v495
    %v520 = vmul.f32 %v495, %v519
    %v521 = vsub.f32 1.0, %v520
    %v522 = vmul.f32 %v519, %v521
    %v523 = vadd.f32 %v519, %v522
    %vm524 = vweird.f32 %v495
    %vm525 = vweird.f32 %v519
    %vm526 = vmor %vm524, %vm525
    %v527 = vsel %vm526, %v519, %v523
    %v528 = vand.u32 2147483647, %v495
    %vm529 = vcmp.eq.f32.partialorder %v528, 8.507059e+37
    %v530 = vand.u32 %v495, 2147483648
    %v531 = vor.u32 1.1754944e-38, %v530
    %v532 = vsel %vm529, %v531, %v527
    %v533 = vrcp.pop %v498
    %v534 = vmul.f32 %v498, %v533
    %v535 = vsub.f32 1.0, %v534
    %v536 = vmul.f32 %v533, %v535
    %v537 = vadd.f32 %v533, %v536
    %vm538 = vweird.f32 %v498
    %vm539 = vweird.f32 %v533
    %vm540 = vmor %vm538, %vm539
    %v541 = vsel %vm540, %v533, %v537
    %v542 = vand.u32 2147483647, %v498
    %vm543 = vcmp.eq.f32.partialorder %v542, 8.507059e+37
    %v544 = vand.u32 %v498, 2147483648
    %v545 = vor.u32 1.1754944e-38, %v544
    %v546 = vsel %vm543, %v545, %v541
    %v547 = vrcp.pop %v501
    %v548 = vmul.f32 %v501, %v547
    %v549 = vsub.f32 1.0, %v548
    %v550 = vmul.f32 %v547, %v549
    %v551 = vadd.f32 %v547, %v550
    %vm552 = vweird.f32 %v501
    %vm553 = vweird.f32 %v547
    %vm554 = vmor %vm552, %vm553
    %v555 = vsel %vm554, %v547, %v551
    %v556 = vand.u32 2147483647, %v501
    %vm557 = vcmp.eq.f32.partialorder %v556, 8.507059e+37
    %v558 = vand.u32 %v501, 2147483648
    %v559 = vor.u32 1.1754944e-38, %v558
    %v560 = vsel %vm557, %v559, %v555
    %v561 = vrcp.pop %v504
    %v562 = vmul.f32 %v504, %v561
    %v563 = vsub.f32 1.0, %v562
    %v564 = vmul.f32 %v561, %v563
    %v565 = vadd.f32 %v561, %v564
    %vm566 = vweird.f32 %v504
    %vm567 = vweird.f32 %v561
    %vm568 = vmor %vm566, %vm567
    %v569 = vsel %vm568, %v561, %v565
    %v570 = vand.u32 2147483647, %v504
    %vm571 = vcmp.eq.f32.partialorder %v570, 8.507059e+37
    %v572 = vand.u32 %v504, 2147483648
    %v573 = vor.u32 1.1754944e-38, %v572
    %v574 = vsel %vm571, %v573, %v569
    %v575 = vmul.f32 %v481, %v518
    %v576 = vmul.f32 %v483, %v532
    %v577 = vmul.f32 %v485, %v546
    %v578 = vmul.f32 %v487, %v560
    %v579 = vmul.f32 %v489, %v574
    %580 = vrot.lane.b32.xlu0 %v362, 64
    %v581 = vpop.permute.xlu0 %580
    %582 = vrot.lane.b32.xlu0 %v365, 64
    %v583 = vpop.permute.xlu0 %582
    %584 = vrot.lane.b32.xlu0 %v368, 64
    %v585 = vpop.permute.xlu0 %584
    %586 = vrot.lane.b32.xlu0 %v371, 64
    %v587 = vpop.permute.xlu0 %586
    %588 = vrot.lane.b32.xlu0 %v374, 64
    %v589 = vpop.permute.xlu0 %588
    %v595 = vsel %vm458, %v575, 0
    %v598 = vsel %vm458, %v576, 0
    %v601 = vsel %vm458, %v577, 0
    %v604 = vsel %vm458, %v578, 0
    %v607 = vsel %vm458, %v579, 0
    %vm609 = vcmask 1041408
    %v610 = vsel %vm609, %v589, 0
    %612 = vmatpush.msra.mxu0 0.0
    %613 = vmatpush.msra.mxu0 0.0
    %614 = vmatpush.msra.mxu0 0.0
    %615 = vmatpush.msra.mxu0 0.0
    %616 = vmatpush.msra.mxu0 0.0
    %617 = vmatpush.msra.mxu0 0.0
    %618 = vmatpush.msra.mxu0 0.0
    %619 = vmatpush.msra.mxu0 0.0
    %620 = vmatpush.msra.mxu0 0.0
    %621 = vmatpush.msra.mxu0 0.0
    %622 = vmatpush.msra.mxu0 0.0
    %623 = vmatpush.msra.mxu0 %v610
    %624 = vmatpush.msra.mxu0 %v587
    %625 = vmatpush.msra.mxu0 %v585
    %626 = vmatpush.msra.mxu0 %v583
    %627 = vmatpush.msra.mxu0 %v581
    %628 = vmatmul.f32.gmra.mxu0 %v595
    %v629 = vpop.f32.mrf.mxu0
    %v630 = vadd.f32 0.0, %v629
    %631 = vmatmul.f32.gmra.mxu0 %v598
    %v632 = vpop.f32.mrf.mxu0
    %v633 = vadd.f32 0.0, %v632
    %634 = vmatmul.f32.gmra.mxu0 %v601
    %v635 = vpop.f32.mrf.mxu0
    %v636 = vadd.f32 0.0, %v635
    %637 = vmatmul.f32.gmra.mxu0 %v604
    %v638 = vpop.f32.mrf.mxu0
    %v639 = vadd.f32 0.0, %v638
    %640 = vmatmul.f32.gmra.mxu0 %v607
    %v641 = vpop.f32.mrf.mxu0
    %v642 = vadd.f32 0.0, %v641
    %643 = vdwg.mxu0
    %644 = vrot.lane.b32.xlu0 %v376, 120
    %v645 = vpop.permute.xlu0 %644
    %646 = vrot.lane.b32.xlu0 %v377, 120
    %v647 = vpop.permute.xlu0 %646
    %648 = vrot.lane.b32.xlu0 %v378, 120
    %v649 = vpop.permute.xlu0 %648
    %650 = vrot.lane.b32.xlu0 %v379, 120
    %v651 = vpop.permute.xlu0 %650
    %652 = vrot.lane.b32.xlu0 %v380, 120
    %v653 = vpop.permute.xlu0 %652
    %654 = vrot.lane.b32.xlu0 %v362, 88
    %v655 = vpop.permute.xlu0 %654
    %656 = vrot.lane.b32.xlu0 %v365, 88
    %v657 = vpop.permute.xlu0 %656
    %658 = vrot.lane.b32.xlu0 %v368, 88
    %v659 = vpop.permute.xlu0 %658
    %660 = vrot.lane.b32.xlu0 %v371, 88
    %v661 = vpop.permute.xlu0 %660
    %662 = vrot.lane.b32.xlu0 %v374, 88
    %v663 = vpop.permute.xlu0 %662
    %v664 = vsel %vm400, %v645, 0
    %v666 = vsel %vm400, %v647, 0
    %v668 = vsel %vm400, %v649, 0
    %v670 = vsel %vm400, %v651, 0
    %v672 = vsel %vm400, %v653, 0
    %v674 = vsel %vm400, %v655, 0
    %v676 = vsel %vm400, %v657, 0
    %v678 = vsel %vm400, %v659, 0
    %v680 = vsel %vm400, %v661, 0
    %v682 = vsel %vm400, %v663, 0
    %684 = vmatpush.xpose.msra.mxu0 0.0
    %685 = vmatpush.xpose.msra.mxu0 0.0
    %686 = vmatpush.xpose.msra.mxu0 0.0
    %687 = vmatpush.xpose.msra.mxu0 0.0
    %688 = vmatpush.xpose.msra.mxu0 0.0
    %689 = vmatpush.xpose.msra.mxu0 0.0
    %690 = vmatpush.xpose.msra.mxu0 0.0
    %691 = vmatpush.xpose.msra.mxu0 0.0
    %692 = vmatpush.xpose.msra.mxu0 0.0
    %693 = vmatpush.xpose.msra.mxu0 0.0
    %694 = vmatpush.xpose.msra.mxu0 0.0
    %695 = vmatpush.xpose.msra.mxu0 %v682
    %696 = vmatpush.xpose.msra.mxu0 %v680
    %697 = vmatpush.xpose.msra.mxu0 %v678
    %698 = vmatpush.xpose.msra.mxu0 %v676
    %699 = vmatpush.xpose.msra.mxu0 %v674
    %700 = vmatmul.f32.gmra.mxu0 %v664
    %v701 = vpop.f32.mrf.mxu0
    %v702 = vadd.f32 %v188, %v701
    %703 = vmatmul.f32.gmra.mxu0 %v666
    %v704 = vpop.f32.mrf.mxu0
    %v705 = vadd.f32 %v189, %v704
    %706 = vmatmul.f32.gmra.mxu0 %v668
    %v707 = vpop.f32.mrf.mxu0
    %v708 = vadd.f32 %v190, %v707
    %709 = vmatmul.f32.gmra.mxu0 %v670
    %v710 = vpop.f32.mrf.mxu0
    %v711 = vadd.f32 %v191, %v710
    %712 = vmatmul.f32.gmra.mxu0 %v672
    %v713 = vpop.f32.mrf.mxu0
    %v714 = vadd.f32 %v192, %v713
    %715 = vdwg.mxu0
    %v716 = vsel %vm458, %v702, -inf
    %717 = vmax.xlane.f32.xlu0 %v716
    %v718 = vpop.xlane.xlu0 %717
    %v719 = vsel %vm458, %v705, -inf
    %720 = vmax.xlane.f32.xlu0 %v719
    %v721 = vpop.xlane.xlu0 %720
    %v722 = vsel %vm458, %v708, -inf
    %723 = vmax.xlane.f32.xlu0 %v722
    %v724 = vpop.xlane.xlu0 %723
    %v725 = vsel %vm458, %v711, -inf
    %726 = vmax.xlane.f32.xlu0 %v725
    %v727 = vpop.xlane.xlu0 %726
    %v728 = vsel %vm471, %v714, -inf
    %729 = vmax.xlane.f32.xlu0 %v728
    %v730 = vpop.xlane.xlu0 %729
    %v731 = vsub.f32 %v702, %v718
    %v732 = vsub.f32 %v705, %v721
    %v733 = vsub.f32 %v708, %v724
    %v734 = vsub.f32 %v711, %v727
    %v735 = vsub.f32 %v714, %v730
    %v736 = vmul.f32 %v731, 1.442695
    %v737 = vpow.pop %v736
    %v738 = vmul.f32 %v732, 1.442695
    %v739 = vpow.pop %v738
    %v740 = vmul.f32 %v733, 1.442695
    %v741 = vpow.pop %v740
    %v742 = vmul.f32 %v734, 1.442695
    %v743 = vpow.pop %v742
    %v744 = vmul.f32 %v735, 1.442695
    %v745 = vpow.pop %v744
    %v746 = vsel %vm458, %v737, 0.0
    %747 = vadd.xlane.f32.xlu0 %v746
    %v748 = vpop.xlane.xlu0 %747
    %v749 = vsel %vm458, %v739, 0.0
    %750 = vadd.xlane.f32.xlu0 %v749
    %v751 = vpop.xlane.xlu0 %750
    %v752 = vsel %vm458, %v741, 0.0
    %753 = vadd.xlane.f32.xlu0 %v752
    %v754 = vpop.xlane.xlu0 %753
    %v755 = vsel %vm458, %v743, 0.0
    %756 = vadd.xlane.f32.xlu0 %v755
    %v757 = vpop.xlane.xlu0 %756
    %v758 = vsel %vm471, %v745, 0.0
    %759 = vadd.xlane.f32.xlu0 %v758
    %v760 = vpop.xlane.xlu0 %759
    %v761 = vrcp.pop %v748
    %v762 = vmul.f32 %v748, %v761
    %v763 = vsub.f32 1.0, %v762
    %v764 = vmul.f32 %v761, %v763
    %v765 = vadd.f32 %v761, %v764
    %vm766 = vweird.f32 %v748
    %vm767 = vweird.f32 %v761
    %vm768 = vmor %vm766, %vm767
    %v769 = vsel %vm768, %v761, %v765
    %v770 = vand.u32 2147483647, %v748
    %vm771 = vcmp.eq.f32.partialorder %v770, 8.507059e+37
    %v772 = vand.u32 %v748, 2147483648
    %v773 = vor.u32 1.1754944e-38, %v772
    %v774 = vsel %vm771, %v773, %v769
    %v775 = vrcp.pop %v751
    %v776 = vmul.f32 %v751, %v775
    %v777 = vsub.f32 1.0, %v776
    %v778 = vmul.f32 %v775, %v777
    %v779 = vadd.f32 %v775, %v778
    %vm780 = vweird.f32 %v751
    %vm781 = vweird.f32 %v775
    %vm782 = vmor %vm780, %vm781
    %v783 = vsel %vm782, %v775, %v779
    %v784 = vand.u32 2147483647, %v751
    %vm785 = vcmp.eq.f32.partialorder %v784, 8.507059e+37
    %v786 = vand.u32 %v751, 2147483648
    %v787 = vor.u32 1.1754944e-38, %v786
    %v788 = vsel %vm785, %v787, %v783
    %v789 = vrcp.pop %v754
    %v790 = vmul.f32 %v754, %v789
    %v791 = vsub.f32 1.0, %v790
    %v792 = vmul.f32 %v789, %v791
    %v793 = vadd.f32 %v789, %v792
    %vm794 = vweird.f32 %v754
    %vm795 = vweird.f32 %v789
    %vm796 = vmor %vm794, %vm795
    %v797 = vsel %vm796, %v789, %v793
    %v798 = vand.u32 2147483647, %v754
    %vm799 = vcmp.eq.f32.partialorder %v798, 8.507059e+37
    %v800 = vand.u32 %v754, 2147483648
    %v801 = vor.u32 1.1754944e-38, %v800
    %v802 = vsel %vm799, %v801, %v797
    %v803 = vrcp.pop %v757
    %v804 = vmul.f32 %v757, %v803
    %v805 = vsub.f32 1.0, %v804
    %v806 = vmul.f32 %v803, %v805
    %v807 = vadd.f32 %v803, %v806
    %vm808 = vweird.f32 %v757
    %vm809 = vweird.f32 %v803
    %vm810 = vmor %vm808, %vm809
    %v811 = vsel %vm810, %v803, %v807
    %v812 = vand.u32 2147483647, %v757
    %vm813 = vcmp.eq.f32.partialorder %v812, 8.507059e+37
    %v814 = vand.u32 %v757, 2147483648
    %v815 = vor.u32 1.1754944e-38, %v814
    %v816 = vsel %vm813, %v815, %v811
    %v817 = vrcp.pop %v760
    %v818 = vmul.f32 %v760, %v817
    %v819 = vsub.f32 1.0, %v818
    %v820 = vmul.f32 %v817, %v819
    %v821 = vadd.f32 %v817, %v820
    %vm822 = vweird.f32 %v760
    %vm823 = vweird.f32 %v817
    %vm824 = vmor %vm822, %vm823
    %v825 = vsel %vm824, %v817, %v821
    %v826 = vand.u32 2147483647, %v760
    %vm827 = vcmp.eq.f32.partialorder %v826, 8.507059e+37
    %v828 = vand.u32 %v760, 2147483648
    %v829 = vor.u32 1.1754944e-38, %v828
    %v830 = vsel %vm827, %v829, %v825
    %v831 = vmul.f32 %v737, %v774
    %v832 = vmul.f32 %v739, %v788
    %v833 = vmul.f32 %v741, %v802
    %v834 = vmul.f32 %v743, %v816
    %v835 = vmul.f32 %v745, %v830
    %836 = vrot.lane.b32.xlu0 %v362, 56
    %v837 = vpop.permute.xlu0 %836
    %838 = vrot.lane.b32.xlu0 %v365, 56
    %v839 = vpop.permute.xlu0 %838
    %840 = vrot.lane.b32.xlu0 %v368, 56
    %v841 = vpop.permute.xlu0 %840
    %842 = vrot.lane.b32.xlu0 %v371, 56
    %v843 = vpop.permute.xlu0 %842
    %844 = vrot.lane.b32.xlu0 %v374, 56
    %v845 = vpop.permute.xlu0 %844
    %v851 = vsel %vm458, %v831, 0
    %v854 = vsel %vm458, %v832, 0
    %v857 = vsel %vm458, %v833, 0
    %v860 = vsel %vm458, %v834, 0
    %v863 = vsel %vm458, %v835, 0
    %v865 = vsel %vm609, %v845, 0
    %867 = vmatpush.msra.mxu0 0.0
    %868 = vmatpush.msra.mxu0 0.0
    %869 = vmatpush.msra.mxu0 0.0
    %870 = vmatpush.msra.mxu0 0.0
    %871 = vmatpush.msra.mxu0 0.0
    %872 = vmatpush.msra.mxu0 0.0
    %873 = vmatpush.msra.mxu0 0.0
    %874 = vmatpush.msra.mxu0 0.0
    %875 = vmatpush.msra.mxu0 0.0
    %876 = vmatpush.msra.mxu0 0.0
    %877 = vmatpush.msra.mxu0 0.0
    %878 = vmatpush.msra.mxu0 %v865
    %879 = vmatpush.msra.mxu0 %v843
    %880 = vmatpush.msra.mxu0 %v841
    %881 = vmatpush.msra.mxu0 %v839
    %882 = vmatpush.msra.mxu0 %v837
    %883 = vmatmul.f32.gmra.mxu0 %v851
    %v884 = vpop.f32.mrf.mxu0
    %v885 = vadd.f32 0.0, %v884
    %886 = vmatmul.f32.gmra.mxu0 %v854
    %v887 = vpop.f32.mrf.mxu0
    %v888 = vadd.f32 0.0, %v887
    %889 = vmatmul.f32.gmra.mxu0 %v857
    %v890 = vpop.f32.mrf.mxu0
    %v891 = vadd.f32 0.0, %v890
    %892 = vmatmul.f32.gmra.mxu0 %v860
    %v893 = vpop.f32.mrf.mxu0
    %v894 = vadd.f32 0.0, %v893
    %895 = vmatmul.f32.gmra.mxu0 %v863
    %v896 = vpop.f32.mrf.mxu0
    %v897 = vadd.f32 0.0, %v896
    %898 = vdwg.mxu0
    %v900 = vsel %vm400, %v885, 0
    %v903 = vsel %vm400, %v888, 0
    %v906 = vsel %vm400, %v891, 0
    %v909 = vsel %vm400, %v894, 0
    %v912 = vsel %vm400, %v897, 0
    %914 = vmatpush.msra.mxu0 0.0
    %915 = vmatpush.msra.mxu0 0.0
    %916 = vmatpush.msra.mxu0 0.0
    %917 = vmatpush.msra.mxu0 0.0
    %918 = vmatpush.msra.mxu0 0.0
    %919 = vmatpush.msra.mxu0 0.0
    %920 = vmatpush.msra.mxu0 0.0
    %921 = vmatpush.msra.mxu0 0.0
    %922 = vmatpush.msra.mxu0 0.0
    %923 = vmatpush.msra.mxu0 0.0
    %924 = vmatpush.msra.mxu0 0.0
    %925 = vmatpush.msra.mxu0 0.0
    %926 = vmatpush.msra.mxu0 0.0
    %927 = vmatpush.msra.mxu0 0.0
    %928 = vmatpush.msra.mxu0 0.0
    %929 = vmatpush.msra.mxu0 %v382
    %930 = vmatmul.f32.gmra.mxu0 %v900
    %v931 = vpop.f32.mrf.mxu0
    %v932 = vadd.f32 0.0, %v931
    %933 = vmatmul.f32.gmra.mxu0 %v903
    %v934 = vpop.f32.mrf.mxu0
    %v935 = vadd.f32 0.0, %v934
    %936 = vmatmul.f32.gmra.mxu0 %v906
    %v937 = vpop.f32.mrf.mxu0
    %v938 = vadd.f32 0.0, %v937
    %939 = vmatmul.f32.gmra.mxu0 %v909
    %v940 = vpop.f32.mrf.mxu0
    %v941 = vadd.f32 0.0, %v940
    %942 = vmatmul.f32.gmra.mxu0 %v912
    %v943 = vpop.f32.mrf.mxu0
    %v944 = vadd.f32 0.0, %v943
    %945 = vdwg.mxu0
    %v947 = vsel %vm400, %v630, 0
    %v950 = vsel %vm400, %v633, 0
    %v953 = vsel %vm400, %v636, 0
    %v956 = vsel %vm400, %v639, 0
    %v959 = vsel %vm400, %v642, 0
    %961 = vmatpush.msra.mxu0 0.0
    %962 = vmatpush.msra.mxu0 0.0
    %963 = vmatpush.msra.mxu0 0.0
    %964 = vmatpush.msra.mxu0 0.0
    %965 = vmatpush.msra.mxu0 0.0
    %966 = vmatpush.msra.mxu0 0.0
    %967 = vmatpush.msra.mxu0 0.0
    %968 = vmatpush.msra.mxu0 0.0
    %969 = vmatpush.msra.mxu0 0.0
    %970 = vmatpush.msra.mxu0 0.0
    %971 = vmatpush.msra.mxu0 0.0
    %972 = vmatpush.msra.mxu0 0.0
    %973 = vmatpush.msra.mxu0 0.0
    %974 = vmatpush.msra.mxu0 0.0
    %975 = vmatpush.msra.mxu0 0.0
    %976 = vmatpush.msra.mxu0 %v381
    %977 = vmatmul.f32.gmra.mxu0 %v947
    %v978 = vpop.f32.mrf.mxu0
    %v979 = vadd.f32 %v932, %v978
    %980 = vmatmul.f32.gmra.mxu0 %v950
    %v981 = vpop.f32.mrf.mxu0
    %v982 = vadd.f32 %v935, %v981
    %983 = vmatmul.f32.gmra.mxu0 %v953
    %v984 = vpop.f32.mrf.mxu0
    %v985 = vadd.f32 %v938, %v984
    %986 = vmatmul.f32.gmra.mxu0 %v956
    %v987 = vpop.f32.mrf.mxu0
    %v988 = vadd.f32 %v941, %v987
    %989 = vmatmul.f32.gmra.mxu0 %v959
    %v990 = vpop.f32.mrf.mxu0
    %v991 = vadd.f32 %v944, %v990
    %992 = vdwg.mxu0
    %993 = vrot.lane.b32.xlu0 %v376, 112
    %v994 = vpop.permute.xlu0 %993
    %995 = vrot.lane.b32.xlu0 %v377, 112
    %v996 = vpop.permute.xlu0 %995
    %997 = vrot.lane.b32.xlu0 %v378, 112
    %v998 = vpop.permute.xlu0 %997
    %999 = vrot.lane.b32.xlu0 %v379, 112
    %v1000 = vpop.permute.xlu0 %999
    %1001 = vrot.lane.b32.xlu0 %v380, 112
    %v1002 = vpop.permute.xlu0 %1001
    %1003 = vrot.lane.b32.xlu0 %v362, 80
    %v1004 = vpop.permute.xlu0 %1003
    %1005 = vrot.lane.b32.xlu0 %v365, 80
    %v1006 = vpop.permute.xlu0 %1005
    %1007 = vrot.lane.b32.xlu0 %v368, 80
    %v1008 = vpop.permute.xlu0 %1007
    %1009 = vrot.lane.b32.xlu0 %v371, 80
    %v1010 = vpop.permute.xlu0 %1009
    %1011 = vrot.lane.b32.xlu0 %v374, 80
    %v1012 = vpop.permute.xlu0 %1011
    %v1013 = vsel %vm400, %v994, 0
    %v1015 = vsel %vm400, %v996, 0
    %v1017 = vsel %vm400, %v998, 0
    %v1019 = vsel %vm400, %v1000, 0
    %v1021 = vsel %vm400, %v1002, 0
    %v1023 = vsel %vm400, %v1004, 0
    %v1025 = vsel %vm400, %v1006, 0
    %v1027 = vsel %vm400, %v1008, 0
    %v1029 = vsel %vm400, %v1010, 0
    %v1031 = vsel %vm400, %v1012, 0
    %1033 = vmatpush.xpose.msra.mxu0 0.0
    %1034 = vmatpush.xpose.msra.mxu0 0.0
    %1035 = vmatpush.xpose.msra.mxu0 0.0
    %1036 = vmatpush.xpose.msra.mxu0 0.0
    %1037 = vmatpush.xpose.msra.mxu0 0.0
    %1038 = vmatpush.xpose.msra.mxu0 0.0
    %1039 = vmatpush.xpose.msra.mxu0 0.0
    %1040 = vmatpush.xpose.msra.mxu0 0.0
    %1041 = vmatpush.xpose.msra.mxu0 0.0
    %1042 = vmatpush.xpose.msra.mxu0 0.0
    %1043 = vmatpush.xpose.msra.mxu0 0.0
    %1044 = vmatpush.xpose.msra.mxu0 %v1031
    %1045 = vmatpush.xpose.msra.mxu0 %v1029
    %1046 = vmatpush.xpose.msra.mxu0 %v1027
    %1047 = vmatpush.xpose.msra.mxu0 %v1025
    %1048 = vmatpush.xpose.msra.mxu0 %v1023
    %1049 = vmatmul.f32.gmra.mxu0 %v1013
    %v1050 = vpop.f32.mrf.mxu0
    %v1051 = vadd.f32 %v188, %v1050
    %1052 = vmatmul.f32.gmra.mxu0 %v1015
    %v1053 = vpop.f32.mrf.mxu0
    %v1054 = vadd.f32 %v189, %v1053
    %1055 = vmatmul.f32.gmra.mxu0 %v1017
    %v1056 = vpop.f32.mrf.mxu0
    %v1057 = vadd.f32 %v190, %v1056
    %1058 = vmatmul.f32.gmra.mxu0 %v1019
    %v1059 = vpop.f32.mrf.mxu0
    %v1060 = vadd.f32 %v191, %v1059
    %1061 = vmatmul.f32.gmra.mxu0 %v1021
    %v1062 = vpop.f32.mrf.mxu0
    %v1063 = vadd.f32 %v192, %v1062
    %1064 = vdwg.mxu0
    %v1065 = vsel %vm458, %v1051, -inf
    %1066 = vmax.xlane.f32.xlu0 %v1065
    %v1067 = vpop.xlane.xlu0 %1066
    %v1068 = vsel %vm458, %v1054, -inf
    %1069 = vmax.xlane.f32.xlu0 %v1068
    %v1070 = vpop.xlane.xlu0 %1069
    %v1071 = vsel %vm458, %v1057, -inf
    %1072 = vmax.xlane.f32.xlu0 %v1071
    %v1073 = vpop.xlane.xlu0 %1072
    %v1074 = vsel %vm458, %v1060, -inf
    %1075 = vmax.xlane.f32.xlu0 %v1074
    %v1076 = vpop.xlane.xlu0 %1075
    %v1077 = vsel %vm471, %v1063, -inf
    %1078 = vmax.xlane.f32.xlu0 %v1077
    %v1079 = vpop.xlane.xlu0 %1078
    %v1080 = vsub.f32 %v1051, %v1067
    %v1081 = vsub.f32 %v1054, %v1070
    %v1082 = vsub.f32 %v1057, %v1073
    %v1083 = vsub.f32 %v1060, %v1076
    %v1084 = vsub.f32 %v1063, %v1079
    %v1085 = vmul.f32 %v1080, 1.442695
    %v1086 = vpow.pop %v1085
    %v1087 = vmul.f32 %v1081, 1.442695
    %v1088 = vpow.pop %v1087
    %v1089 = vmul.f32 %v1082, 1.442695
    %v1090 = vpow.pop %v1089
    %v1091 = vmul.f32 %v1083, 1.442695
    %v1092 = vpow.pop %v1091
    %v1093 = vmul.f32 %v1084, 1.442695
    %v1094 = vpow.pop %v1093
    %v1095 = vsel %vm458, %v1086, 0.0
    %1096 = vadd.xlane.f32.xlu0 %v1095
    %v1097 = vpop.xlane.xlu0 %1096
    %v1098 = vsel %vm458, %v1088, 0.0
    %1099 = vadd.xlane.f32.xlu0 %v1098
    %v1100 = vpop.xlane.xlu0 %1099
    %v1101 = vsel %vm458, %v1090, 0.0
    %1102 = vadd.xlane.f32.xlu0 %v1101
    %v1103 = vpop.xlane.xlu0 %1102
    %v1104 = vsel %vm458, %v1092, 0.0
    %1105 = vadd.xlane.f32.xlu0 %v1104
    %v1106 = vpop.xlane.xlu0 %1105
    %v1107 = vsel %vm471, %v1094, 0.0
    %1108 = vadd.xlane.f32.xlu0 %v1107
    %v1109 = vpop.xlane.xlu0 %1108
    %v1110 = vrcp.pop %v1097
    %v1111 = vmul.f32 %v1097, %v1110
    %v1112 = vsub.f32 1.0, %v1111
    %v1113 = vmul.f32 %v1110, %v1112
    %v1114 = vadd.f32 %v1110, %v1113
    %vm1115 = vweird.f32 %v1097
    %vm1116 = vweird.f32 %v1110
    %vm1117 = vmor %vm1115, %vm1116
    %v1118 = vsel %vm1117, %v1110, %v1114
    %v1119 = vand.u32 2147483647, %v1097
    %vm1120 = vcmp.eq.f32.partialorder %v1119, 8.507059e+37
    %v1121 = vand.u32 %v1097, 2147483648
    %v1122 = vor.u32 1.1754944e-38, %v1121
    %v1123 = vsel %vm1120, %v1122, %v1118
    %v1124 = vrcp.pop %v1100
    %v1125 = vmul.f32 %v1100, %v1124
    %v1126 = vsub.f32 1.0, %v1125
    %v1127 = vmul.f32 %v1124, %v1126
    %v1128 = vadd.f32 %v1124, %v1127
    %vm1129 = vweird.f32 %v1100
    %vm1130 = vweird.f32 %v1124
    %vm1131 = vmor %vm1129, %vm1130
    %v1132 = vsel %vm1131, %v1124, %v1128
    %v1133 = vand.u32 2147483647, %v1100
    %vm1134 = vcmp.eq.f32.partialorder %v1133, 8.507059e+37
    %v1135 = vand.u32 %v1100, 2147483648
    %v1136 = vor.u32 1.1754944e-38, %v1135
    %v1137 = vsel %vm1134, %v1136, %v1132
    %v1138 = vrcp.pop %v1103
    %v1139 = vmul.f32 %v1103, %v1138
    %v1140 = vsub.f32 1.0, %v1139
    %v1141 = vmul.f32 %v1138, %v1140
    %v1142 = vadd.f32 %v1138, %v1141
    %vm1143 = vweird.f32 %v1103
    %vm1144 = vweird.f32 %v1138
    %vm1145 = vmor %vm1143, %vm1144
    %v1146 = vsel %vm1145, %v1138, %v1142
    %v1147 = vand.u32 2147483647, %v1103
    %vm1148 = vcmp.eq.f32.partialorder %v1147, 8.507059e+37
    %v1149 = vand.u32 %v1103, 2147483648
    %v1150 = vor.u32 1.1754944e-38, %v1149
    %v1151 = vsel %vm1148, %v1150, %v1146
    %v1152 = vrcp.pop %v1106
    %v1153 = vmul.f32 %v1106, %v1152
    %v1154 = vsub.f32 1.0, %v1153
    %v1155 = vmul.f32 %v1152, %v1154
    %v1156 = vadd.f32 %v1152, %v1155
    %vm1157 = vweird.f32 %v1106
    %vm1158 = vweird.f32 %v1152
    %vm1159 = vmor %vm1157, %vm1158
    %v1160 = vsel %vm1159, %v1152, %v1156
    %v1161 = vand.u32 2147483647, %v1106
    %vm1162 = vcmp.eq.f32.partialorder %v1161, 8.507059e+37
    %v1163 = vand.u32 %v1106, 2147483648
    %v1164 = vor.u32 1.1754944e-38, %v1163
    %v1165 = vsel %vm1162, %v1164, %v1160
    %v1166 = vrcp.pop %v1109
    %v1167 = vmul.f32 %v1109, %v1166
    %v1168 = vsub.f32 1.0, %v1167
    %v1169 = vmul.f32 %v1166, %v1168
    %v1170 = vadd.f32 %v1166, %v1169
    %vm1171 = vweird.f32 %v1109
    %vm1172 = vweird.f32 %v1166
    %vm1173 = vmor %vm1171, %vm1172
    %v1174 = vsel %vm1173, %v1166, %v1170
    %v1175 = vand.u32 2147483647, %v1109
    %vm1176 = vcmp.eq.f32.partialorder %v1175, 8.507059e+37
    %v1177 = vand.u32 %v1109, 2147483648
    %v1178 = vor.u32 1.1754944e-38, %v1177
    %v1179 = vsel %vm1176, %v1178, %v1174
    %v1180 = vmul.f32 %v1086, %v1123
    %v1181 = vmul.f32 %v1088, %v1137
    %v1182 = vmul.f32 %v1090, %v1151
    %v1183 = vmul.f32 %v1092, %v1165
    %v1184 = vmul.f32 %v1094, %v1179
    %1185 = vrot.lane.b32.xlu0 %v362, 48
    %v1186 = vpop.permute.xlu0 %1185
    %1187 = vrot.lane.b32.xlu0 %v365, 48
    %v1188 = vpop.permute.xlu0 %1187
    %1189 = vrot.lane.b32.xlu0 %v368, 48
    %v1190 = vpop.permute.xlu0 %1189
    %1191 = vrot.lane.b32.xlu0 %v371, 48
    %v1192 = vpop.permute.xlu0 %1191
    %1193 = vrot.lane.b32.xlu0 %v374, 48
    %v1194 = vpop.permute.xlu0 %1193
    %v1200 = vsel %vm458, %v1180, 0
    %v1203 = vsel %vm458, %v1181, 0
    %v1206 = vsel %vm458, %v1182, 0
    %v1209 = vsel %vm458, %v1183, 0
    %v1212 = vsel %vm458, %v1184, 0
    %v1214 = vsel %vm609, %v1194, 0
    %1216 = vmatpush.msra.mxu0 0.0
    %1217 = vmatpush.msra.mxu0 0.0
    %1218 = vmatpush.msra.mxu0 0.0
    %1219 = vmatpush.msra.mxu0 0.0
    %1220 = vmatpush.msra.mxu0 0.0
    %1221 = vmatpush.msra.mxu0 0.0
    %1222 = vmatpush.msra.mxu0 0.0
    %1223 = vmatpush.msra.mxu0 0.0
    %1224 = vmatpush.msra.mxu0 0.0
    %1225 = vmatpush.msra.mxu0 0.0
    %1226 = vmatpush.msra.mxu0 0.0
    %1227 = vmatpush.msra.mxu0 %v1214
    %1228 = vmatpush.msra.mxu0 %v1192
    %1229 = vmatpush.msra.mxu0 %v1190
    %1230 = vmatpush.msra.mxu0 %v1188
    %1231 = vmatpush.msra.mxu0 %v1186
    %1232 = vmatmul.f32.gmra.mxu0 %v1200
    %v1233 = vpop.f32.mrf.mxu0
    %v1234 = vadd.f32 0.0, %v1233
    %1235 = vmatmul.f32.gmra.mxu0 %v1203
    %v1236 = vpop.f32.mrf.mxu0
    %v1237 = vadd.f32 0.0, %v1236
    %1238 = vmatmul.f32.gmra.mxu0 %v1206
    %v1239 = vpop.f32.mrf.mxu0
    %v1240 = vadd.f32 0.0, %v1239
    %1241 = vmatmul.f32.gmra.mxu0 %v1209
    %v1242 = vpop.f32.mrf.mxu0
    %v1243 = vadd.f32 0.0, %v1242
    %1244 = vmatmul.f32.gmra.mxu0 %v1212
    %v1245 = vpop.f32.mrf.mxu0
    %v1246 = vadd.f32 0.0, %v1245
    %1247 = vdwg.mxu0
    %v1249 = vsel %vm400, %v1234, 0
    %v1252 = vsel %vm400, %v1237, 0
    %v1255 = vsel %vm400, %v1240, 0
    %v1258 = vsel %vm400, %v1243, 0
    %v1261 = vsel %vm400, %v1246, 0
    %1263 = vmatpush.msra.mxu0 0.0
    %1264 = vmatpush.msra.mxu0 0.0
    %1265 = vmatpush.msra.mxu0 0.0
    %1266 = vmatpush.msra.mxu0 0.0
    %1267 = vmatpush.msra.mxu0 0.0
    %1268 = vmatpush.msra.mxu0 0.0
    %1269 = vmatpush.msra.mxu0 0.0
    %1270 = vmatpush.msra.mxu0 0.0
    %1271 = vmatpush.msra.mxu0 0.0
    %1272 = vmatpush.msra.mxu0 0.0
    %1273 = vmatpush.msra.mxu0 0.0
    %1274 = vmatpush.msra.mxu0 0.0
    %1275 = vmatpush.msra.mxu0 0.0
    %1276 = vmatpush.msra.mxu0 0.0
    %1277 = vmatpush.msra.mxu0 0.0
    %1278 = vmatpush.msra.mxu0 %v383
    %1279 = vmatmul.f32.gmra.mxu0 %v1249
    %v1280 = vpop.f32.mrf.mxu0
    %v1281 = vadd.f32 0.0, %v1280
    %1282 = vmatmul.f32.gmra.mxu0 %v1252
    %v1283 = vpop.f32.mrf.mxu0
    %v1284 = vadd.f32 0.0, %v1283
    %1285 = vmatmul.f32.gmra.mxu0 %v1255
    %v1286 = vpop.f32.mrf.mxu0
    %v1287 = vadd.f32 0.0, %v1286
    %1288 = vmatmul.f32.gmra.mxu0 %v1258
    %v1289 = vpop.f32.mrf.mxu0
    %v1290 = vadd.f32 0.0, %v1289
    %1291 = vmatmul.f32.gmra.mxu0 %v1261
    %v1292 = vpop.f32.mrf.mxu0
    %v1293 = vadd.f32 0.0, %v1292
    %1294 = vdwg.mxu0
    %v1295 = vadd.f32 %v979, %v1281
    %v1296 = vadd.f32 %v982, %v1284
    %v1297 = vadd.f32 %v985, %v1287
    %v1298 = vadd.f32 %v988, %v1290
    %v1299 = vadd.f32 %v991, %v1293
    %1300 = vrot.lane.b32.xlu0 %v376, 104
    %v1301 = vpop.permute.xlu0 %1300
    %1302 = vrot.lane.b32.xlu0 %v377, 104
    %v1303 = vpop.permute.xlu0 %1302
    %1304 = vrot.lane.b32.xlu0 %v378, 104
    %v1305 = vpop.permute.xlu0 %1304
    %1306 = vrot.lane.b32.xlu0 %v379, 104
    %v1307 = vpop.permute.xlu0 %1306
    %1308 = vrot.lane.b32.xlu0 %v380, 104
    %v1309 = vpop.permute.xlu0 %1308
    %1310 = vrot.lane.b32.xlu0 %v362, 72
    %v1311 = vpop.permute.xlu0 %1310
    %1312 = vrot.lane.b32.xlu0 %v365, 72
    %v1313 = vpop.permute.xlu0 %1312
    %1314 = vrot.lane.b32.xlu0 %v368, 72
    %v1315 = vpop.permute.xlu0 %1314
    %1316 = vrot.lane.b32.xlu0 %v371, 72
    %v1317 = vpop.permute.xlu0 %1316
    %1318 = vrot.lane.b32.xlu0 %v374, 72
    %v1319 = vpop.permute.xlu0 %1318
    %v1320 = vsel %vm400, %v1301, 0
    %v1322 = vsel %vm400, %v1303, 0
    %v1324 = vsel %vm400, %v1305, 0
    %v1326 = vsel %vm400, %v1307, 0
    %v1328 = vsel %vm400, %v1309, 0
    %v1330 = vsel %vm400, %v1311, 0
    %v1332 = vsel %vm400, %v1313, 0
    %v1334 = vsel %vm400, %v1315, 0
    %v1336 = vsel %vm400, %v1317, 0
    %v1338 = vsel %vm400, %v1319, 0
    %1340 = vmatpush.xpose.msra.mxu0 0.0
    %1341 = vmatpush.xpose.msra.mxu0 0.0
    %1342 = vmatpush.xpose.msra.mxu0 0.0
    %1343 = vmatpush.xpose.msra.mxu0 0.0
    %1344 = vmatpush.xpose.msra.mxu0 0.0
    %1345 = vmatpush.xpose.msra.mxu0 0.0
    %1346 = vmatpush.xpose.msra.mxu0 0.0
    %1347 = vmatpush.xpose.msra.mxu0 0.0
    %1348 = vmatpush.xpose.msra.mxu0 0.0
    %1349 = vmatpush.xpose.msra.mxu0 0.0
    %1350 = vmatpush.xpose.msra.mxu0 0.0
    %1351 = vmatpush.xpose.msra.mxu0 %v1338
    %1352 = vmatpush.xpose.msra.mxu0 %v1336
    %1353 = vmatpush.xpose.msra.mxu0 %v1334
    %1354 = vmatpush.xpose.msra.mxu0 %v1332
    %1355 = vmatpush.xpose.msra.mxu0 %v1330
    %1356 = vmatmul.f32.gmra.mxu0 %v1320
    %v1357 = vpop.f32.mrf.mxu0
    %v1358 = vadd.f32 %v188, %v1357
    %1359 = vmatmul.f32.gmra.mxu0 %v1322
    %v1360 = vpop.f32.mrf.mxu0
    %v1361 = vadd.f32 %v189, %v1360
    %1362 = vmatmul.f32.gmra.mxu0 %v1324
    %v1363 = vpop.f32.mrf.mxu0
    %v1364 = vadd.f32 %v190, %v1363
    %1365 = vmatmul.f32.gmra.mxu0 %v1326
    %v1366 = vpop.f32.mrf.mxu0
    %v1367 = vadd.f32 %v191, %v1366
    %1368 = vmatmul.f32.gmra.mxu0 %v1328
    %v1369 = vpop.f32.mrf.mxu0
    %v1370 = vadd.f32 %v192, %v1369
    %1371 = vdwg.mxu0
    %v1372 = vsel %vm458, %v1358, -inf
    %1373 = vmax.xlane.f32.xlu0 %v1372
    %v1374 = vpop.xlane.xlu0 %1373
    %v1375 = vsel %vm458, %v1361, -inf
    %1376 = vmax.xlane.f32.xlu0 %v1375
    %v1377 = vpop.xlane.xlu0 %1376
    %v1378 = vsel %vm458, %v1364, -inf
    %1379 = vmax.xlane.f32.xlu0 %v1378
    %v1380 = vpop.xlane.xlu0 %1379
    %v1381 = vsel %vm458, %v1367, -inf
    %1382 = vmax.xlane.f32.xlu0 %v1381
    %v1383 = vpop.xlane.xlu0 %1382
    %v1384 = vsel %vm471, %v1370, -inf
    %1385 = vmax.xlane.f32.xlu0 %v1384
    %v1386 = vpop.xlane.xlu0 %1385
    %v1387 = vsub.f32 %v1358, %v1374
    %v1388 = vsub.f32 %v1361, %v1377
    %v1389 = vsub.f32 %v1364, %v1380
    %v1390 = vsub.f32 %v1367, %v1383
    %v1391 = vsub.f32 %v1370, %v1386
    %v1392 = vmul.f32 %v1387, 1.442695
    %v1393 = vpow.pop %v1392
    %v1394 = vmul.f32 %v1388, 1.442695
    %v1395 = vpow.pop %v1394
    %v1396 = vmul.f32 %v1389, 1.442695
    %v1397 = vpow.pop %v1396
    %v1398 = vmul.f32 %v1390, 1.442695
    %v1399 = vpow.pop %v1398
    %v1400 = vmul.f32 %v1391, 1.442695
    %v1401 = vpow.pop %v1400
    %v1402 = vsel %vm458, %v1393, 0.0
    %1403 = vadd.xlane.f32.xlu0 %v1402
    %v1404 = vpop.xlane.xlu0 %1403
    %v1405 = vsel %vm458, %v1395, 0.0
    %1406 = vadd.xlane.f32.xlu0 %v1405
    %v1407 = vpop.xlane.xlu0 %1406
    %v1408 = vsel %vm458, %v1397, 0.0
    %1409 = vadd.xlane.f32.xlu0 %v1408
    %v1410 = vpop.xlane.xlu0 %1409
    %v1411 = vsel %vm458, %v1399, 0.0
    %1412 = vadd.xlane.f32.xlu0 %v1411
    %v1413 = vpop.xlane.xlu0 %1412
    %v1414 = vsel %vm471, %v1401, 0.0
    %1415 = vadd.xlane.f32.xlu0 %v1414
    %v1416 = vpop.xlane.xlu0 %1415
    %v1417 = vrcp.pop %v1404
    %v1418 = vmul.f32 %v1404, %v1417
    %v1419 = vsub.f32 1.0, %v1418
    %v1420 = vmul.f32 %v1417, %v1419
    %v1421 = vadd.f32 %v1417, %v1420
    %vm1422 = vweird.f32 %v1404
    %vm1423 = vweird.f32 %v1417
    %vm1424 = vmor %vm1422, %vm1423
    %v1425 = vsel %vm1424, %v1417, %v1421
    %v1426 = vand.u32 2147483647, %v1404
    %vm1427 = vcmp.eq.f32.partialorder %v1426, 8.507059e+37
    %v1428 = vand.u32 %v1404, 2147483648
    %v1429 = vor.u32 1.1754944e-38, %v1428
    %v1430 = vsel %vm1427, %v1429, %v1425
    %v1431 = vrcp.pop %v1407
    %v1432 = vmul.f32 %v1407, %v1431
    %v1433 = vsub.f32 1.0, %v1432
    %v1434 = vmul.f32 %v1431, %v1433
    %v1435 = vadd.f32 %v1431, %v1434
    %vm1436 = vweird.f32 %v1407
    %vm1437 = vweird.f32 %v1431
    %vm1438 = vmor %vm1436, %vm1437
    %v1439 = vsel %vm1438, %v1431, %v1435
    %v1440 = vand.u32 2147483647, %v1407
    %vm1441 = vcmp.eq.f32.partialorder %v1440, 8.507059e+37
    %v1442 = vand.u32 %v1407, 2147483648
    %v1443 = vor.u32 1.1754944e-38, %v1442
    %v1444 = vsel %vm1441, %v1443, %v1439
    %v1445 = vrcp.pop %v1410
    %v1446 = vmul.f32 %v1410, %v1445
    %v1447 = vsub.f32 1.0, %v1446
    %v1448 = vmul.f32 %v1445, %v1447
    %v1449 = vadd.f32 %v1445, %v1448
    %vm1450 = vweird.f32 %v1410
    %vm1451 = vweird.f32 %v1445
    %vm1452 = vmor %vm1450, %vm1451
    %v1453 = vsel %vm1452, %v1445, %v1449
    %v1454 = vand.u32 2147483647, %v1410
    %vm1455 = vcmp.eq.f32.partialorder %v1454, 8.507059e+37
    %v1456 = vand.u32 %v1410, 2147483648
    %v1457 = vor.u32 1.1754944e-38, %v1456
    %v1458 = vsel %vm1455, %v1457, %v1453
    %v1459 = vrcp.pop %v1413
    %v1460 = vmul.f32 %v1413, %v1459
    %v1461 = vsub.f32 1.0, %v1460
    %v1462 = vmul.f32 %v1459, %v1461
    %v1463 = vadd.f32 %v1459, %v1462
    %vm1464 = vweird.f32 %v1413
    %vm1465 = vweird.f32 %v1459
    %vm1466 = vmor %vm1464, %vm1465
    %v1467 = vsel %vm1466, %v1459, %v1463
    %v1468 = vand.u32 2147483647, %v1413
    %vm1469 = vcmp.eq.f32.partialorder %v1468, 8.507059e+37
    %v1470 = vand.u32 %v1413, 2147483648
    %v1471 = vor.u32 1.1754944e-38, %v1470
    %v1472 = vsel %vm1469, %v1471, %v1467
    %v1473 = vrcp.pop %v1416
    %v1474 = vmul.f32 %v1416, %v1473
    %v1475 = vsub.f32 1.0, %v1474
    %v1476 = vmul.f32 %v1473, %v1475
    %v1477 = vadd.f32 %v1473, %v1476
    %vm1478 = vweird.f32 %v1416
    %vm1479 = vweird.f32 %v1473
    %vm1480 = vmor %vm1478, %vm1479
    %v1481 = vsel %vm1480, %v1473, %v1477
    %v1482 = vand.u32 2147483647, %v1416
    %vm1483 = vcmp.eq.f32.partialorder %v1482, 8.507059e+37
    %v1484 = vand.u32 %v1416, 2147483648
    %v1485 = vor.u32 1.1754944e-38, %v1484
    %v1486 = vsel %vm1483, %v1485, %v1481
    %v1487 = vmul.f32 %v1393, %v1430
    %v1488 = vmul.f32 %v1395, %v1444
    %v1489 = vmul.f32 %v1397, %v1458
    %v1490 = vmul.f32 %v1399, %v1472
    %v1491 = vmul.f32 %v1401, %v1486
    %1492 = vrot.lane.b32.xlu0 %v362, 40
    %v1493 = vpop.permute.xlu0 %1492
    %1494 = vrot.lane.b32.xlu0 %v365, 40
    %v1495 = vpop.permute.xlu0 %1494
    %1496 = vrot.lane.b32.xlu0 %v368, 40
    %v1497 = vpop.permute.xlu0 %1496
    %1498 = vrot.lane.b32.xlu0 %v371, 40
    %v1499 = vpop.permute.xlu0 %1498
    %1500 = vrot.lane.b32.xlu0 %v374, 40
    %v1501 = vpop.permute.xlu0 %1500
    %v1507 = vsel %vm458, %v1487, 0
    %v1510 = vsel %vm458, %v1488, 0
    %v1513 = vsel %vm458, %v1489, 0
    %v1516 = vsel %vm458, %v1490, 0
    %v1519 = vsel %vm458, %v1491, 0
    %v1521 = vsel %vm609, %v1501, 0
    %1523 = vmatpush.msra.mxu0 0.0
    %1524 = vmatpush.msra.mxu0 0.0
    %1525 = vmatpush.msra.mxu0 0.0
    %1526 = vmatpush.msra.mxu0 0.0
    %1527 = vmatpush.msra.mxu0 0.0
    %1528 = vmatpush.msra.mxu0 0.0
    %1529 = vmatpush.msra.mxu0 0.0
    %1530 = vmatpush.msra.mxu0 0.0
    %1531 = vmatpush.msra.mxu0 0.0
    %1532 = vmatpush.msra.mxu0 0.0
    %1533 = vmatpush.msra.mxu0 0.0
    %1534 = vmatpush.msra.mxu0 %v1521
    %1535 = vmatpush.msra.mxu0 %v1499
    %1536 = vmatpush.msra.mxu0 %v1497
    %1537 = vmatpush.msra.mxu0 %v1495
    %1538 = vmatpush.msra.mxu0 %v1493
    %1539 = vmatmul.f32.gmra.mxu0 %v1507
    %v1540 = vpop.f32.mrf.mxu0
    %v1541 = vadd.f32 0.0, %v1540
    %1542 = vmatmul.f32.gmra.mxu0 %v1510
    %v1543 = vpop.f32.mrf.mxu0
    %v1544 = vadd.f32 0.0, %v1543
    %1545 = vmatmul.f32.gmra.mxu0 %v1513
    %v1546 = vpop.f32.mrf.mxu0
    %v1547 = vadd.f32 0.0, %v1546
    %1548 = vmatmul.f32.gmra.mxu0 %v1516
    %v1549 = vpop.f32.mrf.mxu0
    %v1550 = vadd.f32 0.0, %v1549
    %1551 = vmatmul.f32.gmra.mxu0 %v1519
    %v1552 = vpop.f32.mrf.mxu0
    %v1553 = vadd.f32 0.0, %v1552
    %1554 = vdwg.mxu0
    %v1556 = vsel %vm400, %v1541, 0
    %v1559 = vsel %vm400, %v1544, 0
    %v1562 = vsel %vm400, %v1547, 0
    %v1565 = vsel %vm400, %v1550, 0
    %v1568 = vsel %vm400, %v1553, 0
    %1570 = vmatpush.msra.mxu0 0.0
    %1571 = vmatpush.msra.mxu0 0.0
    %1572 = vmatpush.msra.mxu0 0.0
    %1573 = vmatpush.msra.mxu0 0.0
    %1574 = vmatpush.msra.mxu0 0.0
    %1575 = vmatpush.msra.mxu0 0.0
    %1576 = vmatpush.msra.mxu0 0.0
    %1577 = vmatpush.msra.mxu0 0.0
    %1578 = vmatpush.msra.mxu0 0.0
    %1579 = vmatpush.msra.mxu0 0.0
    %1580 = vmatpush.msra.mxu0 0.0
    %1581 = vmatpush.msra.mxu0 0.0
    %1582 = vmatpush.msra.mxu0 0.0
    %1583 = vmatpush.msra.mxu0 0.0
    %1584 = vmatpush.msra.mxu0 0.0
    %1585 = vmatpush.msra.mxu0 %v384
    %1586 = vmatmul.f32.gmra.mxu0 %v1556
    %v1587 = vpop.f32.mrf.mxu0
    %v1588 = vadd.f32 0.0, %v1587
    %1589 = vmatmul.f32.gmra.mxu0 %v1559
    %v1590 = vpop.f32.mrf.mxu0
    %v1591 = vadd.f32 0.0, %v1590
    %1592 = vmatmul.f32.gmra.mxu0 %v1562
    %v1593 = vpop.f32.mrf.mxu0
    %v1594 = vadd.f32 0.0, %v1593
    %1595 = vmatmul.f32.gmra.mxu0 %v1565
    %v1596 = vpop.f32.mrf.mxu0
    %v1597 = vadd.f32 0.0, %v1596
    %1598 = vmatmul.f32.gmra.mxu0 %v1568
    %v1599 = vpop.f32.mrf.mxu0
    %v1600 = vadd.f32 0.0, %v1599
    %1601 = vdwg.mxu0
    %v1602 = vadd.f32 %v1295, %v1588
    %v1603 = vadd.f32 %v1296, %v1591
    %v1604 = vadd.f32 %v1297, %v1594
    %v1605 = vadd.f32 %v1298, %v1597
    %v1606 = vadd.f32 %v1299, %v1600
    %v1607 = vadd.f32 %v124, %v1602
    %v1608 = vadd.f32 %v125, %v1603
    %v1609 = vadd.f32 %v126, %v1604
    %v1610 = vadd.f32 %v127, %v1605
    %v1611 = vadd.f32 %v128, %v1606
    %v1612 = vperm.slane %v193, 3
    %v1613 = vadd.f32 %v1607, %v1612
    %v1614 = vadd.f32 %v1608, %v1612
    %v1615 = vadd.f32 %v1609, %v1612
    %v1616 = vadd.f32 %v1610, %v1612
    %v1617 = vadd.f32 %v1611, %v1612
    %v1618 = vsel %vm114, %v1613, 0.0
    %1619 = vadd.xlane.f32.xlu0 %v1618
    %v1620 = vpop.xlane.xlu0 %1619
    %v1621 = vsel %vm114, %v1614, 0.0
    %1622 = vadd.xlane.f32.xlu0 %v1621
    %v1623 = vpop.xlane.xlu0 %1622
    %v1624 = vsel %vm114, %v1615, 0.0
    %1625 = vadd.xlane.f32.xlu0 %v1624
    %v1626 = vpop.xlane.xlu0 %1625
    %v1627 = vsel %vm114, %v1616, 0.0
    %1628 = vadd.xlane.f32.xlu0 %v1627
    %v1629 = vpop.xlane.xlu0 %1628
    %v1630 = vsel %vm206, %v1617, 0.0
    %1631 = vadd.xlane.f32.xlu0 %v1630
    %v1632 = vpop.xlane.xlu0 %1631
    %v1633 = vmul.f32 %v1620, %v216
    %v1634 = vmul.f32 %v1623, %v216
    %v1635 = vmul.f32 %v1626, %v216
    %v1636 = vmul.f32 %v1629, %v216
    %v1637 = vmul.f32 %v1632, %v216
    %v1638 = vsub.f32 %v1613, %v1633
    %v1639 = vsub.f32 %v1614, %v1634
    %v1640 = vsub.f32 %v1615, %v1635
    %v1641 = vsub.f32 %v1616, %v1636
    %v1642 = vsub.f32 %v1617, %v1637
    %v1643 = vmul.f32 %v1638, %v1638
    %v1644 = vmul.f32 %v1639, %v1639
    %v1645 = vmul.f32 %v1640, %v1640
    %v1646 = vmul.f32 %v1641, %v1641
    %v1647 = vmul.f32 %v1642, %v1642
    %v1648 = vsel %vm114, %v1643, 0.0
    %1649 = vadd.xlane.f32.xlu0 %v1648
    %v1650 = vpop.xlane.xlu0 %1649
    %v1651 = vsel %vm114, %v1644, 0.0
    %1652 = vadd.xlane.f32.xlu0 %v1651
    %v1653 = vpop.xlane.xlu0 %1652
    %v1654 = vsel %vm114, %v1645, 0.0
    %1655 = vadd.xlane.f32.xlu0 %v1654
    %v1656 = vpop.xlane.xlu0 %1655
    %v1657 = vsel %vm114, %v1646, 0.0
    %1658 = vadd.xlane.f32.xlu0 %v1657
    %v1659 = vpop.xlane.xlu0 %1658
    %v1660 = vsel %vm206, %v1647, 0.0
    %1661 = vadd.xlane.f32.xlu0 %v1660
    %v1662 = vpop.xlane.xlu0 %1661
    %v1663 = vmul.f32 %v1650, %v216
    %v1664 = vmul.f32 %v1653, %v216
    %v1665 = vmul.f32 %v1656, %v216
    %v1666 = vmul.f32 %v1659, %v216
    %v1667 = vmul.f32 %v1662, %v216
    %v1668 = vadd.f32 %v1663, 1e-05
    %v1669 = vadd.f32 %v1664, 1e-05
    %v1670 = vadd.f32 %v1665, 1e-05
    %v1671 = vadd.f32 %v1666, 1e-05
    %v1672 = vadd.f32 %v1667, 1e-05
    %v1673 = vrsqrt.pop %v1668
    %v1674 = vmul.f32 %v1673, %v1668
    %v1675 = vmul.f32 %v1674, %v1673
    %v1676 = vmul.f32 0.5, %v1675
    %v1677 = vsub.f32 1.5, %v1676
    %v1678 = vmul.f32 %v1673, %v1677
    %vm1679 = vweird.f32 %v1668
    %vm1680 = vweird.f32 %v1673
    %vm1681 = vmor %vm1679, %vm1680
    %v1682 = vsel %vm1681, %v1673, %v1678
    %v1683 = vrsqrt.pop %v1669
    %v1684 = vmul.f32 %v1683, %v1669
    %v1685 = vmul.f32 %v1684, %v1683
    %v1686 = vmul.f32 0.5, %v1685
    %v1687 = vsub.f32 1.5, %v1686
    %v1688 = vmul.f32 %v1683, %v1687
    %vm1689 = vweird.f32 %v1669
    %vm1690 = vweird.f32 %v1683
    %vm1691 = vmor %vm1689, %vm1690
    %v1692 = vsel %vm1691, %v1683, %v1688
    %v1693 = vrsqrt.pop %v1670
    %v1694 = vmul.f32 %v1693, %v1670
    %v1695 = vmul.f32 %v1694, %v1693
    %v1696 = vmul.f32 0.5, %v1695
    %v1697 = vsub.f32 1.5, %v1696
    %v1698 = vmul.f32 %v1693, %v1697
    %vm1699 = vweird.f32 %v1670
    %vm1700 = vweird.f32 %v1693
    %vm1701 = vmor %vm1699, %vm1700
    %v1702 = vsel %vm1701, %v1693, %v1698
    %v1703 = vrsqrt.pop %v1671
    %v1704 = vmul.f32 %v1703, %v1671
    %v1705 = vmul.f32 %v1704, %v1703
    %v1706 = vmul.f32 0.5, %v1705
    %v1707 = vsub.f32 1.5, %v1706
    %v1708 = vmul.f32 %v1703, %v1707
    %vm1709 = vweird.f32 %v1671
    %vm1710 = vweird.f32 %v1703
    %vm1711 = vmor %vm1709, %vm1710
    %v1712 = vsel %vm1711, %v1703, %v1708
    %v1713 = vrsqrt.pop %v1672
    %v1714 = vmul.f32 %v1713, %v1672
    %v1715 = vmul.f32 %v1714, %v1713
    %v1716 = vmul.f32 0.5, %v1715
    %v1717 = vsub.f32 1.5, %v1716
    %v1718 = vmul.f32 %v1713, %v1717
    %vm1719 = vweird.f32 %v1672
    %vm1720 = vweird.f32 %v1713
    %vm1721 = vmor %vm1719, %vm1720
    %v1722 = vsel %vm1721, %v1713, %v1718
    %v1723 = vmul.f32 %v1638, %v1682
    %v1724 = vmul.f32 %v1639, %v1692
    %v1725 = vmul.f32 %v1640, %v1702
    %v1726 = vmul.f32 %v1641, %v1712
    %v1727 = vmul.f32 %v1642, %v1722
    %v1728 = vperm.slane %v193, 4
    %v1729 = vmul.f32 %v1723, %v1728
    %v1730 = vmul.f32 %v1724, %v1728
    %v1731 = vmul.f32 %v1725, %v1728
    %v1732 = vmul.f32 %v1726, %v1728
    %v1733 = vmul.f32 %v1727, %v1728
    %v1734 = vperm.slane %v193, 5
    %v1735 = vadd.f32 %v1729, %v1734
    %v1736 = vadd.f32 %v1730, %v1734
    %v1737 = vadd.f32 %v1731, %v1734
    %v1738 = vadd.f32 %v1732, %v1734
    %v1739 = vadd.f32 %v1733, %v1734
    %v1740 = vld [vmem:[%s7] sm:$0xff]
    %v1741 = vld [vmem:[%s7 + $0x8] sm:$0xff]
    %v1742 = vld [vmem:[%s7 + $0x10] sm:$0xff]
    %v1743 = vld [vmem:[%s7 + $0x18] sm:$0xff]
    %v1744 = vperm.slane %v193, 6
    %v1746 = vsel %vm114, %v1735, 0
    %v1749 = vsel %vm114, %v1736, 0
    %v1752 = vsel %vm114, %v1737, 0
    %v1755 = vsel %vm114, %v1738, 0
    %v1758 = vsel %vm114, %v1739, 0
    %1760 = vmatpush.msra.mxu0 0.0
    %1761 = vmatpush.msra.mxu0 0.0
    %1762 = vmatpush.msra.mxu0 0.0
    %1763 = vmatpush.msra.mxu0 0.0
    %1764 = vmatpush.msra.mxu0 0.0
    %1765 = vmatpush.msra.mxu0 0.0
    %1766 = vmatpush.msra.mxu0 0.0
    %1767 = vmatpush.msra.mxu0 0.0
    %1768 = vmatpush.msra.mxu0 0.0
    %1769 = vmatpush.msra.mxu0 0.0
    %1770 = vmatpush.msra.mxu0 0.0
    %1771 = vmatpush.msra.mxu0 0.0
    %1772 = vmatpush.msra.mxu0 %v1743
    %1773 = vmatpush.msra.mxu0 %v1742
    %1774 = vmatpush.msra.mxu0 %v1741
    %1775 = vmatpush.msra.mxu0 %v1740
    %1776 = vmatmul.f32.gmra.mxu0 %v1746
    %v1777 = vpop.f32.mrf.mxu0
    %v1778 = vadd.f32 %v1744, %v1777
    %1779 = vmatmul.f32.gmra.mxu0 %v1749
    %v1780 = vpop.f32.mrf.mxu0
    %v1781 = vadd.f32 %v1744, %v1780
    %1782 = vmatmul.f32.gmra.mxu0 %v1752
    %v1783 = vpop.f32.mrf.mxu0
    %v1784 = vadd.f32 %v1744, %v1783
    %1785 = vmatmul.f32.gmra.mxu0 %v1755
    %v1786 = vpop.f32.mrf.mxu0
    %v1787 = vadd.f32 %v1744, %v1786
    %1788 = vmatmul.f32.gmra.mxu0 %v1758
    %v1789 = vpop.f32.mrf.mxu0
    %v1790 = vadd.f32 %v1744, %v1789
    %1791 = vdwg.mxu0
    %v1792 = vmul.f32 %v1778, 0.5
    %v1793 = vmul.f32 %v1781, 0.5
    %v1794 = vmul.f32 %v1784, 0.5
    %v1795 = vmul.f32 %v1787, 0.5
    %v1796 = vmul.f32 %v1790, 0.5
    %v1797 = vmul.f32 %v1778, 0.70710677
    %v1798 = vmul.f32 %v1781, 0.70710677
    %v1799 = vmul.f32 %v1784, 0.70710677
    %v1800 = vmul.f32 %v1787, 0.70710677
    %v1801 = vmul.f32 %v1790, 0.70710677
    %v1802 = vmul.f32 %v1797, %v1797
    %v1803 = vmin.f32 16.0, %v1802
    %v1804 = vmul.f32 %v1803, 2.1237322e-06
    %v1805 = vadd.f32 %v1804, 0.00028619796
    %v1806 = vmul.f32 %v1803, %v1805
    %v1807 = vadd.f32 %v1806, 0.0036580483
    %v1808 = vmul.f32 %v1803, %v1807
    %v1809 = vadd.f32 %v1808, 0.05243302
    %v1810 = vmul.f32 %v1803, %v1809
    %v1811 = vadd.f32 %v1810, 0.18741608
    %v1812 = vmul.f32 %v1803, %v1811
    %v1813 = vadd.f32 %v1812, 1.1283791
    %v1814 = vmul.f32 %v1797, %v1813
    %v1815 = vmul.f32 %v1803, 3.8918573e-05
    %v1816 = vadd.f32 %v1815, 0.001143296
    %v1817 = vmul.f32 %v1803, %v1816
    %v1818 = vadd.f32 %v1817, 0.014752088
    %v1819 = vmul.f32 %v1803, %v1818
    %v1820 = vadd.f32 %v1819, 0.112945676
    %v1821 = vmul.f32 %v1803, %v1820
    %v1822 = vadd.f32 %v1821, 0.4994258
    %v1823 = vmul.f32 %v1803, %v1822
    %v1824 = vadd.f32 %v1823, 1.0
    %v1825 = vrcp.pop %v1824
    %v1826 = vmul.f32 %v1824, %v1825
    %v1827 = vsub.f32 1.0, %v1826
    %v1828 = vmul.f32 %v1825, %v1827
    %v1829 = vadd.f32 %v1825, %v1828
    %vm1830 = vweird.f32 %v1824
    %vm1831 = vweird.f32 %v1825
    %vm1832 = vmor %vm1830, %vm1831
    %v1833 = vsel %vm1832, %v1825, %v1829
    %v1834 = vand.u32 2147483647, %v1824
    %vm1835 = vcmp.eq.f32.partialorder %v1834, 8.507059e+37
    %v1836 = vand.u32 %v1824, 2147483648
    %v1837 = vor.u32 1.1754944e-38, %v1836
    %v1838 = vsel %vm1835, %v1837, %v1833
    %v1839 = vmul.f32 %v1814, %v1838
    %v1840 = vmin.f32 %v1839, 1.0
    %v1841 = vmax.f32 %v1840, -1.0
    %v1842 = vmul.f32 %v1798, %v1798
    %v1843 = vmin.f32 16.0, %v1842
    %v1844 = vmul.f32 %v1843, 2.1237322e-06
    %v1845 = vadd.f32 %v1844, 0.00028619796
    %v1846 = vmul.f32 %v1843, %v1845
    %v1847 = vadd.f32 %v1846, 0.0036580483
    %v1848 = vmul.f32 %v1843, %v1847
    %v1849 = vadd.f32 %v1848, 0.05243302
    %v1850 = vmul.f32 %v1843, %v1849
    %v1851 = vadd.f32 %v1850, 0.18741608
    %v1852 = vmul.f32 %v1843, %v1851
    %v1853 = vadd.f32 %v1852, 1.1283791
    %v1854 = vmul.f32 %v1798, %v1853
    %v1855 = vmul.f32 %v1843, 3.8918573e-05
    %v1856 = vadd.f32 %v1855, 0.001143296
    %v1857 = vmul.f32 %v1843, %v1856
    %v1858 = vadd.f32 %v1857, 0.014752088
    %v1859 = vmul.f32 %v1843, %v1858
    %v1860 = vadd.f32 %v1859, 0.112945676
    %v1861 = vmul.f32 %v1843, %v1860
    %v1862 = vadd.f32 %v1861, 0.4994258
    %v1863 = vmul.f32 %v1843, %v1862
    %v1864 = vadd.f32 %v1863, 1.0
    %v1865 = vrcp.pop %v1864
    %v1866 = vmul.f32 %v1864, %v1865
    %v1867 = vsub.f32 1.0, %v1866
    %v1868 = vmul.f32 %v1865, %v1867
    %v1869 = vadd.f32 %v1865, %v1868
    %vm1870 = vweird.f32 %v1864
    %vm1871 = vweird.f32 %v1865
    %vm1872 = vmor %vm1870, %vm1871
    %v1873 = vsel %vm1872, %v1865, %v1869
    %v1874 = vand.u32 2147483647, %v1864
    %vm1875 = vcmp.eq.f32.partialorder %v1874, 8.507059e+37
    %v1876 = vand.u32 %v1864, 2147483648
    %v1877 = vor.u32 1.1754944e-38, %v1876
    %v1878 = vsel %vm1875, %v1877, %v1873
    %v1879 = vmul.f32 %v1854, %v1878
    %v1880 = vmin.f32 %v1879, 1.0
    %v1881 = vmax.f32 %v1880, -1.0
    %v1882 = vmul.f32 %v1799, %v1799
    %v1883 = vmin.f32 16.0, %v1882
    %v1884 = vmul.f32 %v1883, 2.1237322e-06
    %v1885 = vadd.f32 %v1884, 0.00028619796
    %v1886 = vmul.f32 %v1883, %v1885
    %v1887 = vadd.f32 %v1886, 0.0036580483
    %v1888 = vmul.f32 %v1883, %v1887
    %v1889 = vadd.f32 %v1888, 0.05243302
    %v1890 = vmul.f32 %v1883, %v1889
    %v1891 = vadd.f32 %v1890, 0.18741608
    %v1892 = vmul.f32 %v1883, %v1891
    %v1893 = vadd.f32 %v1892, 1.1283791
    %v1894 = vmul.f32 %v1799, %v1893
    %v1895 = vmul.f32 %v1883, 3.8918573e-05
    %v1896 = vadd.f32 %v1895, 0.001143296
    %v1897 = vmul.f32 %v1883, %v1896
    %v1898 = vadd.f32 %v1897, 0.014752088
    %v1899 = vmul.f32 %v1883, %v1898
    %v1900 = vadd.f32 %v1899, 0.112945676
    %v1901 = vmul.f32 %v1883, %v1900
    %v1902 = vadd.f32 %v1901, 0.4994258
    %v1903 = vmul.f32 %v1883, %v1902
    %v1904 = vadd.f32 %v1903, 1.0
    %v1905 = vrcp.pop %v1904
    %v1906 = vmul.f32 %v1904, %v1905
    %v1907 = vsub.f32 1.0, %v1906
    %v1908 = vmul.f32 %v1905, %v1907
    %v1909 = vadd.f32 %v1905, %v1908
    %vm1910 = vweird.f32 %v1904
    %vm1911 = vweird.f32 %v1905
    %vm1912 = vmor %vm1910, %vm1911
    %v1913 = vsel %vm1912, %v1905, %v1909
    %v1914 = vand.u32 2147483647, %v1904
    %vm1915 = vcmp.eq.f32.partialorder %v1914, 8.507059e+37
    %v1916 = vand.u32 %v1904, 2147483648
    %v1917 = vor.u32 1.1754944e-38, %v1916
    %v1918 = vsel %vm1915, %v1917, %v1913
    %v1919 = vmul.f32 %v1894, %v1918
    %v1920 = vmin.f32 %v1919, 1.0
    %v1921 = vmax.f32 %v1920, -1.0
    %v1922 = vmul.f32 %v1800, %v1800
    %v1923 = vmin.f32 16.0, %v1922
    %v1924 = vmul.f32 %v1923, 2.1237322e-06
    %v1925 = vadd.f32 %v1924, 0.00028619796
    %v1926 = vmul.f32 %v1923, %v1925
    %v1927 = vadd.f32 %v1926, 0.0036580483
    %v1928 = vmul.f32 %v1923, %v1927
    %v1929 = vadd.f32 %v1928, 0.05243302
    %v1930 = vmul.f32 %v1923, %v1929
    %v1931 = vadd.f32 %v1930, 0.18741608
    %v1932 = vmul.f32 %v1923, %v1931
    %v1933 = vadd.f32 %v1932, 1.1283791
    %v1934 = vmul.f32 %v1800, %v1933
    %v1935 = vmul.f32 %v1923, 3.8918573e-05
    %v1936 = vadd.f32 %v1935, 0.001143296
    %v1937 = vmul.f32 %v1923, %v1936
    %v1938 = vadd.f32 %v1937, 0.014752088
    %v1939 = vmul.f32 %v1923, %v1938
    %v1940 = vadd.f32 %v1939, 0.112945676
    %v1941 = vmul.f32 %v1923, %v1940
    %v1942 = vadd.f32 %v1941, 0.4994258
    %v1943 = vmul.f32 %v1923, %v1942
    %v1944 = vadd.f32 %v1943, 1.0
    %v1945 = vrcp.pop %v1944
    %v1946 = vmul.f32 %v1944, %v1945
    %v1947 = vsub.f32 1.0, %v1946
    %v1948 = vmul.f32 %v1945, %v1947
    %v1949 = vadd.f32 %v1945, %v1948
    %vm1950 = vweird.f32 %v1944
    %vm1951 = vweird.f32 %v1945
    %vm1952 = vmor %vm1950, %vm1951
    %v1953 = vsel %vm1952, %v1945, %v1949
    %v1954 = vand.u32 2147483647, %v1944
    %vm1955 = vcmp.eq.f32.partialorder %v1954, 8.507059e+37
    %v1956 = vand.u32 %v1944, 2147483648
    %v1957 = vor.u32 1.1754944e-38, %v1956
    %v1958 = vsel %vm1955, %v1957, %v1953
    %v1959 = vmul.f32 %v1934, %v1958
    %v1960 = vmin.f32 %v1959, 1.0
    %v1961 = vmax.f32 %v1960, -1.0
    %v1962 = vmul.f32 %v1801, %v1801
    %v1963 = vmin.f32 16.0, %v1962
    %v1964 = vmul.f32 %v1963, 2.1237322e-06
    %v1965 = vadd.f32 %v1964, 0.00028619796
    %v1966 = vmul.f32 %v1963, %v1965
    %v1967 = vadd.f32 %v1966, 0.0036580483
    %v1968 = vmul.f32 %v1963, %v1967
    %v1969 = vadd.f32 %v1968, 0.05243302
    %v1970 = vmul.f32 %v1963, %v1969
    %v1971 = vadd.f32 %v1970, 0.18741608
    %v1972 = vmul.f32 %v1963, %v1971
    %v1973 = vadd.f32 %v1972, 1.1283791
    %v1974 = vmul.f32 %v1801, %v1973
    %v1975 = vmul.f32 %v1963, 3.8918573e-05
    %v1976 = vadd.f32 %v1975, 0.001143296
    %v1977 = vmul.f32 %v1963, %v1976
    %v1978 = vadd.f32 %v1977, 0.014752088
    %v1979 = vmul.f32 %v1963, %v1978
    %v1980 = vadd.f32 %v1979, 0.112945676
    %v1981 = vmul.f32 %v1963, %v1980
    %v1982 = vadd.f32 %v1981, 0.4994258
    %v1983 = vmul.f32 %v1963, %v1982
    %v1984 = vadd.f32 %v1983, 1.0
    %v1985 = vrcp.pop %v1984
    %v1986 = vmul.f32 %v1984, %v1985
    %v1987 = vsub.f32 1.0, %v1986
    %v1988 = vmul.f32 %v1985, %v1987
    %v1989 = vadd.f32 %v1985, %v1988
    %vm1990 = vweird.f32 %v1984
    %vm1991 = vweird.f32 %v1985
    %vm1992 = vmor %vm1990, %vm1991
    %v1993 = vsel %vm1992, %v1985, %v1989
    %v1994 = vand.u32 2147483647, %v1984
    %vm1995 = vcmp.eq.f32.partialorder %v1994, 8.507059e+37
    %v1996 = vand.u32 %v1984, 2147483648
    %v1997 = vor.u32 1.1754944e-38, %v1996
    %v1998 = vsel %vm1995, %v1997, %v1993
    %v1999 = vmul.f32 %v1974, %v1998
    %v2000 = vmin.f32 %v1999, 1.0
    %v2001 = vmax.f32 %v2000, -1.0
    %v2002 = vadd.f32 %v1841, 1.0
    %v2003 = vadd.f32 %v1881, 1.0
    %v2004 = vadd.f32 %v1921, 1.0
    %v2005 = vadd.f32 %v1961, 1.0
    %v2006 = vadd.f32 %v2001, 1.0
    %v2007 = vmul.f32 %v1792, %v2002
    %v2008 = vmul.f32 %v1793, %v2003
    %v2009 = vmul.f32 %v1794, %v2004
    %v2010 = vmul.f32 %v1795, %v2005
    %v2011 = vmul.f32 %v1796, %v2006
    %v2012 = vld [vmem:[%s8] sm:$0xff]
    %v2013 = vld [vmem:[%s8 + $0x8] sm:$0xff]
    %v2014 = vld [vmem:[%s8 + $0x10] sm:$0xff]
    %v2015 = vld [vmem:[%s8 + $0x18] sm:$0xff]
    %v2016 = vld [vmem:[%s8 + $0x20] sm:$0xff]
    %v2017 = vld [vmem:[%s8 + $0x28] sm:$0xff]
    %v2018 = vld [vmem:[%s8 + $0x30] sm:$0xff]
    %v2019 = vld [vmem:[%s8 + $0x38] sm:$0xff]
    %v2020 = vperm.slane %v193, 7
    %v2022 = vsel %vm52, %v2007, 0
    %v2025 = vsel %vm52, %v2008, 0
    %v2028 = vsel %vm52, %v2009, 0
    %v2031 = vsel %vm52, %v2010, 0
    %v2034 = vsel %vm52, %v2011, 0
    %2036 = vmatpush.msra.mxu0 0.0
    %2037 = vmatpush.msra.mxu0 0.0
    %2038 = vmatpush.msra.mxu0 0.0
    %2039 = vmatpush.msra.mxu0 0.0
    %2040 = vmatpush.msra.mxu0 0.0
    %2041 = vmatpush.msra.mxu0 0.0
    %2042 = vmatpush.msra.mxu0 0.0
    %2043 = vmatpush.msra.mxu0 0.0
    %2044 = vmatpush.msra.mxu0 %v2019
    %2045 = vmatpush.msra.mxu0 %v2018
    %2046 = vmatpush.msra.mxu0 %v2017
    %2047 = vmatpush.msra.mxu0 %v2016
    %2048 = vmatpush.msra.mxu0 %v2015
    %2049 = vmatpush.msra.mxu0 %v2014
    %2050 = vmatpush.msra.mxu0 %v2013
    %2051 = vmatpush.msra.mxu0 %v2012
    %2052 = vmatmul.f32.gmra.mxu0 %v2022
    %v2053 = vpop.f32.mrf.mxu0
    %v2054 = vadd.f32 %v2020, %v2053
    %2055 = vmatmul.f32.gmra.mxu0 %v2025
    %v2056 = vpop.f32.mrf.mxu0
    %v2057 = vadd.f32 %v2020, %v2056
    %2058 = vmatmul.f32.gmra.mxu0 %v2028
    %v2059 = vpop.f32.mrf.mxu0
    %v2060 = vadd.f32 %v2020, %v2059
    %2061 = vmatmul.f32.gmra.mxu0 %v2031
    %v2062 = vpop.f32.mrf.mxu0
    %v2063 = vadd.f32 %v2020, %v2062
    %2064 = vmatmul.f32.gmra.mxu0 %v2034
    %v2065 = vpop.f32.mrf.mxu0
    %v2066 = vadd.f32 %v2020, %v2065
    %2067 = vdwg.mxu0
    %v2068 = vadd.f32 %v1613, %v2054
    %v2069 = vadd.f32 %v1614, %v2057
    %v2070 = vadd.f32 %v1615, %v2060
    %v2071 = vadd.f32 %v1616, %v2063
    %v2072 = vadd.f32 %v1617, %v2066
    %s2073 = scalar_lea.vmem %s9, 8
    %v2074 = vld [vmem:[%s2073] sm:$0xff]
    %v2075 = vsel %vm114, %v2068, 0.0
    %2076 = vadd.xlane.f32.xlu0 %v2075
    %v2077 = vpop.xlane.xlu0 %2076
    %v2078 = vsel %vm114, %v2069, 0.0
    %2079 = vadd.xlane.f32.xlu0 %v2078
    %v2080 = vpop.xlane.xlu0 %2079
    %v2081 = vsel %vm114, %v2070, 0.0
    %2082 = vadd.xlane.f32.xlu0 %v2081
    %v2083 = vpop.xlane.xlu0 %2082
    %v2084 = vsel %vm114, %v2071, 0.0
    %2085 = vadd.xlane.f32.xlu0 %v2084
    %v2086 = vpop.xlane.xlu0 %2085
    %v2087 = vsel %vm206, %v2072, 0.0
    %2088 = vadd.xlane.f32.xlu0 %v2087
    %v2089 = vpop.xlane.xlu0 %2088
    %v2090 = vmul.f32 %v2077, %v216
    %v2091 = vmul.f32 %v2080, %v216
    %v2092 = vmul.f32 %v2083, %v216
    %v2093 = vmul.f32 %v2086, %v216
    %v2094 = vmul.f32 %v2089, %v216
    %v2095 = vsub.f32 %v2068, %v2090
    %v2096 = vsub.f32 %v2069, %v2091
    %v2097 = vsub.f32 %v2070, %v2092
    %v2098 = vsub.f32 %v2071, %v2093
    %v2099 = vsub.f32 %v2072, %v2094
    %v2100 = vmul.f32 %v2095, %v2095
    %v2101 = vmul.f32 %v2096, %v2096
    %v2102 = vmul.f32 %v2097, %v2097
    %v2103 = vmul.f32 %v2098, %v2098
    %v2104 = vmul.f32 %v2099, %v2099
    %v2105 = vsel %vm114, %v2100, 0.0
    %2106 = vadd.xlane.f32.xlu0 %v2105
    %v2107 = vpop.xlane.xlu0 %2106
    %v2108 = vsel %vm114, %v2101, 0.0
    %2109 = vadd.xlane.f32.xlu0 %v2108
    %v2110 = vpop.xlane.xlu0 %2109
    %v2111 = vsel %vm114, %v2102, 0.0
    %2112 = vadd.xlane.f32.xlu0 %v2111
    %v2113 = vpop.xlane.xlu0 %2112
    %v2114 = vsel %vm114, %v2103, 0.0
    %2115 = vadd.xlane.f32.xlu0 %v2114
    %v2116 = vpop.xlane.xlu0 %2115
    %v2117 = vsel %vm206, %v2104, 0.0
    %2118 = vadd.xlane.f32.xlu0 %v2117
    %v2119 = vpop.xlane.xlu0 %2118
    %v2120 = vmul.f32 %v2107, %v216
    %v2121 = vmul.f32 %v2110, %v216
    %v2122 = vmul.f32 %v2113, %v216
    %v2123 = vmul.f32 %v2116, %v216
    %v2124 = vmul.f32 %v2119, %v216
    %v2125 = vadd.f32 %v2120, 1e-05
    %v2126 = vadd.f32 %v2121, 1e-05
    %v2127 = vadd.f32 %v2122, 1e-05
    %v2128 = vadd.f32 %v2123, 1e-05
    %v2129 = vadd.f32 %v2124, 1e-05
    %v2130 = vrsqrt.pop %v2125
    %v2131 = vmul.f32 %v2130, %v2125
    %v2132 = vmul.f32 %v2131, %v2130
    %v2133 = vmul.f32 0.5, %v2132
    %v2134 = vsub.f32 1.5, %v2133
    %v2135 = vmul.f32 %v2130, %v2134
    %vm2136 = vweird.f32 %v2125
    %vm2137 = vweird.f32 %v2130
    %vm2138 = vmor %vm2136, %vm2137
    %v2139 = vsel %vm2138, %v2130, %v2135
    %v2140 = vrsqrt.pop %v2126
    %v2141 = vmul.f32 %v2140, %v2126
    %v2142 = vmul.f32 %v2141, %v2140
    %v2143 = vmul.f32 0.5, %v2142
    %v2144 = vsub.f32 1.5, %v2143
    %v2145 = vmul.f32 %v2140, %v2144
    %vm2146 = vweird.f32 %v2126
    %vm2147 = vweird.f32 %v2140
    %vm2148 = vmor %vm2146, %vm2147
    %v2149 = vsel %vm2148, %v2140, %v2145
    %v2150 = vrsqrt.pop %v2127
    %v2151 = vmul.f32 %v2150, %v2127
    %v2152 = vmul.f32 %v2151, %v2150
    %v2153 = vmul.f32 0.5, %v2152
    %v2154 = vsub.f32 1.5, %v2153
    %v2155 = vmul.f32 %v2150, %v2154
    %vm2156 = vweird.f32 %v2127
    %vm2157 = vweird.f32 %v2150
    %vm2158 = vmor %vm2156, %vm2157
    %v2159 = vsel %vm2158, %v2150, %v2155
    %v2160 = vrsqrt.pop %v2128
    %v2161 = vmul.f32 %v2160, %v2128
    %v2162 = vmul.f32 %v2161, %v2160
    %v2163 = vmul.f32 0.5, %v2162
    %v2164 = vsub.f32 1.5, %v2163
    %v2165 = vmul.f32 %v2160, %v2164
    %vm2166 = vweird.f32 %v2128
    %vm2167 = vweird.f32 %v2160
    %vm2168 = vmor %vm2166, %vm2167
    %v2169 = vsel %vm2168, %v2160, %v2165
    %v2170 = vrsqrt.pop %v2129
    %v2171 = vmul.f32 %v2170, %v2129
    %v2172 = vmul.f32 %v2171, %v2170
    %v2173 = vmul.f32 0.5, %v2172
    %v2174 = vsub.f32 1.5, %v2173
    %v2175 = vmul.f32 %v2170, %v2174
    %vm2176 = vweird.f32 %v2129
    %vm2177 = vweird.f32 %v2170
    %vm2178 = vmor %vm2176, %vm2177
    %v2179 = vsel %vm2178, %v2170, %v2175
    %v2180 = vmul.f32 %v2095, %v2139
    %v2181 = vmul.f32 %v2096, %v2149
    %v2182 = vmul.f32 %v2097, %v2159
    %v2183 = vmul.f32 %v2098, %v2169
    %v2184 = vmul.f32 %v2099, %v2179
    %v2185 = vperm.slane %v2074, 0
    %v2186 = vmul.f32 %v2180, %v2185
    %v2187 = vmul.f32 %v2181, %v2185
    %v2188 = vmul.f32 %v2182, %v2185
    %v2189 = vmul.f32 %v2183, %v2185
    %v2190 = vmul.f32 %v2184, %v2185
    %v2191 = vperm.slane %v2074, 1
    %v2192 = vadd.f32 %v2186, %v2191
    %v2193 = vadd.f32 %v2187, %v2191
    %v2194 = vadd.f32 %v2188, %v2191
    %v2195 = vadd.f32 %v2189, %v2191
    %v2196 = vadd.f32 %v2190, %v2191
    %s2197 = scalar_lea.vmem %s5, 32
    %v2198 = vld [vmem:[%s2197] sm:$0xff]
    %v2199 = vld [vmem:[%s2197 + $0x8] sm:$0xff]
    %v2200 = vld [vmem:[%s2197 + $0x10] sm:$0xff]
    %v2201 = vld [vmem:[%s2197 + $0x18] sm:$0xff]
    %v2202 = vperm.slane %v2074, 2
    %v2204 = vsel %vm114, %v2192, 0
    %v2207 = vsel %vm114, %v2193, 0
    %v2210 = vsel %vm114, %v2194, 0
    %v2213 = vsel %vm114, %v2195, 0
    %v2216 = vsel %vm114, %v2196, 0
    %2218 = vmatpush.msra.mxu0 0.0
    %2219 = vmatpush.msra.mxu0 0.0
    %2220 = vmatpush.msra.mxu0 0.0
    %2221 = vmatpush.msra.mxu0 0.0
    %2222 = vmatpush.msra.mxu0 0.0
    %2223 = vmatpush.msra.mxu0 0.0
    %2224 = vmatpush.msra.mxu0 0.0
    %2225 = vmatpush.msra.mxu0 0.0
    %2226 = vmatpush.msra.mxu0 0.0
    %2227 = vmatpush.msra.mxu0 0.0
    %2228 = vmatpush.msra.mxu0 0.0
    %2229 = vmatpush.msra.mxu0 0.0
    %2230 = vmatpush.msra.mxu0 %v2201
    %2231 = vmatpush.msra.mxu0 %v2200
    %2232 = vmatpush.msra.mxu0 %v2199
    %2233 = vmatpush.msra.mxu0 %v2198
    %2234 = vmatmul.f32.gmra.mxu0 %v2204
    %v2235 = vpop.f32.mrf.mxu0
    %v2236 = vadd.f32 %v2202, %v2235
    %2237 = vmatmul.f32.gmra.mxu0 %v2207
    %v2238 = vpop.f32.mrf.mxu0
    %v2239 = vadd.f32 %v2202, %v2238
    %2240 = vmatmul.f32.gmra.mxu0 %v2210
    %v2241 = vpop.f32.mrf.mxu0
    %v2242 = vadd.f32 %v2202, %v2241
    %2243 = vmatmul.f32.gmra.mxu0 %v2213
    %v2244 = vpop.f32.mrf.mxu0
    %v2245 = vadd.f32 %v2202, %v2244
    %2246 = vmatmul.f32.gmra.mxu0 %v2216
    %v2247 = vpop.f32.mrf.mxu0
    %v2248 = vadd.f32 %v2202, %v2247
    %2249 = vdwg.mxu0
    %v2250 = vmul.f32 %v2236, 0.35355338
    %v2251 = vmul.f32 %v2239, 0.35355338
    %v2252 = vmul.f32 %v2242, 0.35355338
    %v2253 = vmul.f32 %v2245, 0.35355338
    %v2254 = vmul.f32 %v2248, 0.35355338
    %s2255 = scalar_lea.vmem %s6, 32
    %v2256 = vld [vmem:[%s2255] sm:$0xff]
    %v2257 = vld [vmem:[%s2255 + $0x8] sm:$0xff]
    %v2258 = vld [vmem:[%s2255 + $0x10] sm:$0xff]
    %v2259 = vld [vmem:[%s2255 + $0x18] sm:$0xff]
    %2265 = vrot.lane.b32.xlu0 %v2236, 96
    %v2266 = vpop.permute.xlu0 %2265
    %2267 = vrot.lane.b32.xlu0 %v2239, 96
    %v2268 = vpop.permute.xlu0 %2267
    %2269 = vrot.lane.b32.xlu0 %v2242, 96
    %v2270 = vpop.permute.xlu0 %2269
    %2271 = vrot.lane.b32.xlu0 %v2245, 96
    %v2272 = vpop.permute.xlu0 %2271
    %2273 = vrot.lane.b32.xlu0 %v2248, 96
    %v2274 = vpop.permute.xlu0 %2273
    %v2276 = vsel %vm400, %v2250, 0
    %v2279 = vsel %vm400, %v2251, 0
    %v2282 = vsel %vm400, %v2252, 0
    %v2285 = vsel %vm400, %v2253, 0
    %v2288 = vsel %vm400, %v2254, 0
    %v2290 = vsel %vm400, %v2266, 0
    %v2292 = vsel %vm400, %v2268, 0
    %v2294 = vsel %vm400, %v2270, 0
    %v2296 = vsel %vm400, %v2272, 0
    %v2298 = vsel %vm400, %v2274, 0
    %2300 = vmatpush.xpose.msra.mxu0 0.0
    %2301 = vmatpush.xpose.msra.mxu0 0.0
    %2302 = vmatpush.xpose.msra.mxu0 0.0
    %2303 = vmatpush.xpose.msra.mxu0 0.0
    %2304 = vmatpush.xpose.msra.mxu0 0.0
    %2305 = vmatpush.xpose.msra.mxu0 0.0
    %2306 = vmatpush.xpose.msra.mxu0 0.0
    %2307 = vmatpush.xpose.msra.mxu0 0.0
    %2308 = vmatpush.xpose.msra.mxu0 0.0
    %2309 = vmatpush.xpose.msra.mxu0 0.0
    %2310 = vmatpush.xpose.msra.mxu0 0.0
    %2311 = vmatpush.xpose.msra.mxu0 %v2298
    %2312 = vmatpush.xpose.msra.mxu0 %v2296
    %2313 = vmatpush.xpose.msra.mxu0 %v2294
    %2314 = vmatpush.xpose.msra.mxu0 %v2292
    %2315 = vmatpush.xpose.msra.mxu0 %v2290
    %2316 = vmatmul.f32.gmra.mxu0 %v2276
    %v2317 = vpop.f32.mrf.mxu0
    %v2318 = vadd.f32 %v188, %v2317
    %2319 = vmatmul.f32.gmra.mxu0 %v2279
    %v2320 = vpop.f32.mrf.mxu0
    %v2321 = vadd.f32 %v189, %v2320
    %2322 = vmatmul.f32.gmra.mxu0 %v2282
    %v2323 = vpop.f32.mrf.mxu0
    %v2324 = vadd.f32 %v190, %v2323
    %2325 = vmatmul.f32.gmra.mxu0 %v2285
    %v2326 = vpop.f32.mrf.mxu0
    %v2327 = vadd.f32 %v191, %v2326
    %2328 = vmatmul.f32.gmra.mxu0 %v2288
    %v2329 = vpop.f32.mrf.mxu0
    %v2330 = vadd.f32 %v192, %v2329
    %2331 = vdwg.mxu0
    %v2332 = vsel %vm458, %v2318, -inf
    %2333 = vmax.xlane.f32.xlu0 %v2332
    %v2334 = vpop.xlane.xlu0 %2333
    %v2335 = vsel %vm458, %v2321, -inf
    %2336 = vmax.xlane.f32.xlu0 %v2335
    %v2337 = vpop.xlane.xlu0 %2336
    %v2338 = vsel %vm458, %v2324, -inf
    %2339 = vmax.xlane.f32.xlu0 %v2338
    %v2340 = vpop.xlane.xlu0 %2339
    %v2341 = vsel %vm458, %v2327, -inf
    %2342 = vmax.xlane.f32.xlu0 %v2341
    %v2343 = vpop.xlane.xlu0 %2342
    %v2344 = vsel %vm471, %v2330, -inf
    %2345 = vmax.xlane.f32.xlu0 %v2344
    %v2346 = vpop.xlane.xlu0 %2345
    %v2347 = vsub.f32 %v2318, %v2334
    %v2348 = vsub.f32 %v2321, %v2337
    %v2349 = vsub.f32 %v2324, %v2340
    %v2350 = vsub.f32 %v2327, %v2343
    %v2351 = vsub.f32 %v2330, %v2346
    %v2352 = vmul.f32 %v2347, 1.442695
    %v2353 = vpow.pop %v2352
    %v2354 = vmul.f32 %v2348, 1.442695
    %v2355 = vpow.pop %v2354
    %v2356 = vmul.f32 %v2349, 1.442695
    %v2357 = vpow.pop %v2356
    %v2358 = vmul.f32 %v2350, 1.442695
    %v2359 = vpow.pop %v2358
    %v2360 = vmul.f32 %v2351, 1.442695
    %v2361 = vpow.pop %v2360
    %v2362 = vsel %vm458, %v2353, 0.0
    %2363 = vadd.xlane.f32.xlu0 %v2362
    %v2364 = vpop.xlane.xlu0 %2363
    %v2365 = vsel %vm458, %v2355, 0.0
    %2366 = vadd.xlane.f32.xlu0 %v2365
    %v2367 = vpop.xlane.xlu0 %2366
    %v2368 = vsel %vm458, %v2357, 0.0
    %2369 = vadd.xlane.f32.xlu0 %v2368
    %v2370 = vpop.xlane.xlu0 %2369
    %v2371 = vsel %vm458, %v2359, 0.0
    %2372 = vadd.xlane.f32.xlu0 %v2371
    %v2373 = vpop.xlane.xlu0 %2372
    %v2374 = vsel %vm471, %v2361, 0.0
    %2375 = vadd.xlane.f32.xlu0 %v2374
    %v2376 = vpop.xlane.xlu0 %2375
    %v2377 = vrcp.pop %v2364
    %v2378 = vmul.f32 %v2364, %v2377
    %v2379 = vsub.f32 1.0, %v2378
    %v2380 = vmul.f32 %v2377, %v2379
    %v2381 = vadd.f32 %v2377, %v2380
    %vm2382 = vweird.f32 %v2364
    %vm2383 = vweird.f32 %v2377
    %vm2384 = vmor %vm2382, %vm2383
    %v2385 = vsel %vm2384, %v2377, %v2381
    %v2386 = vand.u32 2147483647, %v2364
    %vm2387 = vcmp.eq.f32.partialorder %v2386, 8.507059e+37
    %v2388 = vand.u32 %v2364, 2147483648
    %v2389 = vor.u32 1.1754944e-38, %v2388
    %v2390 = vsel %vm2387, %v2389, %v2385
    %v2391 = vrcp.pop %v2367
    %v2392 = vmul.f32 %v2367, %v2391
    %v2393 = vsub.f32 1.0, %v2392
    %v2394 = vmul.f32 %v2391, %v2393
    %v2395 = vadd.f32 %v2391, %v2394
    %vm2396 = vweird.f32 %v2367
    %vm2397 = vweird.f32 %v2391
    %vm2398 = vmor %vm2396, %vm2397
    %v2399 = vsel %vm2398, %v2391, %v2395
    %v2400 = vand.u32 2147483647, %v2367
    %vm2401 = vcmp.eq.f32.partialorder %v2400, 8.507059e+37
    %v2402 = vand.u32 %v2367, 2147483648
    %v2403 = vor.u32 1.1754944e-38, %v2402
    %v2404 = vsel %vm2401, %v2403, %v2399
    %v2405 = vrcp.pop %v2370
    %v2406 = vmul.f32 %v2370, %v2405
    %v2407 = vsub.f32 1.0, %v2406
    %v2408 = vmul.f32 %v2405, %v2407
    %v2409 = vadd.f32 %v2405, %v2408
    %vm2410 = vweird.f32 %v2370
    %vm2411 = vweird.f32 %v2405
    %vm2412 = vmor %vm2410, %vm2411
    %v2413 = vsel %vm2412, %v2405, %v2409
    %v2414 = vand.u32 2147483647, %v2370
    %vm2415 = vcmp.eq.f32.partialorder %v2414, 8.507059e+37
    %v2416 = vand.u32 %v2370, 2147483648
    %v2417 = vor.u32 1.1754944e-38, %v2416
    %v2418 = vsel %vm2415, %v2417, %v2413
    %v2419 = vrcp.pop %v2373
    %v2420 = vmul.f32 %v2373, %v2419
    %v2421 = vsub.f32 1.0, %v2420
    %v2422 = vmul.f32 %v2419, %v2421
    %v2423 = vadd.f32 %v2419, %v2422
    %vm2424 = vweird.f32 %v2373
    %vm2425 = vweird.f32 %v2419
    %vm2426 = vmor %vm2424, %vm2425
    %v2427 = vsel %vm2426, %v2419, %v2423
    %v2428 = vand.u32 2147483647, %v2373
    %vm2429 = vcmp.eq.f32.partialorder %v2428, 8.507059e+37
    %v2430 = vand.u32 %v2373, 2147483648
    %v2431 = vor.u32 1.1754944e-38, %v2430
    %v2432 = vsel %vm2429, %v2431, %v2427
    %v2433 = vrcp.pop %v2376
    %v2434 = vmul.f32 %v2376, %v2433
    %v2435 = vsub.f32 1.0, %v2434
    %v2436 = vmul.f32 %v2433, %v2435
    %v2437 = vadd.f32 %v2433, %v2436
    %vm2438 = vweird.f32 %v2376
    %vm2439 = vweird.f32 %v2433
    %vm2440 = vmor %vm2438, %vm2439
    %v2441 = vsel %vm2440, %v2433, %v2437
    %v2442 = vand.u32 2147483647, %v2376
    %vm2443 = vcmp.eq.f32.partialorder %v2442, 8.507059e+37
    %v2444 = vand.u32 %v2376, 2147483648
    %v2445 = vor.u32 1.1754944e-38, %v2444
    %v2446 = vsel %vm2443, %v2445, %v2441
    %v2447 = vmul.f32 %v2353, %v2390
    %v2448 = vmul.f32 %v2355, %v2404
    %v2449 = vmul.f32 %v2357, %v2418
    %v2450 = vmul.f32 %v2359, %v2432
    %v2451 = vmul.f32 %v2361, %v2446
    %2452 = vrot.lane.b32.xlu0 %v2236, 64
    %v2453 = vpop.permute.xlu0 %2452
    %2454 = vrot.lane.b32.xlu0 %v2239, 64
    %v2455 = vpop.permute.xlu0 %2454
    %2456 = vrot.lane.b32.xlu0 %v2242, 64
    %v2457 = vpop.permute.xlu0 %2456
    %2458 = vrot.lane.b32.xlu0 %v2245, 64
    %v2459 = vpop.permute.xlu0 %2458
    %2460 = vrot.lane.b32.xlu0 %v2248, 64
    %v2461 = vpop.permute.xlu0 %2460
    %v2467 = vsel %vm458, %v2447, 0
    %v2470 = vsel %vm458, %v2448, 0
    %v2473 = vsel %vm458, %v2449, 0
    %v2476 = vsel %vm458, %v2450, 0
    %v2479 = vsel %vm458, %v2451, 0
    %v2481 = vsel %vm609, %v2461, 0
    %2483 = vmatpush.msra.mxu0 0.0
    %2484 = vmatpush.msra.mxu0 0.0
    %2485 = vmatpush.msra.mxu0 0.0
    %2486 = vmatpush.msra.mxu0 0.0
    %2487 = vmatpush.msra.mxu0 0.0
    %2488 = vmatpush.msra.mxu0 0.0
    %2489 = vmatpush.msra.mxu0 0.0
    %2490 = vmatpush.msra.mxu0 0.0
    %2491 = vmatpush.msra.mxu0 0.0
    %2492 = vmatpush.msra.mxu0 0.0
    %2493 = vmatpush.msra.mxu0 0.0
    %2494 = vmatpush.msra.mxu0 %v2481
    %2495 = vmatpush.msra.mxu0 %v2459
    %2496 = vmatpush.msra.mxu0 %v2457
    %2497 = vmatpush.msra.mxu0 %v2455
    %2498 = vmatpush.msra.mxu0 %v2453
    %2499 = vmatmul.f32.gmra.mxu0 %v2467
    %v2500 = vpop.f32.mrf.mxu0
    %v2501 = vadd.f32 0.0, %v2500
    %2502 = vmatmul.f32.gmra.mxu0 %v2470
    %v2503 = vpop.f32.mrf.mxu0
    %v2504 = vadd.f32 0.0, %v2503
    %2505 = vmatmul.f32.gmra.mxu0 %v2473
    %v2506 = vpop.f32.mrf.mxu0
    %v2507 = vadd.f32 0.0, %v2506
    %2508 = vmatmul.f32.gmra.mxu0 %v2476
    %v2509 = vpop.f32.mrf.mxu0
    %v2510 = vadd.f32 0.0, %v2509
    %2511 = vmatmul.f32.gmra.mxu0 %v2479
    %v2512 = vpop.f32.mrf.mxu0
    %v2513 = vadd.f32 0.0, %v2512
    %2514 = vdwg.mxu0
    %2515 = vrot.lane.b32.xlu0 %v2250, 120
    %v2516 = vpop.permute.xlu0 %2515
    %2517 = vrot.lane.b32.xlu0 %v2251, 120
    %v2518 = vpop.permute.xlu0 %2517
    %2519 = vrot.lane.b32.xlu0 %v2252, 120
    %v2520 = vpop.permute.xlu0 %2519
    %2521 = vrot.lane.b32.xlu0 %v2253, 120
    %v2522 = vpop.permute.xlu0 %2521
    %2523 = vrot.lane.b32.xlu0 %v2254, 120
    %v2524 = vpop.permute.xlu0 %2523
    %2525 = vrot.lane.b32.xlu0 %v2236, 88
    %v2526 = vpop.permute.xlu0 %2525
    %2527 = vrot.lane.b32.xlu0 %v2239, 88
    %v2528 = vpop.permute.xlu0 %2527
    %2529 = vrot.lane.b32.xlu0 %v2242, 88
    %v2530 = vpop.permute.xlu0 %2529
    %2531 = vrot.lane.b32.xlu0 %v2245, 88
    %v2532 = vpop.permute.xlu0 %2531
    %2533 = vrot.lane.b32.xlu0 %v2248, 88
    %v2534 = vpop.permute.xlu0 %2533
    %v2535 = vsel %vm400, %v2516, 0
    %v2537 = vsel %vm400, %v2518, 0
    %v2539 = vsel %vm400, %v2520, 0
    %v2541 = vsel %vm400, %v2522, 0
    %v2543 = vsel %vm400, %v2524, 0
    %v2545 = vsel %vm400, %v2526, 0
    %v2547 = vsel %vm400, %v2528, 0
    %v2549 = vsel %vm400, %v2530, 0
    %v2551 = vsel %vm400, %v2532, 0
    %v2553 = vsel %vm400, %v2534, 0
    %2555 = vmatpush.xpose.msra.mxu0 0.0
    %2556 = vmatpush.xpose.msra.mxu0 0.0
    %2557 = vmatpush.xpose.msra.mxu0 0.0
    %2558 = vmatpush.xpose.msra.mxu0 0.0
    %2559 = vmatpush.xpose.msra.mxu0 0.0
    %2560 = vmatpush.xpose.msra.mxu0 0.0
    %2561 = vmatpush.xpose.msra.mxu0 0.0
    %2562 = vmatpush.xpose.msra.mxu0 0.0
    %2563 = vmatpush.xpose.msra.mxu0 0.0
    %2564 = vmatpush.xpose.msra.mxu0 0.0
    %2565 = vmatpush.xpose.msra.mxu0 0.0
    %2566 = vmatpush.xpose.msra.mxu0 %v2553
    %2567 = vmatpush.xpose.msra.mxu0 %v2551
    %2568 = vmatpush.xpose.msra.mxu0 %v2549
    %2569 = vmatpush.xpose.msra.mxu0 %v2547
    %2570 = vmatpush.xpose.msra.mxu0 %v2545
    %2571 = vmatmul.f32.gmra.mxu0 %v2535
    %v2572 = vpop.f32.mrf.mxu0
    %v2573 = vadd.f32 %v188, %v2572
    %2574 = vmatmul.f32.gmra.mxu0 %v2537
    %v2575 = vpop.f32.mrf.mxu0
    %v2576 = vadd.f32 %v189, %v2575
    %2577 = vmatmul.f32.gmra.mxu0 %v2539
    %v2578 = vpop.f32.mrf.mxu0
    %v2579 = vadd.f32 %v190, %v2578
    %2580 = vmatmul.f32.gmra.mxu0 %v2541
    %v2581 = vpop.f32.mrf.mxu0
    %v2582 = vadd.f32 %v191, %v2581
    %2583 = vmatmul.f32.gmra.mxu0 %v2543
    %v2584 = vpop.f32.mrf.mxu0
    %v2585 = vadd.f32 %v192, %v2584
    %2586 = vdwg.mxu0
    %v2587 = vsel %vm458, %v2573, -inf
    %2588 = vmax.xlane.f32.xlu0 %v2587
    %v2589 = vpop.xlane.xlu0 %2588
    %v2590 = vsel %vm458, %v2576, -inf
    %2591 = vmax.xlane.f32.xlu0 %v2590
    %v2592 = vpop.xlane.xlu0 %2591
    %v2593 = vsel %vm458, %v2579, -inf
    %2594 = vmax.xlane.f32.xlu0 %v2593
    %v2595 = vpop.xlane.xlu0 %2594
    %v2596 = vsel %vm458, %v2582, -inf
    %2597 = vmax.xlane.f32.xlu0 %v2596
    %v2598 = vpop.xlane.xlu0 %2597
    %v2599 = vsel %vm471, %v2585, -inf
    %2600 = vmax.xlane.f32.xlu0 %v2599
    %v2601 = vpop.xlane.xlu0 %2600
    %v2602 = vsub.f32 %v2573, %v2589
    %v2603 = vsub.f32 %v2576, %v2592
    %v2604 = vsub.f32 %v2579, %v2595
    %v2605 = vsub.f32 %v2582, %v2598
    %v2606 = vsub.f32 %v2585, %v2601
    %v2607 = vmul.f32 %v2602, 1.442695
    %v2608 = vpow.pop %v2607
    %v2609 = vmul.f32 %v2603, 1.442695
    %v2610 = vpow.pop %v2609
    %v2611 = vmul.f32 %v2604, 1.442695
    %v2612 = vpow.pop %v2611
    %v2613 = vmul.f32 %v2605, 1.442695
    %v2614 = vpow.pop %v2613
    %v2615 = vmul.f32 %v2606, 1.442695
    %v2616 = vpow.pop %v2615
    %v2617 = vsel %vm458, %v2608, 0.0
    %2618 = vadd.xlane.f32.xlu0 %v2617
    %v2619 = vpop.xlane.xlu0 %2618
    %v2620 = vsel %vm458, %v2610, 0.0
    %2621 = vadd.xlane.f32.xlu0 %v2620
    %v2622 = vpop.xlane.xlu0 %2621
    %v2623 = vsel %vm458, %v2612, 0.0
    %2624 = vadd.xlane.f32.xlu0 %v2623
    %v2625 = vpop.xlane.xlu0 %2624
    %v2626 = vsel %vm458, %v2614, 0.0
    %2627 = vadd.xlane.f32.xlu0 %v2626
    %v2628 = vpop.xlane.xlu0 %2627
    %v2629 = vsel %vm471, %v2616, 0.0
    %2630 = vadd.xlane.f32.xlu0 %v2629
    %v2631 = vpop.xlane.xlu0 %2630
    %v2632 = vrcp.pop %v2619
    %v2633 = vmul.f32 %v2619, %v2632
    %v2634 = vsub.f32 1.0, %v2633
    %v2635 = vmul.f32 %v2632, %v2634
    %v2636 = vadd.f32 %v2632, %v2635
    %vm2637 = vweird.f32 %v2619
    %vm2638 = vweird.f32 %v2632
    %vm2639 = vmor %vm2637, %vm2638
    %v2640 = vsel %vm2639, %v2632, %v2636
    %v2641 = vand.u32 2147483647, %v2619
    %vm2642 = vcmp.eq.f32.partialorder %v2641, 8.507059e+37
    %v2643 = vand.u32 %v2619, 2147483648
    %v2644 = vor.u32 1.1754944e-38, %v2643
    %v2645 = vsel %vm2642, %v2644, %v2640
    %v2646 = vrcp.pop %v2622
    %v2647 = vmul.f32 %v2622, %v2646
    %v2648 = vsub.f32 1.0, %v2647
    %v2649 = vmul.f32 %v2646, %v2648
    %v2650 = vadd.f32 %v2646, %v2649
    %vm2651 = vweird.f32 %v2622
    %vm2652 = vweird.f32 %v2646
    %vm2653 = vmor %vm2651, %vm2652
    %v2654 = vsel %vm2653, %v2646, %v2650
    %v2655 = vand.u32 2147483647, %v2622
    %vm2656 = vcmp.eq.f32.partialorder %v2655, 8.507059e+37
    %v2657 = vand.u32 %v2622, 2147483648
    %v2658 = vor.u32 1.1754944e-38, %v2657
    %v2659 = vsel %vm2656, %v2658, %v2654
    %v2660 = vrcp.pop %v2625
    %v2661 = vmul.f32 %v2625, %v2660
    %v2662 = vsub.f32 1.0, %v2661
    %v2663 = vmul.f32 %v2660, %v2662
    %v2664 = vadd.f32 %v2660, %v2663
    %vm2665 = vweird.f32 %v2625
    %vm2666 = vweird.f32 %v2660
    %vm2667 = vmor %vm2665, %vm2666
    %v2668 = vsel %vm2667, %v2660, %v2664
    %v2669 = vand.u32 2147483647, %v2625
    %vm2670 = vcmp.eq.f32.partialorder %v2669, 8.507059e+37
    %v2671 = vand.u32 %v2625, 2147483648
    %v2672 = vor.u32 1.1754944e-38, %v2671
    %v2673 = vsel %vm2670, %v2672, %v2668
    %v2674 = vrcp.pop %v2628
    %v2675 = vmul.f32 %v2628, %v2674
    %v2676 = vsub.f32 1.0, %v2675
    %v2677 = vmul.f32 %v2674, %v2676
    %v2678 = vadd.f32 %v2674, %v2677
    %vm2679 = vweird.f32 %v2628
    %vm2680 = vweird.f32 %v2674
    %vm2681 = vmor %vm2679, %vm2680
    %v2682 = vsel %vm2681, %v2674, %v2678
    %v2683 = vand.u32 2147483647, %v2628
    %vm2684 = vcmp.eq.f32.partialorder %v2683, 8.507059e+37
    %v2685 = vand.u32 %v2628, 2147483648
    %v2686 = vor.u32 1.1754944e-38, %v2685
    %v2687 = vsel %vm2684, %v2686, %v2682
    %v2688 = vrcp.pop %v2631
    %v2689 = vmul.f32 %v2631, %v2688
    %v2690 = vsub.f32 1.0, %v2689
    %v2691 = vmul.f32 %v2688, %v2690
    %v2692 = vadd.f32 %v2688, %v2691
    %vm2693 = vweird.f32 %v2631
    %vm2694 = vweird.f32 %v2688
    %vm2695 = vmor %vm2693, %vm2694
    %v2696 = vsel %vm2695, %v2688, %v2692
    %v2697 = vand.u32 2147483647, %v2631
    %vm2698 = vcmp.eq.f32.partialorder %v2697, 8.507059e+37
    %v2699 = vand.u32 %v2631, 2147483648
    %v2700 = vor.u32 1.1754944e-38, %v2699
    %v2701 = vsel %vm2698, %v2700, %v2696
    %v2702 = vmul.f32 %v2608, %v2645
    %v2703 = vmul.f32 %v2610, %v2659
    %v2704 = vmul.f32 %v2612, %v2673
    %v2705 = vmul.f32 %v2614, %v2687
    %v2706 = vmul.f32 %v2616, %v2701
    %2707 = vrot.lane.b32.xlu0 %v2236, 56
    %v2708 = vpop.permute.xlu0 %2707
    %2709 = vrot.lane.b32.xlu0 %v2239, 56
    %v2710 = vpop.permute.xlu0 %2709
    %2711 = vrot.lane.b32.xlu0 %v2242, 56
    %v2712 = vpop.permute.xlu0 %2711
    %2713 = vrot.lane.b32.xlu0 %v2245, 56
    %v2714 = vpop.permute.xlu0 %2713
    %2715 = vrot.lane.b32.xlu0 %v2248, 56
    %v2716 = vpop.permute.xlu0 %2715
    %v2722 = vsel %vm458, %v2702, 0
    %v2725 = vsel %vm458, %v2703, 0
    %v2728 = vsel %vm458, %v2704, 0
    %v2731 = vsel %vm458, %v2705, 0
    %v2734 = vsel %vm458, %v2706, 0
    %v2736 = vsel %vm609, %v2716, 0
    %2738 = vmatpush.msra.mxu0 0.0
    %2739 = vmatpush.msra.mxu0 0.0
    %2740 = vmatpush.msra.mxu0 0.0
    %2741 = vmatpush.msra.mxu0 0.0
    %2742 = vmatpush.msra.mxu0 0.0
    %2743 = vmatpush.msra.mxu0 0.0
    %2744 = vmatpush.msra.mxu0 0.0
    %2745 = vmatpush.msra.mxu0 0.0
    %2746 = vmatpush.msra.mxu0 0.0
    %2747 = vmatpush.msra.mxu0 0.0
    %2748 = vmatpush.msra.mxu0 0.0
    %2749 = vmatpush.msra.mxu0 %v2736
    %2750 = vmatpush.msra.mxu0 %v2714
    %2751 = vmatpush.msra.mxu0 %v2712
    %2752 = vmatpush.msra.mxu0 %v2710
    %2753 = vmatpush.msra.mxu0 %v2708
    %2754 = vmatmul.f32.gmra.mxu0 %v2722
    %v2755 = vpop.f32.mrf.mxu0
    %v2756 = vadd.f32 0.0, %v2755
    %2757 = vmatmul.f32.gmra.mxu0 %v2725
    %v2758 = vpop.f32.mrf.mxu0
    %v2759 = vadd.f32 0.0, %v2758
    %2760 = vmatmul.f32.gmra.mxu0 %v2728
    %v2761 = vpop.f32.mrf.mxu0
    %v2762 = vadd.f32 0.0, %v2761
    %2763 = vmatmul.f32.gmra.mxu0 %v2731
    %v2764 = vpop.f32.mrf.mxu0
    %v2765 = vadd.f32 0.0, %v2764
    %2766 = vmatmul.f32.gmra.mxu0 %v2734
    %v2767 = vpop.f32.mrf.mxu0
    %v2768 = vadd.f32 0.0, %v2767
    %2769 = vdwg.mxu0
    %v2771 = vsel %vm400, %v2756, 0
    %v2774 = vsel %vm400, %v2759, 0
    %v2777 = vsel %vm400, %v2762, 0
    %v2780 = vsel %vm400, %v2765, 0
    %v2783 = vsel %vm400, %v2768, 0
    %2785 = vmatpush.msra.mxu0 0.0
    %2786 = vmatpush.msra.mxu0 0.0
    %2787 = vmatpush.msra.mxu0 0.0
    %2788 = vmatpush.msra.mxu0 0.0
    %2789 = vmatpush.msra.mxu0 0.0
    %2790 = vmatpush.msra.mxu0 0.0
    %2791 = vmatpush.msra.mxu0 0.0
    %2792 = vmatpush.msra.mxu0 0.0
    %2793 = vmatpush.msra.mxu0 0.0
    %2794 = vmatpush.msra.mxu0 0.0
    %2795 = vmatpush.msra.mxu0 0.0
    %2796 = vmatpush.msra.mxu0 0.0
    %2797 = vmatpush.msra.mxu0 0.0
    %2798 = vmatpush.msra.mxu0 0.0
    %2799 = vmatpush.msra.mxu0 0.0
    %2800 = vmatpush.msra.mxu0 %v2257
    %2801 = vmatmul.f32.gmra.mxu0 %v2771
    %v2802 = vpop.f32.mrf.mxu0
    %v2803 = vadd.f32 0.0, %v2802
    %2804 = vmatmul.f32.gmra.mxu0 %v2774
    %v2805 = vpop.f32.mrf.mxu0
    %v2806 = vadd.f32 0.0, %v2805
    %2807 = vmatmul.f32.gmra.mxu0 %v2777
    %v2808 = vpop.f32.mrf.mxu0
    %v2809 = vadd.f32 0.0, %v2808
    %2810 = vmatmul.f32.gmra.mxu0 %v2780
    %v2811 = vpop.f32.mrf.mxu0
    %v2812 = vadd.f32 0.0, %v2811
    %2813 = vmatmul.f32.gmra.mxu0 %v2783
    %v2814 = vpop.f32.mrf.mxu0
    %v2815 = vadd.f32 0.0, %v2814
    %2816 = vdwg.mxu0
    %v2818 = vsel %vm400, %v2501, 0
    %v2821 = vsel %vm400, %v2504, 0
    %v2824 = vsel %vm400, %v2507, 0
    %v2827 = vsel %vm400, %v2510, 0
    %v2830 = vsel %vm400, %v2513, 0
    %2832 = vmatpush.msra.mxu0 0.0
    %2833 = vmatpush.msra.mxu0 0.0
    %2834 = vmatpush.msra.mxu0 0.0
    %2835 = vmatpush.msra.mxu0 0.0
    %2836 = vmatpush.msra.mxu0 0.0
    %2837 = vmatpush.msra.mxu0 0.0
    %2838 = vmatpush.msra.mxu0 0.0
    %2839 = vmatpush.msra.mxu0 0.0
    %2840 = vmatpush.msra.mxu0 0.0
    %2841 = vmatpush.msra.mxu0 0.0
    %2842 = vmatpush.msra.mxu0 0.0
    %2843 = vmatpush.msra.mxu0 0.0
    %2844 = vmatpush.msra.mxu0 0.0
    %2845 = vmatpush.msra.mxu0 0.0
    %2846 = vmatpush.msra.mxu0 0.0
    %2847 = vmatpush.msra.mxu0 %v2256
    %2848 = vmatmul.f32.gmra.mxu0 %v2818
    %v2849 = vpop.f32.mrf.mxu0
    %v2850 = vadd.f32 %v2803, %v2849
    %2851 = vmatmul.f32.gmra.mxu0 %v2821
    %v2852 = vpop.f32.mrf.mxu0
    %v2853 = vadd.f32 %v2806, %v2852
    %2854 = vmatmul.f32.gmra.mxu0 %v2824
    %v2855 = vpop.f32.mrf.mxu0
    %v2856 = vadd.f32 %v2809, %v2855
    %2857 = vmatmul.f32.gmra.mxu0 %v2827
    %v2858 = vpop.f32.mrf.mxu0
    %v2859 = vadd.f32 %v2812, %v2858
    %2860 = vmatmul.f32.gmra.mxu0 %v2830
    %v2861 = vpop.f32.mrf.mxu0
    %v2862 = vadd.f32 %v2815, %v2861
    %2863 = vdwg.mxu0
    %2864 = vrot.lane.b32.xlu0 %v2250, 112
    %v2865 = vpop.permute.xlu0 %2864
    %2866 = vrot.lane.b32.xlu0 %v2251, 112
    %v2867 = vpop.permute.xlu0 %2866
    %2868 = vrot.lane.b32.xlu0 %v2252, 112
    %v2869 = vpop.permute.xlu0 %2868
    %2870 = vrot.lane.b32.xlu0 %v2253, 112
    %v2871 = vpop.permute.xlu0 %2870
    %2872 = vrot.lane.b32.xlu0 %v2254, 112
    %v2873 = vpop.permute.xlu0 %2872
    %2874 = vrot.lane.b32.xlu0 %v2236, 80
    %v2875 = vpop.permute.xlu0 %2874
    %2876 = vrot.lane.b32.xlu0 %v2239, 80
    %v2877 = vpop.permute.xlu0 %2876
    %2878 = vrot.lane.b32.xlu0 %v2242, 80
    %v2879 = vpop.permute.xlu0 %2878
    %2880 = vrot.lane.b32.xlu0 %v2245, 80
    %v2881 = vpop.permute.xlu0 %2880
    %2882 = vrot.lane.b32.xlu0 %v2248, 80
    %v2883 = vpop.permute.xlu0 %2882
    %v2884 = vsel %vm400, %v2865, 0
    %v2886 = vsel %vm400, %v2867, 0
    %v2888 = vsel %vm400, %v2869, 0
    %v2890 = vsel %vm400, %v2871, 0
    %v2892 = vsel %vm400, %v2873, 0
    %v2894 = vsel %vm400, %v2875, 0
    %v2896 = vsel %vm400, %v2877, 0
    %v2898 = vsel %vm400, %v2879, 0
    %v2900 = vsel %vm400, %v2881, 0
    %v2902 = vsel %vm400, %v2883, 0
    %2904 = vmatpush.xpose.msra.mxu0 0.0
    %2905 = vmatpush.xpose.msra.mxu0 0.0
    %2906 = vmatpush.xpose.msra.mxu0 0.0
    %2907 = vmatpush.xpose.msra.mxu0 0.0
    %2908 = vmatpush.xpose.msra.mxu0 0.0
    %2909 = vmatpush.xpose.msra.mxu0 0.0
    %2910 = vmatpush.xpose.msra.mxu0 0.0
    %2911 = vmatpush.xpose.msra.mxu0 0.0
    %2912 = vmatpush.xpose.msra.mxu0 0.0
    %2913 = vmatpush.xpose.msra.mxu0 0.0
    %2914 = vmatpush.xpose.msra.mxu0 0.0
    %2915 = vmatpush.xpose.msra.mxu0 %v2902
    %2916 = vmatpush.xpose.msra.mxu0 %v2900
    %2917 = vmatpush.xpose.msra.mxu0 %v2898
    %2918 = vmatpush.xpose.msra.mxu0 %v2896
    %2919 = vmatpush.xpose.msra.mxu0 %v2894
    %2920 = vmatmul.f32.gmra.mxu0 %v2884
    %v2921 = vpop.f32.mrf.mxu0
    %v2922 = vadd.f32 %v188, %v2921
    %2923 = vmatmul.f32.gmra.mxu0 %v2886
    %v2924 = vpop.f32.mrf.mxu0
    %v2925 = vadd.f32 %v189, %v2924
    %2926 = vmatmul.f32.gmra.mxu0 %v2888
    %v2927 = vpop.f32.mrf.mxu0
    %v2928 = vadd.f32 %v190, %v2927
    %2929 = vmatmul.f32.gmra.mxu0 %v2890
    %v2930 = vpop.f32.mrf.mxu0
    %v2931 = vadd.f32 %v191, %v2930
    %2932 = vmatmul.f32.gmra.mxu0 %v2892
    %v2933 = vpop.f32.mrf.mxu0
    %v2934 = vadd.f32 %v192, %v2933
    %2935 = vdwg.mxu0
    %v2936 = vsel %vm458, %v2922, -inf
    %2937 = vmax.xlane.f32.xlu0 %v2936
    %v2938 = vpop.xlane.xlu0 %2937
    %v2939 = vsel %vm458, %v2925, -inf
    %2940 = vmax.xlane.f32.xlu0 %v2939
    %v2941 = vpop.xlane.xlu0 %2940
    %v2942 = vsel %vm458, %v2928, -inf
    %2943 = vmax.xlane.f32.xlu0 %v2942
    %v2944 = vpop.xlane.xlu0 %2943
    %v2945 = vsel %vm458, %v2931, -inf
    %2946 = vmax.xlane.f32.xlu0 %v2945
    %v2947 = vpop.xlane.xlu0 %2946
    %v2948 = vsel %vm471, %v2934, -inf
    %2949 = vmax.xlane.f32.xlu0 %v2948
    %v2950 = vpop.xlane.xlu0 %2949
    %v2951 = vsub.f32 %v2922, %v2938
    %v2952 = vsub.f32 %v2925, %v2941
    %v2953 = vsub.f32 %v2928, %v2944
    %v2954 = vsub.f32 %v2931, %v2947
    %v2955 = vsub.f32 %v2934, %v2950
    %v2956 = vmul.f32 %v2951, 1.442695
    %v2957 = vpow.pop %v2956
    %v2958 = vmul.f32 %v2952, 1.442695
    %v2959 = vpow.pop %v2958
    %v2960 = vmul.f32 %v2953, 1.442695
    %v2961 = vpow.pop %v2960
    %v2962 = vmul.f32 %v2954, 1.442695
    %v2963 = vpow.pop %v2962
    %v2964 = vmul.f32 %v2955, 1.442695
    %v2965 = vpow.pop %v2964
    %v2966 = vsel %vm458, %v2957, 0.0
    %2967 = vadd.xlane.f32.xlu0 %v2966
    %v2968 = vpop.xlane.xlu0 %2967
    %v2969 = vsel %vm458, %v2959, 0.0
    %2970 = vadd.xlane.f32.xlu0 %v2969
    %v2971 = vpop.xlane.xlu0 %2970
    %v2972 = vsel %vm458, %v2961, 0.0
    %2973 = vadd.xlane.f32.xlu0 %v2972
    %v2974 = vpop.xlane.xlu0 %2973
    %v2975 = vsel %vm458, %v2963, 0.0
    %2976 = vadd.xlane.f32.xlu0 %v2975
    %v2977 = vpop.xlane.xlu0 %2976
    %v2978 = vsel %vm471, %v2965, 0.0
    %2979 = vadd.xlane.f32.xlu0 %v2978
    %v2980 = vpop.xlane.xlu0 %2979
    %v2981 = vrcp.pop %v2968
    %v2982 = vmul.f32 %v2968, %v2981
    %v2983 = vsub.f32 1.0, %v2982
    %v2984 = vmul.f32 %v2981, %v2983
    %v2985 = vadd.f32 %v2981, %v2984
    %vm2986 = vweird.f32 %v2968
    %vm2987 = vweird.f32 %v2981
    %vm2988 = vmor %vm2986, %vm2987
    %v2989 = vsel %vm2988, %v2981, %v2985
    %v2990 = vand.u32 2147483647, %v2968
    %vm2991 = vcmp.eq.f32.partialorder %v2990, 8.507059e+37
    %v2992 = vand.u32 %v2968, 2147483648
    %v2993 = vor.u32 1.1754944e-38, %v2992
    %v2994 = vsel %vm2991, %v2993, %v2989
    %v2995 = vrcp.pop %v2971
    %v2996 = vmul.f32 %v2971, %v2995
    %v2997 = vsub.f32 1.0, %v2996
    %v2998 = vmul.f32 %v2995, %v2997
    %v2999 = vadd.f32 %v2995, %v2998
    %vm3000 = vweird.f32 %v2971
    %vm3001 = vweird.f32 %v2995
    %vm3002 = vmor %vm3000, %vm3001
    %v3003 = vsel %vm3002, %v2995, %v2999
    %v3004 = vand.u32 2147483647, %v2971
    %vm3005 = vcmp.eq.f32.partialorder %v3004, 8.507059e+37
    %v3006 = vand.u32 %v2971, 2147483648
    %v3007 = vor.u32 1.1754944e-38, %v3006
    %v3008 = vsel %vm3005, %v3007, %v3003
    %v3009 = vrcp.pop %v2974
    %v3010 = vmul.f32 %v2974, %v3009
    %v3011 = vsub.f32 1.0, %v3010
    %v3012 = vmul.f32 %v3009, %v3011
    %v3013 = vadd.f32 %v3009, %v3012
    %vm3014 = vweird.f32 %v2974
    %vm3015 = vweird.f32 %v3009
    %vm3016 = vmor %vm3014, %vm3015
    %v3017 = vsel %vm3016, %v3009, %v3013
    %v3018 = vand.u32 2147483647, %v2974
    %vm3019 = vcmp.eq.f32.partialorder %v3018, 8.507059e+37
    %v3020 = vand.u32 %v2974, 2147483648
    %v3021 = vor.u32 1.1754944e-38, %v3020
    %v3022 = vsel %vm3019, %v3021, %v3017
    %v3023 = vrcp.pop %v2977
    %v3024 = vmul.f32 %v2977, %v3023
    %v3025 = vsub.f32 1.0, %v3024
    %v3026 = vmul.f32 %v3023, %v3025
    %v3027 = vadd.f32 %v3023, %v3026
    %vm3028 = vweird.f32 %v2977
    %vm3029 = vweird.f32 %v3023
    %vm3030 = vmor %vm3028, %vm3029
    %v3031 = vsel %vm3030, %v3023, %v3027
    %v3032 = vand.u32 2147483647, %v2977
    %vm3033 = vcmp.eq.f32.partialorder %v3032, 8.507059e+37
    %v3034 = vand.u32 %v2977, 2147483648
    %v3035 = vor.u32 1.1754944e-38, %v3034
    %v3036 = vsel %vm3033, %v3035, %v3031
    %v3037 = vrcp.pop %v2980
    %v3038 = vmul.f32 %v2980, %v3037
    %v3039 = vsub.f32 1.0, %v3038
    %v3040 = vmul.f32 %v3037, %v3039
    %v3041 = vadd.f32 %v3037, %v3040
    %vm3042 = vweird.f32 %v2980
    %vm3043 = vweird.f32 %v3037
    %vm3044 = vmor %vm3042, %vm3043
    %v3045 = vsel %vm3044, %v3037, %v3041
    %v3046 = vand.u32 2147483647, %v2980
    %vm3047 = vcmp.eq.f32.partialorder %v3046, 8.507059e+37
    %v3048 = vand.u32 %v2980, 2147483648
    %v3049 = vor.u32 1.1754944e-38, %v3048
    %v3050 = vsel %vm3047, %v3049, %v3045
    %v3051 = vmul.f32 %v2957, %v2994
    %v3052 = vmul.f32 %v2959, %v3008
    %v3053 = vmul.f32 %v2961, %v3022
    %v3054 = vmul.f32 %v2963, %v3036
    %v3055 = vmul.f32 %v2965, %v3050
    %3056 = vrot.lane.b32.xlu0 %v2236, 48
    %v3057 = vpop.permute.xlu0 %3056
    %3058 = vrot.lane.b32.xlu0 %v2239, 48
    %v3059 = vpop.permute.xlu0 %3058
    %3060 = vrot.lane.b32.xlu0 %v2242, 48
    %v3061 = vpop.permute.xlu0 %3060
    %3062 = vrot.lane.b32.xlu0 %v2245, 48
    %v3063 = vpop.permute.xlu0 %3062
    %3064 = vrot.lane.b32.xlu0 %v2248, 48
    %v3065 = vpop.permute.xlu0 %3064
    %v3071 = vsel %vm458, %v3051, 0
    %v3074 = vsel %vm458, %v3052, 0
    %v3077 = vsel %vm458, %v3053, 0
    %v3080 = vsel %vm458, %v3054, 0
    %v3083 = vsel %vm458, %v3055, 0
    %v3085 = vsel %vm609, %v3065, 0
    %3087 = vmatpush.msra.mxu0 0.0
    %3088 = vmatpush.msra.mxu0 0.0
    %3089 = vmatpush.msra.mxu0 0.0
    %3090 = vmatpush.msra.mxu0 0.0
    %3091 = vmatpush.msra.mxu0 0.0
    %3092 = vmatpush.msra.mxu0 0.0
    %3093 = vmatpush.msra.mxu0 0.0
    %3094 = vmatpush.msra.mxu0 0.0
    %3095 = vmatpush.msra.mxu0 0.0
    %3096 = vmatpush.msra.mxu0 0.0
    %3097 = vmatpush.msra.mxu0 0.0
    %3098 = vmatpush.msra.mxu0 %v3085
    %3099 = vmatpush.msra.mxu0 %v3063
    %3100 = vmatpush.msra.mxu0 %v3061
    %3101 = vmatpush.msra.mxu0 %v3059
    %3102 = vmatpush.msra.mxu0 %v3057
    %3103 = vmatmul.f32.gmra.mxu0 %v3071
    %v3104 = vpop.f32.mrf.mxu0
    %v3105 = vadd.f32 0.0, %v3104
    %3106 = vmatmul.f32.gmra.mxu0 %v3074
    %v3107 = vpop.f32.mrf.mxu0
    %v3108 = vadd.f32 0.0, %v3107
    %3109 = vmatmul.f32.gmra.mxu0 %v3077
    %v3110 = vpop.f32.mrf.mxu0
    %v3111 = vadd.f32 0.0, %v3110
    %3112 = vmatmul.f32.gmra.mxu0 %v3080
    %v3113 = vpop.f32.mrf.mxu0
    %v3114 = vadd.f32 0.0, %v3113
    %3115 = vmatmul.f32.gmra.mxu0 %v3083
    %v3116 = vpop.f32.mrf.mxu0
    %v3117 = vadd.f32 0.0, %v3116
    %3118 = vdwg.mxu0
    %v3120 = vsel %vm400, %v3105, 0
    %v3123 = vsel %vm400, %v3108, 0
    %v3126 = vsel %vm400, %v3111, 0
    %v3129 = vsel %vm400, %v3114, 0
    %v3132 = vsel %vm400, %v3117, 0
    %3134 = vmatpush.msra.mxu0 0.0
    %3135 = vmatpush.msra.mxu0 0.0
    %3136 = vmatpush.msra.mxu0 0.0
    %3137 = vmatpush.msra.mxu0 0.0
    %3138 = vmatpush.msra.mxu0 0.0
    %3139 = vmatpush.msra.mxu0 0.0
    %3140 = vmatpush.msra.mxu0 0.0
    %3141 = vmatpush.msra.mxu0 0.0
    %3142 = vmatpush.msra.mxu0 0.0
    %3143 = vmatpush.msra.mxu0 0.0
    %3144 = vmatpush.msra.mxu0 0.0
    %3145 = vmatpush.msra.mxu0 0.0
    %3146 = vmatpush.msra.mxu0 0.0
    %3147 = vmatpush.msra.mxu0 0.0
    %3148 = vmatpush.msra.mxu0 0.0
    %3149 = vmatpush.msra.mxu0 %v2258
    %3150 = vmatmul.f32.gmra.mxu0 %v3120
    %v3151 = vpop.f32.mrf.mxu0
    %v3152 = vadd.f32 0.0, %v3151
    %3153 = vmatmul.f32.gmra.mxu0 %v3123
    %v3154 = vpop.f32.mrf.mxu0
    %v3155 = vadd.f32 0.0, %v3154
    %3156 = vmatmul.f32.gmra.mxu0 %v3126
    %v3157 = vpop.f32.mrf.mxu0
    %v3158 = vadd.f32 0.0, %v3157
    %3159 = vmatmul.f32.gmra.mxu0 %v3129
    %v3160 = vpop.f32.mrf.mxu0
    %v3161 = vadd.f32 0.0, %v3160
    %3162 = vmatmul.f32.gmra.mxu0 %v3132
    %v3163 = vpop.f32.mrf.mxu0
    %v3164 = vadd.f32 0.0, %v3163
    %3165 = vdwg.mxu0
    %v3166 = vadd.f32 %v2850, %v3152
    %v3167 = vadd.f32 %v2853, %v3155
    %v3168 = vadd.f32 %v2856, %v3158
    %v3169 = vadd.f32 %v2859, %v3161
    %v3170 = vadd.f32 %v2862, %v3164
    %3171 = vrot.lane.b32.xlu0 %v2250, 104
    %v3172 = vpop.permute.xlu0 %3171
    %3173 = vrot.lane.b32.xlu0 %v2251, 104
    %v3174 = vpop.permute.xlu0 %3173
    %3175 = vrot.lane.b32.xlu0 %v2252, 104
    %v3176 = vpop.permute.xlu0 %3175
    %3177 = vrot.lane.b32.xlu0 %v2253, 104
    %v3178 = vpop.permute.xlu0 %3177
    %3179 = vrot.lane.b32.xlu0 %v2254, 104
    %v3180 = vpop.permute.xlu0 %3179
    %3181 = vrot.lane.b32.xlu0 %v2236, 72
    %v3182 = vpop.permute.xlu0 %3181
    %3183 = vrot.lane.b32.xlu0 %v2239, 72
    %v3184 = vpop.permute.xlu0 %3183
    %3185 = vrot.lane.b32.xlu0 %v2242, 72
    %v3186 = vpop.permute.xlu0 %3185
    %3187 = vrot.lane.b32.xlu0 %v2245, 72
    %v3188 = vpop.permute.xlu0 %3187
    %3189 = vrot.lane.b32.xlu0 %v2248, 72
    %v3190 = vpop.permute.xlu0 %3189
    %v3191 = vsel %vm400, %v3172, 0
    %v3193 = vsel %vm400, %v3174, 0
    %v3195 = vsel %vm400, %v3176, 0
    %v3197 = vsel %vm400, %v3178, 0
    %v3199 = vsel %vm400, %v3180, 0
    %v3201 = vsel %vm400, %v3182, 0
    %v3203 = vsel %vm400, %v3184, 0
    %v3205 = vsel %vm400, %v3186, 0
    %v3207 = vsel %vm400, %v3188, 0
    %v3209 = vsel %vm400, %v3190, 0
    %3211 = vmatpush.xpose.msra.mxu0 0.0
    %3212 = vmatpush.xpose.msra.mxu0 0.0
    %3213 = vmatpush.xpose.msra.mxu0 0.0
    %3214 = vmatpush.xpose.msra.mxu0 0.0
    %3215 = vmatpush.xpose.msra.mxu0 0.0
    %3216 = vmatpush.xpose.msra.mxu0 0.0
    %3217 = vmatpush.xpose.msra.mxu0 0.0
    %3218 = vmatpush.xpose.msra.mxu0 0.0
    %3219 = vmatpush.xpose.msra.mxu0 0.0
    %3220 = vmatpush.xpose.msra.mxu0 0.0
    %3221 = vmatpush.xpose.msra.mxu0 0.0
    %3222 = vmatpush.xpose.msra.mxu0 %v3209
    %3223 = vmatpush.xpose.msra.mxu0 %v3207
    %3224 = vmatpush.xpose.msra.mxu0 %v3205
    %3225 = vmatpush.xpose.msra.mxu0 %v3203
    %3226 = vmatpush.xpose.msra.mxu0 %v3201
    %3227 = vmatmul.f32.gmra.mxu0 %v3191
    %v3228 = vpop.f32.mrf.mxu0
    %v3229 = vadd.f32 %v188, %v3228
    %3230 = vmatmul.f32.gmra.mxu0 %v3193
    %v3231 = vpop.f32.mrf.mxu0
    %v3232 = vadd.f32 %v189, %v3231
    %3233 = vmatmul.f32.gmra.mxu0 %v3195
    %v3234 = vpop.f32.mrf.mxu0
    %v3235 = vadd.f32 %v190, %v3234
    %3236 = vmatmul.f32.gmra.mxu0 %v3197
    %v3237 = vpop.f32.mrf.mxu0
    %v3238 = vadd.f32 %v191, %v3237
    %3239 = vmatmul.f32.gmra.mxu0 %v3199
    %v3240 = vpop.f32.mrf.mxu0
    %v3241 = vadd.f32 %v192, %v3240
    %3242 = vdwg.mxu0
    %v3243 = vsel %vm458, %v3229, -inf
    %3244 = vmax.xlane.f32.xlu0 %v3243
    %v3245 = vpop.xlane.xlu0 %3244
    %v3246 = vsel %vm458, %v3232, -inf
    %3247 = vmax.xlane.f32.xlu0 %v3246
    %v3248 = vpop.xlane.xlu0 %3247
    %v3249 = vsel %vm458, %v3235, -inf
    %3250 = vmax.xlane.f32.xlu0 %v3249
    %v3251 = vpop.xlane.xlu0 %3250
    %v3252 = vsel %vm458, %v3238, -inf
    %3253 = vmax.xlane.f32.xlu0 %v3252
    %v3254 = vpop.xlane.xlu0 %3253
    %v3255 = vsel %vm471, %v3241, -inf
    %3256 = vmax.xlane.f32.xlu0 %v3255
    %v3257 = vpop.xlane.xlu0 %3256
    %v3258 = vsub.f32 %v3229, %v3245
    %v3259 = vsub.f32 %v3232, %v3248
    %v3260 = vsub.f32 %v3235, %v3251
    %v3261 = vsub.f32 %v3238, %v3254
    %v3262 = vsub.f32 %v3241, %v3257
    %v3263 = vmul.f32 %v3258, 1.442695
    %v3264 = vpow.pop %v3263
    %v3265 = vmul.f32 %v3259, 1.442695
    %v3266 = vpow.pop %v3265
    %v3267 = vmul.f32 %v3260, 1.442695
    %v3268 = vpow.pop %v3267
    %v3269 = vmul.f32 %v3261, 1.442695
    %v3270 = vpow.pop %v3269
    %v3271 = vmul.f32 %v3262, 1.442695
    %v3272 = vpow.pop %v3271
    %v3273 = vsel %vm458, %v3264, 0.0
    %3274 = vadd.xlane.f32.xlu0 %v3273
    %v3275 = vpop.xlane.xlu0 %3274
    %v3276 = vsel %vm458, %v3266, 0.0
    %3277 = vadd.xlane.f32.xlu0 %v3276
    %v3278 = vpop.xlane.xlu0 %3277
    %v3279 = vsel %vm458, %v3268, 0.0
    %3280 = vadd.xlane.f32.xlu0 %v3279
    %v3281 = vpop.xlane.xlu0 %3280
    %v3282 = vsel %vm458, %v3270, 0.0
    %3283 = vadd.xlane.f32.xlu0 %v3282
    %v3284 = vpop.xlane.xlu0 %3283
    %v3285 = vsel %vm471, %v3272, 0.0
    %3286 = vadd.xlane.f32.xlu0 %v3285
    %v3287 = vpop.xlane.xlu0 %3286
    %v3288 = vrcp.pop %v3275
    %v3289 = vmul.f32 %v3275, %v3288
    %v3290 = vsub.f32 1.0, %v3289
    %v3291 = vmul.f32 %v3288, %v3290
    %v3292 = vadd.f32 %v3288, %v3291
    %vm3293 = vweird.f32 %v3275
    %vm3294 = vweird.f32 %v3288
    %vm3295 = vmor %vm3293, %vm3294
    %v3296 = vsel %vm3295, %v3288, %v3292
    %v3297 = vand.u32 2147483647, %v3275
    %vm3298 = vcmp.eq.f32.partialorder %v3297, 8.507059e+37
    %v3299 = vand.u32 %v3275, 2147483648
    %v3300 = vor.u32 1.1754944e-38, %v3299
    %v3301 = vsel %vm3298, %v3300, %v3296
    %v3302 = vrcp.pop %v3278
    %v3303 = vmul.f32 %v3278, %v3302
    %v3304 = vsub.f32 1.0, %v3303
    %v3305 = vmul.f32 %v3302, %v3304
    %v3306 = vadd.f32 %v3302, %v3305
    %vm3307 = vweird.f32 %v3278
    %vm3308 = vweird.f32 %v3302
    %vm3309 = vmor %vm3307, %vm3308
    %v3310 = vsel %vm3309, %v3302, %v3306
    %v3311 = vand.u32 2147483647, %v3278
    %vm3312 = vcmp.eq.f32.partialorder %v3311, 8.507059e+37
    %v3313 = vand.u32 %v3278, 2147483648
    %v3314 = vor.u32 1.1754944e-38, %v3313
    %v3315 = vsel %vm3312, %v3314, %v3310
    %v3316 = vrcp.pop %v3281
    %v3317 = vmul.f32 %v3281, %v3316
    %v3318 = vsub.f32 1.0, %v3317
    %v3319 = vmul.f32 %v3316, %v3318
    %v3320 = vadd.f32 %v3316, %v3319
    %vm3321 = vweird.f32 %v3281
    %vm3322 = vweird.f32 %v3316
    %vm3323 = vmor %vm3321, %vm3322
    %v3324 = vsel %vm3323, %v3316, %v3320
    %v3325 = vand.u32 2147483647, %v3281
    %vm3326 = vcmp.eq.f32.partialorder %v3325, 8.507059e+37
    %v3327 = vand.u32 %v3281, 2147483648
    %v3328 = vor.u32 1.1754944e-38, %v3327
    %v3329 = vsel %vm3326, %v3328, %v3324
    %v3330 = vrcp.pop %v3284
    %v3331 = vmul.f32 %v3284, %v3330
    %v3332 = vsub.f32 1.0, %v3331
    %v3333 = vmul.f32 %v3330, %v3332
    %v3334 = vadd.f32 %v3330, %v3333
    %vm3335 = vweird.f32 %v3284
    %vm3336 = vweird.f32 %v3330
    %vm3337 = vmor %vm3335, %vm3336
    %v3338 = vsel %vm3337, %v3330, %v3334
    %v3339 = vand.u32 2147483647, %v3284
    %vm3340 = vcmp.eq.f32.partialorder %v3339, 8.507059e+37
    %v3341 = vand.u32 %v3284, 2147483648
    %v3342 = vor.u32 1.1754944e-38, %v3341
    %v3343 = vsel %vm3340, %v3342, %v3338
    %v3344 = vrcp.pop %v3287
    %v3345 = vmul.f32 %v3287, %v3344
    %v3346 = vsub.f32 1.0, %v3345
    %v3347 = vmul.f32 %v3344, %v3346
    %v3348 = vadd.f32 %v3344, %v3347
    %vm3349 = vweird.f32 %v3287
    %vm3350 = vweird.f32 %v3344
    %vm3351 = vmor %vm3349, %vm3350
    %v3352 = vsel %vm3351, %v3344, %v3348
    %v3353 = vand.u32 2147483647, %v3287
    %vm3354 = vcmp.eq.f32.partialorder %v3353, 8.507059e+37
    %v3355 = vand.u32 %v3287, 2147483648
    %v3356 = vor.u32 1.1754944e-38, %v3355
    %v3357 = vsel %vm3354, %v3356, %v3352
    %v3358 = vmul.f32 %v3264, %v3301
    %v3359 = vmul.f32 %v3266, %v3315
    %v3360 = vmul.f32 %v3268, %v3329
    %v3361 = vmul.f32 %v3270, %v3343
    %v3362 = vmul.f32 %v3272, %v3357
    %3363 = vrot.lane.b32.xlu0 %v2236, 40
    %v3364 = vpop.permute.xlu0 %3363
    %3365 = vrot.lane.b32.xlu0 %v2239, 40
    %v3366 = vpop.permute.xlu0 %3365
    %3367 = vrot.lane.b32.xlu0 %v2242, 40
    %v3368 = vpop.permute.xlu0 %3367
    %3369 = vrot.lane.b32.xlu0 %v2245, 40
    %v3370 = vpop.permute.xlu0 %3369
    %3371 = vrot.lane.b32.xlu0 %v2248, 40
    %v3372 = vpop.permute.xlu0 %3371
    %v3378 = vsel %vm458, %v3358, 0
    %v3381 = vsel %vm458, %v3359, 0
    %v3384 = vsel %vm458, %v3360, 0
    %v3387 = vsel %vm458, %v3361, 0
    %v3390 = vsel %vm458, %v3362, 0
    %v3392 = vsel %vm609, %v3372, 0
    %3394 = vmatpush.msra.mxu0 0.0
    %3395 = vmatpush.msra.mxu0 0.0
    %3396 = vmatpush.msra.mxu0 0.0
    %3397 = vmatpush.msra.mxu0 0.0
    %3398 = vmatpush.msra.mxu0 0.0
    %3399 = vmatpush.msra.mxu0 0.0
    %3400 = vmatpush.msra.mxu0 0.0
    %3401 = vmatpush.msra.mxu0 0.0
    %3402 = vmatpush.msra.mxu0 0.0
    %3403 = vmatpush.msra.mxu0 0.0
    %3404 = vmatpush.msra.mxu0 0.0
    %3405 = vmatpush.msra.mxu0 %v3392
    %3406 = vmatpush.msra.mxu0 %v3370
    %3407 = vmatpush.msra.mxu0 %v3368
    %3408 = vmatpush.msra.mxu0 %v3366
    %3409 = vmatpush.msra.mxu0 %v3364
    %3410 = vmatmul.f32.gmra.mxu0 %v3378
    %v3411 = vpop.f32.mrf.mxu0
    %v3412 = vadd.f32 0.0, %v3411
    %3413 = vmatmul.f32.gmra.mxu0 %v3381
    %v3414 = vpop.f32.mrf.mxu0
    %v3415 = vadd.f32 0.0, %v3414
    %3416 = vmatmul.f32.gmra.mxu0 %v3384
    %v3417 = vpop.f32.mrf.mxu0
    %v3418 = vadd.f32 0.0, %v3417
    %3419 = vmatmul.f32.gmra.mxu0 %v3387
    %v3420 = vpop.f32.mrf.mxu0
    %v3421 = vadd.f32 0.0, %v3420
    %3422 = vmatmul.f32.gmra.mxu0 %v3390
    %v3423 = vpop.f32.mrf.mxu0
    %v3424 = vadd.f32 0.0, %v3423
    %3425 = vdwg.mxu0
    %v3427 = vsel %vm400, %v3412, 0
    %v3430 = vsel %vm400, %v3415, 0
    %v3433 = vsel %vm400, %v3418, 0
    %v3436 = vsel %vm400, %v3421, 0
    %v3439 = vsel %vm400, %v3424, 0
    %3441 = vmatpush.msra.mxu0 0.0
    %3442 = vmatpush.msra.mxu0 0.0
    %3443 = vmatpush.msra.mxu0 0.0
    %3444 = vmatpush.msra.mxu0 0.0
    %3445 = vmatpush.msra.mxu0 0.0
    %3446 = vmatpush.msra.mxu0 0.0
    %3447 = vmatpush.msra.mxu0 0.0
    %3448 = vmatpush.msra.mxu0 0.0
    %3449 = vmatpush.msra.mxu0 0.0
    %3450 = vmatpush.msra.mxu0 0.0
    %3451 = vmatpush.msra.mxu0 0.0
    %3452 = vmatpush.msra.mxu0 0.0
    %3453 = vmatpush.msra.mxu0 0.0
    %3454 = vmatpush.msra.mxu0 0.0
    %3455 = vmatpush.msra.mxu0 0.0
    %3456 = vmatpush.msra.mxu0 %v2259
    %3457 = vmatmul.f32.gmra.mxu0 %v3427
    %v3458 = vpop.f32.mrf.mxu0
    %v3459 = vadd.f32 0.0, %v3458
    %3460 = vmatmul.f32.gmra.mxu0 %v3430
    %v3461 = vpop.f32.mrf.mxu0
    %v3462 = vadd.f32 0.0, %v3461
    %3463 = vmatmul.f32.gmra.mxu0 %v3433
    %v3464 = vpop.f32.mrf.mxu0
    %v3465 = vadd.f32 0.0, %v3464
    %3466 = vmatmul.f32.gmra.mxu0 %v3436
    %v3467 = vpop.f32.mrf.mxu0
    %v3468 = vadd.f32 0.0, %v3467
    %3469 = vmatmul.f32.gmra.mxu0 %v3439
    %v3470 = vpop.f32.mrf.mxu0
    %v3471 = vadd.f32 0.0, %v3470
    %3472 = vdwg.mxu0
    %v3473 = vadd.f32 %v3166, %v3459
    %v3474 = vadd.f32 %v3167, %v3462
    %v3475 = vadd.f32 %v3168, %v3465
    %v3476 = vadd.f32 %v3169, %v3468
    %v3477 = vadd.f32 %v3170, %v3471
    %v3478 = vadd.f32 %v2068, %v3473
    %v3479 = vadd.f32 %v2069, %v3474
    %v3480 = vadd.f32 %v2070, %v3475
    %v3481 = vadd.f32 %v2071, %v3476
    %v3482 = vadd.f32 %v2072, %v3477
    %v3483 = vperm.slane %v2074, 3
    %v3484 = vadd.f32 %v3478, %v3483
    %v3485 = vadd.f32 %v3479, %v3483
    %v3486 = vadd.f32 %v3480, %v3483
    %v3487 = vadd.f32 %v3481, %v3483
    %v3488 = vadd.f32 %v3482, %v3483
    %v3489 = vsel %vm114, %v3484, 0.0
    %3490 = vadd.xlane.f32.xlu0 %v3489
    %v3491 = vpop.xlane.xlu0 %3490
    %v3492 = vsel %vm114, %v3485, 0.0
    %3493 = vadd.xlane.f32.xlu0 %v3492
    %v3494 = vpop.xlane.xlu0 %3493
    %v3495 = vsel %vm114, %v3486, 0.0
    %3496 = vadd.xlane.f32.xlu0 %v3495
    %v3497 = vpop.xlane.xlu0 %3496
    %v3498 = vsel %vm114, %v3487, 0.0
    %3499 = vadd.xlane.f32.xlu0 %v3498
    %v3500 = vpop.xlane.xlu0 %3499
    %v3501 = vsel %vm206, %v3488, 0.0
    %3502 = vadd.xlane.f32.xlu0 %v3501
    %v3503 = vpop.xlane.xlu0 %3502
    %v3504 = vmul.f32 %v3491, %v216
    %v3505 = vmul.f32 %v3494, %v216
    %v3506 = vmul.f32 %v3497, %v216
    %v3507 = vmul.f32 %v3500, %v216
    %v3508 = vmul.f32 %v3503, %v216
    %v3509 = vsub.f32 %v3484, %v3504
    %v3510 = vsub.f32 %v3485, %v3505
    %v3511 = vsub.f32 %v3486, %v3506
    %v3512 = vsub.f32 %v3487, %v3507
    %v3513 = vsub.f32 %v3488, %v3508
    %v3514 = vmul.f32 %v3509, %v3509
    %v3515 = vmul.f32 %v3510, %v3510
    %v3516 = vmul.f32 %v3511, %v3511
    %v3517 = vmul.f32 %v3512, %v3512
    %v3518 = vmul.f32 %v3513, %v3513
    %v3519 = vsel %vm114, %v3514, 0.0
    %3520 = vadd.xlane.f32.xlu0 %v3519
    %v3521 = vpop.xlane.xlu0 %3520
    %v3522 = vsel %vm114, %v3515, 0.0
    %3523 = vadd.xlane.f32.xlu0 %v3522
    %v3524 = vpop.xlane.xlu0 %3523
    %v3525 = vsel %vm114, %v3516, 0.0
    %3526 = vadd.xlane.f32.xlu0 %v3525
    %v3527 = vpop.xlane.xlu0 %3526
    %v3528 = vsel %vm114, %v3517, 0.0
    %3529 = vadd.xlane.f32.xlu0 %v3528
    %v3530 = vpop.xlane.xlu0 %3529
    %v3531 = vsel %vm206, %v3518, 0.0
    %3532 = vadd.xlane.f32.xlu0 %v3531
    %v3533 = vpop.xlane.xlu0 %3532
    %v3534 = vmul.f32 %v3521, %v216
    %v3535 = vmul.f32 %v3524, %v216
    %v3536 = vmul.f32 %v3527, %v216
    %v3537 = vmul.f32 %v3530, %v216
    %v3538 = vmul.f32 %v3533, %v216
    %v3539 = vadd.f32 %v3534, 1e-05
    %v3540 = vadd.f32 %v3535, 1e-05
    %v3541 = vadd.f32 %v3536, 1e-05
    %v3542 = vadd.f32 %v3537, 1e-05
    %v3543 = vadd.f32 %v3538, 1e-05
    %v3544 = vrsqrt.pop %v3539
    %v3545 = vmul.f32 %v3544, %v3539
    %v3546 = vmul.f32 %v3545, %v3544
    %v3547 = vmul.f32 0.5, %v3546
    %v3548 = vsub.f32 1.5, %v3547
    %v3549 = vmul.f32 %v3544, %v3548
    %vm3550 = vweird.f32 %v3539
    %vm3551 = vweird.f32 %v3544
    %vm3552 = vmor %vm3550, %vm3551
    %v3553 = vsel %vm3552, %v3544, %v3549
    %v3554 = vrsqrt.pop %v3540
    %v3555 = vmul.f32 %v3554, %v3540
    %v3556 = vmul.f32 %v3555, %v3554
    %v3557 = vmul.f32 0.5, %v3556
    %v3558 = vsub.f32 1.5, %v3557
    %v3559 = vmul.f32 %v3554, %v3558
    %vm3560 = vweird.f32 %v3540
    %vm3561 = vweird.f32 %v3554
    %vm3562 = vmor %vm3560, %vm3561
    %v3563 = vsel %vm3562, %v3554, %v3559
    %v3564 = vrsqrt.pop %v3541
    %v3565 = vmul.f32 %v3564, %v3541
    %v3566 = vmul.f32 %v3565, %v3564
    %v3567 = vmul.f32 0.5, %v3566
    %v3568 = vsub.f32 1.5, %v3567
    %v3569 = vmul.f32 %v3564, %v3568
    %vm3570 = vweird.f32 %v3541
    %vm3571 = vweird.f32 %v3564
    %vm3572 = vmor %vm3570, %vm3571
    %v3573 = vsel %vm3572, %v3564, %v3569
    %v3574 = vrsqrt.pop %v3542
    %v3575 = vmul.f32 %v3574, %v3542
    %v3576 = vmul.f32 %v3575, %v3574
    %v3577 = vmul.f32 0.5, %v3576
    %v3578 = vsub.f32 1.5, %v3577
    %v3579 = vmul.f32 %v3574, %v3578
    %vm3580 = vweird.f32 %v3542
    %vm3581 = vweird.f32 %v3574
    %vm3582 = vmor %vm3580, %vm3581
    %v3583 = vsel %vm3582, %v3574, %v3579
    %v3584 = vrsqrt.pop %v3543
    %v3585 = vmul.f32 %v3584, %v3543
    %v3586 = vmul.f32 %v3585, %v3584
    %v3587 = vmul.f32 0.5, %v3586
    %v3588 = vsub.f32 1.5, %v3587
    %v3589 = vmul.f32 %v3584, %v3588
    %vm3590 = vweird.f32 %v3543
    %vm3591 = vweird.f32 %v3584
    %vm3592 = vmor %vm3590, %vm3591
    %v3593 = vsel %vm3592, %v3584, %v3589
    %v3594 = vmul.f32 %v3509, %v3553
    %v3595 = vmul.f32 %v3510, %v3563
    %v3596 = vmul.f32 %v3511, %v3573
    %v3597 = vmul.f32 %v3512, %v3583
    %v3598 = vmul.f32 %v3513, %v3593
    %v3599 = vperm.slane %v2074, 4
    %v3600 = vmul.f32 %v3594, %v3599
    %v3601 = vmul.f32 %v3595, %v3599
    %v3602 = vmul.f32 %v3596, %v3599
    %v3603 = vmul.f32 %v3597, %v3599
    %v3604 = vmul.f32 %v3598, %v3599
    %v3605 = vperm.slane %v2074, 5
    %v3606 = vadd.f32 %v3600, %v3605
    %v3607 = vadd.f32 %v3601, %v3605
    %v3608 = vadd.f32 %v3602, %v3605
    %v3609 = vadd.f32 %v3603, %v3605
    %v3610 = vadd.f32 %v3604, %v3605
    %s3611 = scalar_lea.vmem %s7, 32
    %v3612 = vld [vmem:[%s3611] sm:$0xff]
    %v3613 = vld [vmem:[%s3611 + $0x8] sm:$0xff]
    %v3614 = vld [vmem:[%s3611 + $0x10] sm:$0xff]
    %v3615 = vld [vmem:[%s3611 + $0x18] sm:$0xff]
    %v3616 = vperm.slane %v2074, 6
    %v3618 = vsel %vm114, %v3606, 0
    %v3621 = vsel %vm114, %v3607, 0
    %v3624 = vsel %vm114, %v3608, 0
    %v3627 = vsel %vm114, %v3609, 0
    %v3630 = vsel %vm114, %v3610, 0
    %3632 = vmatpush.msra.mxu0 0.0
    %3633 = vmatpush.msra.mxu0 0.0
    %3634 = vmatpush.msra.mxu0 0.0
    %3635 = vmatpush.msra.mxu0 0.0
    %3636 = vmatpush.msra.mxu0 0.0
    %3637 = vmatpush.msra.mxu0 0.0
    %3638 = vmatpush.msra.mxu0 0.0
    %3639 = vmatpush.msra.mxu0 0.0
    %3640 = vmatpush.msra.mxu0 0.0
    %3641 = vmatpush.msra.mxu0 0.0
    %3642 = vmatpush.msra.mxu0 0.0
    %3643 = vmatpush.msra.mxu0 0.0
    %3644 = vmatpush.msra.mxu0 %v3615
    %3645 = vmatpush.msra.mxu0 %v3614
    %3646 = vmatpush.msra.mxu0 %v3613
    %3647 = vmatpush.msra.mxu0 %v3612
    %3648 = vmatmul.f32.gmra.mxu0 %v3618
    %v3649 = vpop.f32.mrf.mxu0
    %v3650 = vadd.f32 %v3616, %v3649
    %3651 = vmatmul.f32.gmra.mxu0 %v3621
    %v3652 = vpop.f32.mrf.mxu0
    %v3653 = vadd.f32 %v3616, %v3652
    %3654 = vmatmul.f32.gmra.mxu0 %v3624
    %v3655 = vpop.f32.mrf.mxu0
    %v3656 = vadd.f32 %v3616, %v3655
    %3657 = vmatmul.f32.gmra.mxu0 %v3627
    %v3658 = vpop.f32.mrf.mxu0
    %v3659 = vadd.f32 %v3616, %v3658
    %3660 = vmatmul.f32.gmra.mxu0 %v3630
    %v3661 = vpop.f32.mrf.mxu0
    %v3662 = vadd.f32 %v3616, %v3661
    %3663 = vdwg.mxu0
    %v3664 = vmul.f32 %v3650, 0.5
    %v3665 = vmul.f32 %v3653, 0.5
    %v3666 = vmul.f32 %v3656, 0.5
    %v3667 = vmul.f32 %v3659, 0.5
    %v3668 = vmul.f32 %v3662, 0.5
    %v3669 = vmul.f32 %v3650, 0.70710677
    %v3670 = vmul.f32 %v3653, 0.70710677
    %v3671 = vmul.f32 %v3656, 0.70710677
    %v3672 = vmul.f32 %v3659, 0.70710677
    %v3673 = vmul.f32 %v3662, 0.70710677
    %v3674 = vmul.f32 %v3669, %v3669
    %v3675 = vmin.f32 16.0, %v3674
    %v3676 = vmul.f32 %v3675, 2.1237322e-06
    %v3677 = vadd.f32 %v3676, 0.00028619796
    %v3678 = vmul.f32 %v3675, %v3677
    %v3679 = vadd.f32 %v3678, 0.0036580483
    %v3680 = vmul.f32 %v3675, %v3679
    %v3681 = vadd.f32 %v3680, 0.05243302
    %v3682 = vmul.f32 %v3675, %v3681
    %v3683 = vadd.f32 %v3682, 0.18741608
    %v3684 = vmul.f32 %v3675, %v3683
    %v3685 = vadd.f32 %v3684, 1.1283791
    %v3686 = vmul.f32 %v3669, %v3685
    %v3687 = vmul.f32 %v3675, 3.8918573e-05
    %v3688 = vadd.f32 %v3687, 0.001143296
    %v3689 = vmul.f32 %v3675, %v3688
    %v3690 = vadd.f32 %v3689, 0.014752088
    %v3691 = vmul.f32 %v3675, %v3690
    %v3692 = vadd.f32 %v3691, 0.112945676
    %v3693 = vmul.f32 %v3675, %v3692
    %v3694 = vadd.f32 %v3693, 0.4994258
    %v3695 = vmul.f32 %v3675, %v3694
    %v3696 = vadd.f32 %v3695, 1.0
    %v3697 = vrcp.pop %v3696
    %v3698 = vmul.f32 %v3696, %v3697
    %v3699 = vsub.f32 1.0, %v3698
    %v3700 = vmul.f32 %v3697, %v3699
    %v3701 = vadd.f32 %v3697, %v3700
    %vm3702 = vweird.f32 %v3696
    %vm3703 = vweird.f32 %v3697
    %vm3704 = vmor %vm3702, %vm3703
    %v3705 = vsel %vm3704, %v3697, %v3701
    %v3706 = vand.u32 2147483647, %v3696
    %vm3707 = vcmp.eq.f32.partialorder %v3706, 8.507059e+37
    %v3708 = vand.u32 %v3696, 2147483648
    %v3709 = vor.u32 1.1754944e-38, %v3708
    %v3710 = vsel %vm3707, %v3709, %v3705
    %v3711 = vmul.f32 %v3686, %v3710
    %v3712 = vmin.f32 %v3711, 1.0
    %v3713 = vmax.f32 %v3712, -1.0
    %v3714 = vmul.f32 %v3670, %v3670
    %v3715 = vmin.f32 16.0, %v3714
    %v3716 = vmul.f32 %v3715, 2.1237322e-06
    %v3717 = vadd.f32 %v3716, 0.00028619796
    %v3718 = vmul.f32 %v3715, %v3717
    %v3719 = vadd.f32 %v3718, 0.0036580483
    %v3720 = vmul.f32 %v3715, %v3719
    %v3721 = vadd.f32 %v3720, 0.05243302
    %v3722 = vmul.f32 %v3715, %v3721
    %v3723 = vadd.f32 %v3722, 0.18741608
    %v3724 = vmul.f32 %v3715, %v3723
    %v3725 = vadd.f32 %v3724, 1.1283791
    %v3726 = vmul.f32 %v3670, %v3725
    %v3727 = vmul.f32 %v3715, 3.8918573e-05
    %v3728 = vadd.f32 %v3727, 0.001143296
    %v3729 = vmul.f32 %v3715, %v3728
    %v3730 = vadd.f32 %v3729, 0.014752088
    %v3731 = vmul.f32 %v3715, %v3730
    %v3732 = vadd.f32 %v3731, 0.112945676
    %v3733 = vmul.f32 %v3715, %v3732
    %v3734 = vadd.f32 %v3733, 0.4994258
    %v3735 = vmul.f32 %v3715, %v3734
    %v3736 = vadd.f32 %v3735, 1.0
    %v3737 = vrcp.pop %v3736
    %v3738 = vmul.f32 %v3736, %v3737
    %v3739 = vsub.f32 1.0, %v3738
    %v3740 = vmul.f32 %v3737, %v3739
    %v3741 = vadd.f32 %v3737, %v3740
    %vm3742 = vweird.f32 %v3736
    %vm3743 = vweird.f32 %v3737
    %vm3744 = vmor %vm3742, %vm3743
    %v3745 = vsel %vm3744, %v3737, %v3741
    %v3746 = vand.u32 2147483647, %v3736
    %vm3747 = vcmp.eq.f32.partialorder %v3746, 8.507059e+37
    %v3748 = vand.u32 %v3736, 2147483648
    %v3749 = vor.u32 1.1754944e-38, %v3748
    %v3750 = vsel %vm3747, %v3749, %v3745
    %v3751 = vmul.f32 %v3726, %v3750
    %v3752 = vmin.f32 %v3751, 1.0
    %v3753 = vmax.f32 %v3752, -1.0
    %v3754 = vmul.f32 %v3671, %v3671
    %v3755 = vmin.f32 16.0, %v3754
    %v3756 = vmul.f32 %v3755, 2.1237322e-06
    %v3757 = vadd.f32 %v3756, 0.00028619796
    %v3758 = vmul.f32 %v3755, %v3757
    %v3759 = vadd.f32 %v3758, 0.0036580483
    %v3760 = vmul.f32 %v3755, %v3759
    %v3761 = vadd.f32 %v3760, 0.05243302
    %v3762 = vmul.f32 %v3755, %v3761
    %v3763 = vadd.f32 %v3762, 0.18741608
    %v3764 = vmul.f32 %v3755, %v3763
    %v3765 = vadd.f32 %v3764, 1.1283791
    %v3766 = vmul.f32 %v3671, %v3765
    %v3767 = vmul.f32 %v3755, 3.8918573e-05
    %v3768 = vadd.f32 %v3767, 0.001143296
    %v3769 = vmul.f32 %v3755, %v3768
    %v3770 = vadd.f32 %v3769, 0.014752088
    %v3771 = vmul.f32 %v3755, %v3770
    %v3772 = vadd.f32 %v3771, 0.112945676
    %v3773 = vmul.f32 %v3755, %v3772
    %v3774 = vadd.f32 %v3773, 0.4994258
    %v3775 = vmul.f32 %v3755, %v3774
    %v3776 = vadd.f32 %v3775, 1.0
    %v3777 = vrcp.pop %v3776
    %v3778 = vmul.f32 %v3776, %v3777
    %v3779 = vsub.f32 1.0, %v3778
    %v3780 = vmul.f32 %v3777, %v3779
    %v3781 = vadd.f32 %v3777, %v3780
    %vm3782 = vweird.f32 %v3776
    %vm3783 = vweird.f32 %v3777
    %vm3784 = vmor %vm3782, %vm3783
    %v3785 = vsel %vm3784, %v3777, %v3781
    %v3786 = vand.u32 2147483647, %v3776
    %vm3787 = vcmp.eq.f32.partialorder %v3786, 8.507059e+37
    %v3788 = vand.u32 %v3776, 2147483648
    %v3789 = vor.u32 1.1754944e-38, %v3788
    %v3790 = vsel %vm3787, %v3789, %v3785
    %v3791 = vmul.f32 %v3766, %v3790
    %v3792 = vmin.f32 %v3791, 1.0
    %v3793 = vmax.f32 %v3792, -1.0
    %v3794 = vmul.f32 %v3672, %v3672
    %v3795 = vmin.f32 16.0, %v3794
    %v3796 = vmul.f32 %v3795, 2.1237322e-06
    %v3797 = vadd.f32 %v3796, 0.00028619796
    %v3798 = vmul.f32 %v3795, %v3797
    %v3799 = vadd.f32 %v3798, 0.0036580483
    %v3800 = vmul.f32 %v3795, %v3799
    %v3801 = vadd.f32 %v3800, 0.05243302
    %v3802 = vmul.f32 %v3795, %v3801
    %v3803 = vadd.f32 %v3802, 0.18741608
    %v3804 = vmul.f32 %v3795, %v3803
    %v3805 = vadd.f32 %v3804, 1.1283791
    %v3806 = vmul.f32 %v3672, %v3805
    %v3807 = vmul.f32 %v3795, 3.8918573e-05
    %v3808 = vadd.f32 %v3807, 0.001143296
    %v3809 = vmul.f32 %v3795, %v3808
    %v3810 = vadd.f32 %v3809, 0.014752088
    %v3811 = vmul.f32 %v3795, %v3810
    %v3812 = vadd.f32 %v3811, 0.112945676
    %v3813 = vmul.f32 %v3795, %v3812
    %v3814 = vadd.f32 %v3813, 0.4994258
    %v3815 = vmul.f32 %v3795, %v3814
    %v3816 = vadd.f32 %v3815, 1.0
    %v3817 = vrcp.pop %v3816
    %v3818 = vmul.f32 %v3816, %v3817
    %v3819 = vsub.f32 1.0, %v3818
    %v3820 = vmul.f32 %v3817, %v3819
    %v3821 = vadd.f32 %v3817, %v3820
    %vm3822 = vweird.f32 %v3816
    %vm3823 = vweird.f32 %v3817
    %vm3824 = vmor %vm3822, %vm3823
    %v3825 = vsel %vm3824, %v3817, %v3821
    %v3826 = vand.u32 2147483647, %v3816
    %vm3827 = vcmp.eq.f32.partialorder %v3826, 8.507059e+37
    %v3828 = vand.u32 %v3816, 2147483648
    %v3829 = vor.u32 1.1754944e-38, %v3828
    %v3830 = vsel %vm3827, %v3829, %v3825
    %v3831 = vmul.f32 %v3806, %v3830
    %v3832 = vmin.f32 %v3831, 1.0
    %v3833 = vmax.f32 %v3832, -1.0
    %v3834 = vmul.f32 %v3673, %v3673
    %v3835 = vmin.f32 16.0, %v3834
    %v3836 = vmul.f32 %v3835, 2.1237322e-06
    %v3837 = vadd.f32 %v3836, 0.00028619796
    %v3838 = vmul.f32 %v3835, %v3837
    %v3839 = vadd.f32 %v3838, 0.0036580483
    %v3840 = vmul.f32 %v3835, %v3839
    %v3841 = vadd.f32 %v3840, 0.05243302
    %v3842 = vmul.f32 %v3835, %v3841
    %v3843 = vadd.f32 %v3842, 0.18741608
    %v3844 = vmul.f32 %v3835, %v3843
    %v3845 = vadd.f32 %v3844, 1.1283791
    %v3846 = vmul.f32 %v3673, %v3845
    %v3847 = vmul.f32 %v3835, 3.8918573e-05
    %v3848 = vadd.f32 %v3847, 0.001143296
    %v3849 = vmul.f32 %v3835, %v3848
    %v3850 = vadd.f32 %v3849, 0.014752088
    %v3851 = vmul.f32 %v3835, %v3850
    %v3852 = vadd.f32 %v3851, 0.112945676
    %v3853 = vmul.f32 %v3835, %v3852
    %v3854 = vadd.f32 %v3853, 0.4994258
    %v3855 = vmul.f32 %v3835, %v3854
    %v3856 = vadd.f32 %v3855, 1.0
    %v3857 = vrcp.pop %v3856
    %v3858 = vmul.f32 %v3856, %v3857
    %v3859 = vsub.f32 1.0, %v3858
    %v3860 = vmul.f32 %v3857, %v3859
    %v3861 = vadd.f32 %v3857, %v3860
    %vm3862 = vweird.f32 %v3856
    %vm3863 = vweird.f32 %v3857
    %vm3864 = vmor %vm3862, %vm3863
    %v3865 = vsel %vm3864, %v3857, %v3861
    %v3866 = vand.u32 2147483647, %v3856
    %vm3867 = vcmp.eq.f32.partialorder %v3866, 8.507059e+37
    %v3868 = vand.u32 %v3856, 2147483648
    %v3869 = vor.u32 1.1754944e-38, %v3868
    %v3870 = vsel %vm3867, %v3869, %v3865
    %v3871 = vmul.f32 %v3846, %v3870
    %v3872 = vmin.f32 %v3871, 1.0
    %v3873 = vmax.f32 %v3872, -1.0
    %v3874 = vadd.f32 %v3713, 1.0
    %v3875 = vadd.f32 %v3753, 1.0
    %v3876 = vadd.f32 %v3793, 1.0
    %v3877 = vadd.f32 %v3833, 1.0
    %v3878 = vadd.f32 %v3873, 1.0
    %v3879 = vmul.f32 %v3664, %v3874
    %v3880 = vmul.f32 %v3665, %v3875
    %v3881 = vmul.f32 %v3666, %v3876
    %v3882 = vmul.f32 %v3667, %v3877
    %v3883 = vmul.f32 %v3668, %v3878
    %s3884 = scalar_lea.vmem %s8, 64
    %v3885 = vld [vmem:[%s3884] sm:$0xff]
    %v3886 = vld [vmem:[%s3884 + $0x8] sm:$0xff]
    %v3887 = vld [vmem:[%s3884 + $0x10] sm:$0xff]
    %v3888 = vld [vmem:[%s3884 + $0x18] sm:$0xff]
    %v3889 = vld [vmem:[%s3884 + $0x20] sm:$0xff]
    %v3890 = vld [vmem:[%s3884 + $0x28] sm:$0xff]
    %v3891 = vld [vmem:[%s3884 + $0x30] sm:$0xff]
    %v3892 = vld [vmem:[%s3884 + $0x38] sm:$0xff]
    %v3893 = vperm.slane %v2074, 7
    %v3895 = vsel %vm52, %v3879, 0
    %v3898 = vsel %vm52, %v3880, 0
    %v3901 = vsel %vm52, %v3881, 0
    %v3904 = vsel %vm52, %v3882, 0
    %v3907 = vsel %vm52, %v3883, 0
    %3909 = vmatpush.msra.mxu0 0.0
    %3910 = vmatpush.msra.mxu0 0.0
    %3911 = vmatpush.msra.mxu0 0.0
    %3912 = vmatpush.msra.mxu0 0.0
    %3913 = vmatpush.msra.mxu0 0.0
    %3914 = vmatpush.msra.mxu0 0.0
    %3915 = vmatpush.msra.mxu0 0.0
    %3916 = vmatpush.msra.mxu0 0.0
    %3917 = vmatpush.msra.mxu0 %v3892
    %3918 = vmatpush.msra.mxu0 %v3891
    %3919 = vmatpush.msra.mxu0 %v3890
    %3920 = vmatpush.msra.mxu0 %v3889
    %3921 = vmatpush.msra.mxu0 %v3888
    %3922 = vmatpush.msra.mxu0 %v3887
    %3923 = vmatpush.msra.mxu0 %v3886
    %3924 = vmatpush.msra.mxu0 %v3885
    %3925 = vmatmul.f32.gmra.mxu0 %v3895
    %v3926 = vpop.f32.mrf.mxu0
    %v3927 = vadd.f32 %v3893, %v3926
    %3928 = vmatmul.f32.gmra.mxu0 %v3898
    %v3929 = vpop.f32.mrf.mxu0
    %3930 = vmatmul.f32.gmra.mxu0 %v3901
    %v3931 = vpop.f32.mrf.mxu0
    %v3932 = vadd.f32 %v3893, %v3931
    %3933 = vmatmul.f32.gmra.mxu0 %v3904
    %v3934 = vpop.f32.mrf.mxu0
    %3935 = vmatmul.f32.gmra.mxu0 %v3907
    %v3936 = vpop.f32.mrf.mxu0
    %3937 = vdwg.mxu0
    %v3938 = vadd.f32 %v3484, %v3927
    %v3939 = vadd.f32 %v3486, %v3932
    %3940 = vst.msk [vmem:[#allocation3] sm:$0x1] %vm99, %v3938
    %vm3941 = vcmask 254977
    %3942 = vst.msk [vmem:[#allocation3] sm:$0x2] %vm3941, %v3939
    // Predicated region
    $region42: #{vit_forward.1} parent=1 // pred_check
      _
    $region43: #{vit_forward.1} parent=1 // pred_check_branch
      %3944 = sbr.rel (0) target = $region45
    $region44: #{vit_forward.1} parent=1 // pred_region
      %3946 = vsyncadd [#allocation4], 0
      %s3948 = sshll.u32 [#allocation3], 4
      %s3949 = int_to_ptr.vmem [resolvable:$true] %s3948
      %s3950 = sshll.u32 %s10, 4
      %s3951 = int_to_ptr.hbm [resolvable:$true] %s3950
      %3953 = dma.vmem_to_hbm [thread:$0]  %s3949, 32, %s3951, [#allocation4]
    $region45: #{vit_forward.1} parent=1 // pred_fallthru
      _
    // Predicated region
    $region46: #{vit_forward.1} parent=1 // pred_check
      _
    $region47: #{vit_forward.1} parent=1 // pred_check_branch
      %3955 = sbr.rel (0) target = $region49
    $region48: #{vit_forward.1} parent=1 // pred_region
      %3957 = dma.done [#allocation4], 32
    $region49: #{vit_forward.1} parent=1 // pred_fallthru
      _
    %3958 = vsyncpa [#allocation4], 1

</llo_original>
